<compile_context>
chip_gen: v7x
topology: tpu7x:2x2x1
jax: 0.10.0
libtpu: 0.0.40
codegen_flags: <defaults>
</compile_context>

<pallas_src>
import functools

import jax
import jax.numpy as jnp
from jax.experimental import pallas as pl
from jax.experimental.pallas import tpu as pltpu

# ---------------- model hyper-parameters (module defaults, small batch/seq) --
NUM_SYMBOLS = 10
INPUT_SIZE = 1
HIDDEN_SIZE = 128          # nn.LSTM default in the module (lane-aligned)
NUM_LAYERS = 2
OUTPUT_SIZE = 1
EMB_DIM = 8
D_IN = INPUT_SIZE + EMB_DIM  # 9

BATCH = 2
SEQ_LEN = 8


def lstm_kernel(x_ref, w_ih0_ref, w_hh0_ref, b0_ref, w1_ref, b1_ref,
                h_out_ref, *, seq_len, batch):
    """Whole 2-layer LSTM recurrence in one kernel invocation.

    x_ref: (seq_len * batch, D_in) time-major-flattened input
    w_ih0_ref: (D_in, 4H)   w_hh0_ref: (H, 4H)   b0_ref: (1, 4H)
    w1_ref: (2H, 4H) fused [w_ih1; w_hh1]        b1_ref: (1, 4H)
    h_out_ref: (batch, H) last-timestep layer-1 hidden state
    """
    H = w_hh0_ref.shape[0]

    # Layer-0 input projection for ALL timesteps as one matmul (bias folded).
    pre0 = (jnp.dot(x_ref[...], w_ih0_ref[...],
                    preferred_element_type=jnp.float32)
            + b0_ref[...])                       # (S*B, 4H)

    w_hh0 = w_hh0_ref[...]                       # (H, 4H)
    w1 = w1_ref[...]                             # (2H, 4H)
    b1 = jnp.broadcast_to(b1_ref[...], (batch, 4 * H))   # hoisted broadcast

    h0 = jnp.zeros((batch, H), jnp.float32)
    c0 = jnp.zeros((batch, H), jnp.float32)
    h1 = jnp.zeros((batch, H), jnp.float32)
    c1 = jnp.zeros((batch, H), jnp.float32)

    def gates_to_hc(gates, c_prev):
        # PyTorch LSTM gate order: i, f, g, o
        i = jax.nn.sigmoid(gates[:, 0 * H:1 * H])
        f = jax.nn.sigmoid(gates[:, 1 * H:2 * H])
        g = jnp.tanh(gates[:, 2 * H:3 * H])
        o = jax.nn.sigmoid(gates[:, 3 * H:4 * H])
        c_new = f * c_prev + i * g
        h_new = o * jnp.tanh(c_new)
        return h_new, c_new

    # TODO(synk): nn.LSTM inter-layer dropout is training-only; the inference
    # forward applies no dropout, so it is intentionally omitted here.
    for t in range(seq_len):                     # unrolled (seq_len is small)
        # layer 0: only the recurrent matmul is on the serial chain
        g0 = pre0[t * batch:(t + 1) * batch, :] + jnp.dot(
            h0, w_hh0, preferred_element_type=jnp.float32)
        h0, c0 = gates_to_hc(g0, c0)

        # layer 1: fused single dot over [h0_new, h1_prev]  (K = 2H = 256)
        x1 = jnp.concatenate([h0, h1], axis=-1)
        g1 = jnp.dot(x1, w1, preferred_element_type=jnp.float32) + b1
        h1, c1 = gates_to_hc(g1, c1)

    h_out_ref[...] = h1


def init_params(key, num_symbols=NUM_SYMBOLS, input_size=INPUT_SIZE,
                hidden_size=HIDDEN_SIZE, emb_dim=EMB_DIM,
                output_size=OUTPUT_SIZE):
    """Deterministic synthetic parameters (PyTorch-like uniform init)."""
    H = hidden_size
    d0 = input_size + emb_dim
    k_lstm = 1.0 / jnp.sqrt(jnp.float32(H))
    keys = jax.random.split(key, 12)

    def u(k, shape, scale):
        return jax.random.uniform(k, shape, jnp.float32, -scale, scale)

    params = {
        "symbol_emb": jax.random.normal(keys[0], (num_symbols, emb_dim),
                                        jnp.float32),
        # layer 0 (PyTorch layout: (4H, in), (4H, H), (4H,), (4H,))
        "w_ih0": u(keys[1], (4 * H, d0), k_lstm),
        "w_hh0": u(keys[2], (4 * H, H), k_lstm),
        "b_ih0": u(keys[3], (4 * H,), k_lstm),
        "b_hh0": u(keys[4], (4 * H,), k_lstm),
        # layer 1
        "w_ih1": u(keys[5], (4 * H, H), k_lstm),
        "w_hh1": u(keys[6], (4 * H, H), k_lstm),
        "b_ih1": u(keys[7], (4 * H,), k_lstm),
        "b_hh1": u(keys[8], (4 * H,), k_lstm),
        # fc head
        "fc_w": u(keys[9], (output_size, H), 1.0 / jnp.sqrt(jnp.float32(H))),
        "fc_b": u(keys[10], (output_size,), 1.0 / jnp.sqrt(jnp.float32(H))),
    }
    return params


def multi_symbol_lstm_forward(x_seq, sym_id, params):
    """x_seq: (B, S, 1) f32;  sym_id: (B,) int32  ->  (B, 1) f32."""
    B, S, _ = x_seq.shape
    H = params["w_hh0"].shape[1]

    # ---- glue (plain JAX): embedding lookup, broadcast, concat -------------
    emb = jnp.take(params["symbol_emb"], sym_id, axis=0)            # (B, E)
    emb_exp = jnp.broadcast_to(emb[:, None, :], (B, S, emb.shape[-1]))
    combined = jnp.concatenate([x_seq, emb_exp], axis=2)            # (B, S, D)

    # Pad batch to a full sublane (8) for aligned (8, 128) tiles in-kernel.
    B_pad = max(8, ((B + 7) // 8) * 8)
    if B_pad != B:
        combined = jnp.pad(combined, ((0, B_pad - B), (0, 0), (0, 0)))

    d_in = combined.shape[-1]
    # time-major flatten: (S, B_pad, D_in) -> (S*B_pad, D_in)
    x_flat = jnp.transpose(combined, (1, 0, 2)).reshape(S * B_pad, d_in)

    # pre-transpose / fuse weights so the kernel does x @ W (lane dim = 4H)
    w_ih0 = params["w_ih0"].T                                       # (D_in,4H)
    w_hh0 = params["w_hh0"].T                                       # (H, 4H)
    b0 = (params["b_ih0"] + params["b_hh0"]).reshape(1, 4 * H)
    w1 = jnp.concatenate([params["w_ih1"].T, params["w_hh1"].T],
                         axis=0)                                    # (2H, 4H)
    b1 = (params["b_ih1"] + params["b_hh1"]).reshape(1, 4 * H)

    const = lambda i: (0, 0)

    h_last = pl.pallas_call(
        functools.partial(lstm_kernel, seq_len=S, batch=B_pad),
        out_shape=jax.ShapeDtypeStruct((B_pad, H), jnp.float32),
        grid_spec=pltpu.PrefetchScalarGridSpec(
            num_scalar_prefetch=0,
            grid=(1,),
            in_specs=[
                pl.BlockSpec((S * B_pad, d_in), const),   # x (time-major flat)
                pl.BlockSpec((d_in, 4 * H), const),       # w_ih0
                pl.BlockSpec((H, 4 * H), const),          # w_hh0
                pl.BlockSpec((1, 4 * H), const),          # b0
                pl.BlockSpec((2 * H, 4 * H), const),      # fused w1
                pl.BlockSpec((1, 4 * H), const),          # b1
            ],
            out_specs=pl.BlockSpec((B_pad, H), const),    # lane-dense h_last
        ),
        compiler_params=pltpu.CompilerParams(
            dimension_semantics=("arbitrary",)),
    )(x_flat, w_ih0, w_hh0, b0, w1, b1)

    # tiny fc head (128 -> 1) in the wrapper: avoids a lane-width-1 kernel
    # output / degenerate N=1 MXU op.
    h_last = h_last[:B]
    y = h_last @ params["fc_w"].T + params["fc_b"]
    return y


# ---------------------------- pure-JAX reference -----------------------------
def reference_forward(x_seq, sym_id, params):
    B, S, _ = x_seq.shape
    H = params["w_hh0"].shape[1]
    emb = jnp.take(params["symbol_emb"], sym_id, axis=0)
    emb_exp = jnp.broadcast_to(emb[:, None, :], (B, S, emb.shape[-1]))
    combined = jnp.concatenate([x_seq, emb_exp], axis=2)

    def cell(x, h, c, w_ih, w_hh, b_ih, b_hh):
        gates = x @ w_ih.T + h @ w_hh.T + b_ih + b_hh
        i, f, g, o = jnp.split(gates, 4, axis=-1)
        c_new = jax.nn.sigmoid(f) * c + jax.nn.sigmoid(i) * jnp.tanh(g)
        h_new = jax.nn.sigmoid(o) * jnp.tanh(c_new)
        return h_new, c_new

    def step(carry, x_t):
        h0, c0, h1, c1 = carry
        h0, c0 = cell(x_t, h0, c0, params["w_ih0"], params["w_hh0"],
                      params["b_ih0"], params["b_hh0"])
        h1, c1 = cell(h0, h1, c1, params["w_ih1"], params["w_hh1"],
                      params["b_ih1"], params["b_hh1"])
        return (h0, c0, h1, c1), h1

    init = tuple(jnp.zeros((B, H), jnp.float32) for _ in range(4))
    (_, _, h1, _), _ = jax.lax.scan(step, init,
                                    jnp.transpose(combined, (1, 0, 2)))
    return h1 @ params["fc_w"].T + params["fc_b"]


if __name__ == "__main__":
    key = jax.random.PRNGKey(0)
    kp, kx, ks = jax.random.split(key, 3)

    params = init_params(kp)
    x_seq = jax.random.normal(kx, (BATCH, SEQ_LEN, INPUT_SIZE), jnp.float32)
    sym_id = jax.random.randint(ks, (BATCH,), 0, NUM_SYMBOLS, jnp.int32)

    y = multi_symbol_lstm_forward(x_seq, sym_id, params)
    y = jax.block_until_ready(y)

    y_ref = reference_forward(x_seq, sym_id, params)
    assert y.shape == (BATCH, OUTPUT_SIZE)
    assert jnp.allclose(y, y_ref, rtol=1e-4, atol=1e-4), (y, y_ref)

    print("KERNEL_OK")
</pallas_src>

<mosaic_0001>
module attributes {stable_mosaic.version = 11 : i64} {
  func.func @lstm_kernel(%arg0: i32, %arg1: memref<64x9xf32, #tpu.memory_space<vmem>>, %arg2: memref<9x512xf32, #tpu.memory_space<vmem>>, %arg3: memref<128x512xf32, #tpu.memory_space<vmem>>, %arg4: memref<1x512xf32, #tpu.memory_space<vmem>>, %arg5: memref<256x512xf32, #tpu.memory_space<vmem>>, %arg6: memref<1x512xf32, #tpu.memory_space<vmem>>, %arg7: memref<8x128xf32, #tpu.memory_space<vmem>>) attributes {dimension_semantics = [#tpu.dimension_semantics<arbitrary>], iteration_bounds = array<i64: 1>, scalar_prefetch = 0 : i64, scratch_operands = 0 : i64, tpu.core_type = #tpu.core_type<tc>, window_params = [{pipeline_mode = #tpu.pipeline_mode<synchronous>, transform_indices = @transform_0, window_bounds = array<i64: 64, 9>}, {pipeline_mode = #tpu.pipeline_mode<synchronous>, transform_indices = @transform_1, window_bounds = array<i64: 9, 512>}, {pipeline_mode = #tpu.pipeline_mode<synchronous>, transform_indices = @transform_2, window_bounds = array<i64: 128, 512>}, {pipeline_mode = #tpu.pipeline_mode<synchronous>, transform_indices = @transform_3, window_bounds = array<i64: 1, 512>}, {pipeline_mode = #tpu.pipeline_mode<synchronous>, transform_indices = @transform_4, window_bounds = array<i64: 256, 512>}, {pipeline_mode = #tpu.pipeline_mode<synchronous>, transform_indices = @transform_5, window_bounds = array<i64: 1, 512>}, {pipeline_mode = #tpu.pipeline_mode<synchronous>, transform_indices = @transform_6, window_bounds = array<i64: 8, 128>}]} {
    %c0 = arith.constant 0 : index
    %c0_0 = arith.constant 0 : index
    %0 = vector.load %arg1[%c0, %c0_0] : memref<64x9xf32, #tpu.memory_space<vmem>>, vector<64x9xf32>
    %c0_1 = arith.constant 0 : index
    %c0_2 = arith.constant 0 : index
    %1 = vector.load %arg2[%c0_1, %c0_2] : memref<9x512xf32, #tpu.memory_space<vmem>>, vector<9x512xf32>
    %cst = arith.constant dense<0.000000e+00> : vector<64x512xf32>
    %2 = tpu.matmul %0, %1, %cst {dimension_numbers = #tpu.dot_dimension_numbers<[1], [0], [0], [1], [0, 0, 1, 1], [], []>} : vector<64x9xf32>, vector<9x512xf32>, vector<64x512xf32> -> vector<64x512xf32>
    %c0_3 = arith.constant 0 : index
    %c0_4 = arith.constant 0 : index
    %3 = vector.load %arg4[%c0_3, %c0_4] : memref<1x512xf32, #tpu.memory_space<vmem>>, vector<1x512xf32>
    %4 = vector.broadcast %3 : vector<1x512xf32> to vector<64x512xf32>
    %5 = arith.addf %2, %4 : vector<64x512xf32>
    %c0_5 = arith.constant 0 : index
    %c0_6 = arith.constant 0 : index
    %6 = vector.load %arg3[%c0_5, %c0_6] : memref<128x512xf32, #tpu.memory_space<vmem>>, vector<128x512xf32>
    %c0_7 = arith.constant 0 : index
    %c0_8 = arith.constant 0 : index
    %7 = vector.load %arg5[%c0_7, %c0_8] : memref<256x512xf32, #tpu.memory_space<vmem>>, vector<256x512xf32>
    %c0_9 = arith.constant 0 : index
    %c0_10 = arith.constant 0 : index
    %8 = vector.load %arg6[%c0_9, %c0_10] : memref<1x512xf32, #tpu.memory_space<vmem>>, vector<1x512xf32>
    %9 = vector.shape_cast %8 : vector<1x512xf32> to vector<1x512xf32>
    %10 = vector.broadcast %9 : vector<1x512xf32> to vector<8x512xf32>
    %cst_11 = arith.constant 0.000000e+00 : f32
    %11 = vector.broadcast %cst_11 : f32 to vector<8x128xf32>
    %cst_12 = arith.constant 0.000000e+00 : f32
    %12 = vector.broadcast %cst_12 : f32 to vector<8x128xf32>
    %cst_13 = arith.constant 0.000000e+00 : f32
    %13 = vector.broadcast %cst_13 : f32 to vector<8x128xf32>
    %cst_14 = arith.constant 0.000000e+00 : f32
    %14 = vector.broadcast %cst_14 : f32 to vector<8x128xf32>
    %15 = vector.extract_strided_slice %5 {offsets = [0, 0], sizes = [8, 512], strides = [1, 1]} : vector<64x512xf32> to vector<8x512xf32>
    %cst_15 = arith.constant dense<0.000000e+00> : vector<8x512xf32>
    %16 = tpu.matmul %11, %6, %cst_15 {dimension_numbers = #tpu.dot_dimension_numbers<[1], [0], [0], [1], [0, 0, 1, 1], [], []>} : vector<8x128xf32>, vector<128x512xf32>, vector<8x512xf32> -> vector<8x512xf32>
    %17 = arith.addf %15, %16 : vector<8x512xf32>
    %18 = vector.extract_strided_slice %17 {offsets = [0, 0], sizes = [8, 128], strides = [1, 1]} : vector<8x512xf32> to vector<8x128xf32>
    %19 = arith.negf %18 : vector<8x128xf32>
    %20 = math.exp %19 : vector<8x128xf32>
    %cst_16 = arith.constant 1.000000e+00 : f32
    %21 = vector.broadcast %cst_16 : f32 to vector<8x128xf32>
    %22 = arith.addf %21, %20 : vector<8x128xf32>
    %23 = arith.divf %21, %22 : vector<8x128xf32>
    %24 = vector.extract_strided_slice %17 {offsets = [0, 128], sizes = [8, 128], strides = [1, 1]} : vector<8x512xf32> to vector<8x128xf32>
    %25 = arith.negf %24 : vector<8x128xf32>
    %26 = math.exp %25 : vector<8x128xf32>
    %cst_17 = arith.constant 1.000000e+00 : f32
    %27 = vector.broadcast %cst_17 : f32 to vector<8x128xf32>
    %28 = arith.addf %27, %26 : vector<8x128xf32>
    %29 = arith.divf %27, %28 : vector<8x128xf32>
    %30 = vector.extract_strided_slice %17 {offsets = [0, 256], sizes = [8, 128], strides = [1, 1]} : vector<8x512xf32> to vector<8x128xf32>
    %31 = math.tanh %30 : vector<8x128xf32>
    %32 = vector.extract_strided_slice %17 {offsets = [0, 384], sizes = [8, 128], strides = [1, 1]} : vector<8x512xf32> to vector<8x128xf32>
    %33 = arith.negf %32 : vector<8x128xf32>
    %34 = math.exp %33 : vector<8x128xf32>
    %cst_18 = arith.constant 1.000000e+00 : f32
    %35 = vector.broadcast %cst_18 : f32 to vector<8x128xf32>
    %36 = arith.addf %35, %34 : vector<8x128xf32>
    %37 = arith.divf %35, %36 : vector<8x128xf32>
    %38 = arith.mulf %29, %12 : vector<8x128xf32>
    %39 = arith.mulf %23, %31 : vector<8x128xf32>
    %40 = arith.addf %38, %39 : vector<8x128xf32>
    %41 = math.tanh %40 : vector<8x128xf32>
    %42 = arith.mulf %37, %41 : vector<8x128xf32>
    %43 = tpu.concatenate %42, %13 in 1 : vector<8x128xf32>, vector<8x128xf32> -> vector<8x256xf32>
    %cst_19 = arith.constant dense<0.000000e+00> : vector<8x512xf32>
    %44 = tpu.matmul %43, %7, %cst_19 {dimension_numbers = #tpu.dot_dimension_numbers<[1], [0], [0], [1], [0, 0, 1, 1], [], []>} : vector<8x256xf32>, vector<256x512xf32>, vector<8x512xf32> -> vector<8x512xf32>
    %45 = arith.addf %44, %10 : vector<8x512xf32>
    %46 = vector.extract_strided_slice %45 {offsets = [0, 0], sizes = [8, 128], strides = [1, 1]} : vector<8x512xf32> to vector<8x128xf32>
    %47 = arith.negf %46 : vector<8x128xf32>
    %48 = math.exp %47 : vector<8x128xf32>
    %cst_20 = arith.constant 1.000000e+00 : f32
    %49 = vector.broadcast %cst_20 : f32 to vector<8x128xf32>
    %50 = arith.addf %49, %48 : vector<8x128xf32>
    %51 = arith.divf %49, %50 : vector<8x128xf32>
    %52 = vector.extract_strided_slice %45 {offsets = [0, 128], sizes = [8, 128], strides = [1, 1]} : vector<8x512xf32> to vector<8x128xf32>
    %53 = arith.negf %52 : vector<8x128xf32>
    %54 = math.exp %53 : vector<8x128xf32>
    %cst_21 = arith.constant 1.000000e+00 : f32
    %55 = vector.broadcast %cst_21 : f32 to vector<8x128xf32>
    %56 = arith.addf %55, %54 : vector<8x128xf32>
    %57 = arith.divf %55, %56 : vector<8x128xf32>
    %58 = vector.extract_strided_slice %45 {offsets = [0, 256], sizes = [8, 128], strides = [1, 1]} : vector<8x512xf32> to vector<8x128xf32>
    %59 = math.tanh %58 : vector<8x128xf32>
    %60 = vector.extract_strided_slice %45 {offsets = [0, 384], sizes = [8, 128], strides = [1, 1]} : vector<8x512xf32> to vector<8x128xf32>
    %61 = arith.negf %60 : vector<8x128xf32>
    %62 = math.exp %61 : vector<8x128xf32>
    %cst_22 = arith.constant 1.000000e+00 : f32
    %63 = vector.broadcast %cst_22 : f32 to vector<8x128xf32>
    %64 = arith.addf %63, %62 : vector<8x128xf32>
    %65 = arith.divf %63, %64 : vector<8x128xf32>
    %66 = arith.mulf %57, %14 : vector<8x128xf32>
    %67 = arith.mulf %51, %59 : vector<8x128xf32>
    %68 = arith.addf %66, %67 : vector<8x128xf32>
    %69 = math.tanh %68 : vector<8x128xf32>
    %70 = arith.mulf %65, %69 : vector<8x128xf32>
    %71 = vector.extract_strided_slice %5 {offsets = [8, 0], sizes = [8, 512], strides = [1, 1]} : vector<64x512xf32> to vector<8x512xf32>
    %cst_23 = arith.constant dense<0.000000e+00> : vector<8x512xf32>
    %72 = tpu.matmul %42, %6, %cst_23 {dimension_numbers = #tpu.dot_dimension_numbers<[1], [0], [0], [1], [0, 0, 1, 1], [], []>} : vector<8x128xf32>, vector<128x512xf32>, vector<8x512xf32> -> vector<8x512xf32>
    %73 = arith.addf %71, %72 : vector<8x512xf32>
    %74 = vector.extract_strided_slice %73 {offsets = [0, 0], sizes = [8, 128], strides = [1, 1]} : vector<8x512xf32> to vector<8x128xf32>
    %75 = arith.negf %74 : vector<8x128xf32>
    %76 = math.exp %75 : vector<8x128xf32>
    %cst_24 = arith.constant 1.000000e+00 : f32
    %77 = vector.broadcast %cst_24 : f32 to vector<8x128xf32>
    %78 = arith.addf %77, %76 : vector<8x128xf32>
    %79 = arith.divf %77, %78 : vector<8x128xf32>
    %80 = vector.extract_strided_slice %73 {offsets = [0, 128], sizes = [8, 128], strides = [1, 1]} : vector<8x512xf32> to vector<8x128xf32>
    %81 = arith.negf %80 : vector<8x128xf32>
    %82 = math.exp %81 : vector<8x128xf32>
    %cst_25 = arith.constant 1.000000e+00 : f32
    %83 = vector.broadcast %cst_25 : f32 to vector<8x128xf32>
    %84 = arith.addf %83, %82 : vector<8x128xf32>
    %85 = arith.divf %83, %84 : vector<8x128xf32>
    %86 = vector.extract_strided_slice %73 {offsets = [0, 256], sizes = [8, 128], strides = [1, 1]} : vector<8x512xf32> to vector<8x128xf32>
    %87 = math.tanh %86 : vector<8x128xf32>
    %88 = vector.extract_strided_slice %73 {offsets = [0, 384], sizes = [8, 128], strides = [1, 1]} : vector<8x512xf32> to vector<8x128xf32>
    %89 = arith.negf %88 : vector<8x128xf32>
    %90 = math.exp %89 : vector<8x128xf32>
    %cst_26 = arith.constant 1.000000e+00 : f32
    %91 = vector.broadcast %cst_26 : f32 to vector<8x128xf32>
    %92 = arith.addf %91, %90 : vector<8x128xf32>
    %93 = arith.divf %91, %92 : vector<8x128xf32>
    %94 = arith.mulf %85, %40 : vector<8x128xf32>
    %95 = arith.mulf %79, %87 : vector<8x128xf32>
    %96 = arith.addf %94, %95 : vector<8x128xf32>
    %97 = math.tanh %96 : vector<8x128xf32>
    %98 = arith.mulf %93, %97 : vector<8x128xf32>
    %99 = tpu.concatenate %98, %70 in 1 : vector<8x128xf32>, vector<8x128xf32> -> vector<8x256xf32>
    %cst_27 = arith.constant dense<0.000000e+00> : vector<8x512xf32>
    %100 = tpu.matmul %99, %7, %cst_27 {dimension_numbers = #tpu.dot_dimension_numbers<[1], [0], [0], [1], [0, 0, 1, 1], [], []>} : vector<8x256xf32>, vector<256x512xf32>, vector<8x512xf32> -> vector<8x512xf32>
    %101 = arith.addf %100, %10 : vector<8x512xf32>
    %102 = vector.extract_strided_slice %101 {offsets = [0, 0], sizes = [8, 128], strides = [1, 1]} : vector<8x512xf32> to vector<8x128xf32>
    %103 = arith.negf %102 : vector<8x128xf32>
    %104 = math.exp %103 : vector<8x128xf32>
    %cst_28 = arith.constant 1.000000e+00 : f32
    %105 = vector.broadcast %cst_28 : f32 to vector<8x128xf32>
    %106 = arith.addf %105, %104 : vector<8x128xf32>
    %107 = arith.divf %105, %106 : vector<8x128xf32>
    %108 = vector.extract_strided_slice %101 {offsets = [0, 128], sizes = [8, 128], strides = [1, 1]} : vector<8x512xf32> to vector<8x128xf32>
    %109 = arith.negf %108 : vector<8x128xf32>
    %110 = math.exp %109 : vector<8x128xf32>
    %cst_29 = arith.constant 1.000000e+00 : f32
    %111 = vector.broadcast %cst_29 : f32 to vector<8x128xf32>
    %112 = arith.addf %111, %110 : vector<8x128xf32>
    %113 = arith.divf %111, %112 : vector<8x128xf32>
    %114 = vector.extract_strided_slice %101 {offsets = [0, 256], sizes = [8, 128], strides = [1, 1]} : vector<8x512xf32> to vector<8x128xf32>
    %115 = math.tanh %114 : vector<8x128xf32>
    %116 = vector.extract_strided_slice %101 {offsets = [0, 384], sizes = [8, 128], strides = [1, 1]} : vector<8x512xf32> to vector<8x128xf32>
    %117 = arith.negf %116 : vector<8x128xf32>
    %118 = math.exp %117 : vector<8x128xf32>
    %cst_30 = arith.constant 1.000000e+00 : f32
    %119 = vector.broadcast %cst_30 : f32 to vector<8x128xf32>
    %120 = arith.addf %119, %118 : vector<8x128xf32>
    %121 = arith.divf %119, %120 : vector<8x128xf32>
    %122 = arith.mulf %113, %68 : vector<8x128xf32>
    %123 = arith.mulf %107, %115 : vector<8x128xf32>
    %124 = arith.addf %122, %123 : vector<8x128xf32>
    %125 = math.tanh %124 : vector<8x128xf32>
    %126 = arith.mulf %121, %125 : vector<8x128xf32>
    %127 = vector.extract_strided_slice %5 {offsets = [16, 0], sizes = [8, 512], strides = [1, 1]} : vector<64x512xf32> to vector<8x512xf32>
    %cst_31 = arith.constant dense<0.000000e+00> : vector<8x512xf32>
    %128 = tpu.matmul %98, %6, %cst_31 {dimension_numbers = #tpu.dot_dimension_numbers<[1], [0], [0], [1], [0, 0, 1, 1], [], []>} : vector<8x128xf32>, vector<128x512xf32>, vector<8x512xf32> -> vector<8x512xf32>
    %129 = arith.addf %127, %128 : vector<8x512xf32>
    %130 = vector.extract_strided_slice %129 {offsets = [0, 0], sizes = [8, 128], strides = [1, 1]} : vector<8x512xf32> to vector<8x128xf32>
    %131 = arith.negf %130 : vector<8x128xf32>
    %132 = math.exp %131 : vector<8x128xf32>
    %cst_32 = arith.constant 1.000000e+00 : f32
    %133 = vector.broadcast %cst_32 : f32 to vector<8x128xf32>
    %134 = arith.addf %133, %132 : vector<8x128xf32>
    %135 = arith.divf %133, %134 : vector<8x128xf32>
    %136 = vector.extract_strided_slice %129 {offsets = [0, 128], sizes = [8, 128], strides = [1, 1]} : vector<8x512xf32> to vector<8x128xf32>
    %137 = arith.negf %136 : vector<8x128xf32>
    %138 = math.exp %137 : vector<8x128xf32>
    %cst_33 = arith.constant 1.000000e+00 : f32
    %139 = vector.broadcast %cst_33 : f32 to vector<8x128xf32>
    %140 = arith.addf %139, %138 : vector<8x128xf32>
    %141 = arith.divf %139, %140 : vector<8x128xf32>
    %142 = vector.extract_strided_slice %129 {offsets = [0, 256], sizes = [8, 128], strides = [1, 1]} : vector<8x512xf32> to vector<8x128xf32>
    %143 = math.tanh %142 : vector<8x128xf32>
    %144 = vector.extract_strided_slice %129 {offsets = [0, 384], sizes = [8, 128], strides = [1, 1]} : vector<8x512xf32> to vector<8x128xf32>
    %145 = arith.negf %144 : vector<8x128xf32>
    %146 = math.exp %145 : vector<8x128xf32>
    %cst_34 = arith.constant 1.000000e+00 : f32
    %147 = vector.broadcast %cst_34 : f32 to vector<8x128xf32>
    %148 = arith.addf %147, %146 : vector<8x128xf32>
    %149 = arith.divf %147, %148 : vector<8x128xf32>
    %150 = arith.mulf %141, %96 : vector<8x128xf32>
    %151 = arith.mulf %135, %143 : vector<8x128xf32>
    %152 = arith.addf %150, %151 : vector<8x128xf32>
    %153 = math.tanh %152 : vector<8x128xf32>
    %154 = arith.mulf %149, %153 : vector<8x128xf32>
    %155 = tpu.concatenate %154, %126 in 1 : vector<8x128xf32>, vector<8x128xf32> -> vector<8x256xf32>
    %cst_35 = arith.constant dense<0.000000e+00> : vector<8x512xf32>
    %156 = tpu.matmul %155, %7, %cst_35 {dimension_numbers = #tpu.dot_dimension_numbers<[1], [0], [0], [1], [0, 0, 1, 1], [], []>} : vector<8x256xf32>, vector<256x512xf32>, vector<8x512xf32> -> vector<8x512xf32>
    %157 = arith.addf %156, %10 : vector<8x512xf32>
    %158 = vector.extract_strided_slice %157 {offsets = [0, 0], sizes = [8, 128], strides = [1, 1]} : vector<8x512xf32> to vector<8x128xf32>
    %159 = arith.negf %158 : vector<8x128xf32>
    %160 = math.exp %159 : vector<8x128xf32>
    %cst_36 = arith.constant 1.000000e+00 : f32
    %161 = vector.broadcast %cst_36 : f32 to vector<8x128xf32>
    %162 = arith.addf %161, %160 : vector<8x128xf32>
    %163 = arith.divf %161, %162 : vector<8x128xf32>
    %164 = vector.extract_strided_slice %157 {offsets = [0, 128], sizes = [8, 128], strides = [1, 1]} : vector<8x512xf32> to vector<8x128xf32>
    %165 = arith.negf %164 : vector<8x128xf32>
    %166 = math.exp %165 : vector<8x128xf32>
    %cst_37 = arith.constant 1.000000e+00 : f32
    %167 = vector.broadcast %cst_37 : f32 to vector<8x128xf32>
    %168 = arith.addf %167, %166 : vector<8x128xf32>
    %169 = arith.divf %167, %168 : vector<8x128xf32>
    %170 = vector.extract_strided_slice %157 {offsets = [0, 256], sizes = [8, 128], strides = [1, 1]} : vector<8x512xf32> to vector<8x128xf32>
    %171 = math.tanh %170 : vector<8x128xf32>
    %172 = vector.extract_strided_slice %157 {offsets = [0, 384], sizes = [8, 128], strides = [1, 1]} : vector<8x512xf32> to vector<8x128xf32>
    %173 = arith.negf %172 : vector<8x128xf32>
    %174 = math.exp %173 : vector<8x128xf32>
    %cst_38 = arith.constant 1.000000e+00 : f32
    %175 = vector.broadcast %cst_38 : f32 to vector<8x128xf32>
    %176 = arith.addf %175, %174 : vector<8x128xf32>
    %177 = arith.divf %175, %176 : vector<8x128xf32>
    %178 = arith.mulf %169, %124 : vector<8x128xf32>
    %179 = arith.mulf %163, %171 : vector<8x128xf32>
    %180 = arith.addf %178, %179 : vector<8x128xf32>
    %181 = math.tanh %180 : vector<8x128xf32>
    %182 = arith.mulf %177, %181 : vector<8x128xf32>
    %183 = vector.extract_strided_slice %5 {offsets = [24, 0], sizes = [8, 512], strides = [1, 1]} : vector<64x512xf32> to vector<8x512xf32>
    %cst_39 = arith.constant dense<0.000000e+00> : vector<8x512xf32>
    %184 = tpu.matmul %154, %6, %cst_39 {dimension_numbers = #tpu.dot_dimension_numbers<[1], [0], [0], [1], [0, 0, 1, 1], [], []>} : vector<8x128xf32>, vector<128x512xf32>, vector<8x512xf32> -> vector<8x512xf32>
    %185 = arith.addf %183, %184 : vector<8x512xf32>
    %186 = vector.extract_strided_slice %185 {offsets = [0, 0], sizes = [8, 128], strides = [1, 1]} : vector<8x512xf32> to vector<8x128xf32>
    %187 = arith.negf %186 : vector<8x128xf32>
    %188 = math.exp %187 : vector<8x128xf32>
    %cst_40 = arith.constant 1.000000e+00 : f32
    %189 = vector.broadcast %cst_40 : f32 to vector<8x128xf32>
    %190 = arith.addf %189, %188 : vector<8x128xf32>
    %191 = arith.divf %189, %190 : vector<8x128xf32>
    %192 = vector.extract_strided_slice %185 {offsets = [0, 128], sizes = [8, 128], strides = [1, 1]} : vector<8x512xf32> to vector<8x128xf32>
    %193 = arith.negf %192 : vector<8x128xf32>
    %194 = math.exp %193 : vector<8x128xf32>
    %cst_41 = arith.constant 1.000000e+00 : f32
    %195 = vector.broadcast %cst_41 : f32 to vector<8x128xf32>
    %196 = arith.addf %195, %194 : vector<8x128xf32>
    %197 = arith.divf %195, %196 : vector<8x128xf32>
    %198 = vector.extract_strided_slice %185 {offsets = [0, 256], sizes = [8, 128], strides = [1, 1]} : vector<8x512xf32> to vector<8x128xf32>
    %199 = math.tanh %198 : vector<8x128xf32>
    %200 = vector.extract_strided_slice %185 {offsets = [0, 384], sizes = [8, 128], strides = [1, 1]} : vector<8x512xf32> to vector<8x128xf32>
    %201 = arith.negf %200 : vector<8x128xf32>
    %202 = math.exp %201 : vector<8x128xf32>
    %cst_42 = arith.constant 1.000000e+00 : f32
    %203 = vector.broadcast %cst_42 : f32 to vector<8x128xf32>
    %204 = arith.addf %203, %202 : vector<8x128xf32>
    %205 = arith.divf %203, %204 : vector<8x128xf32>
    %206 = arith.mulf %197, %152 : vector<8x128xf32>
    %207 = arith.mulf %191, %199 : vector<8x128xf32>
    %208 = arith.addf %206, %207 : vector<8x128xf32>
    %209 = math.tanh %208 : vector<8x128xf32>
    %210 = arith.mulf %205, %209 : vector<8x128xf32>
    %211 = tpu.concatenate %210, %182 in 1 : vector<8x128xf32>, vector<8x128xf32> -> vector<8x256xf32>
    %cst_43 = arith.constant dense<0.000000e+00> : vector<8x512xf32>
    %212 = tpu.matmul %211, %7, %cst_43 {dimension_numbers = #tpu.dot_dimension_numbers<[1], [0], [0], [1], [0, 0, 1, 1], [], []>} : vector<8x256xf32>, vector<256x512xf32>, vector<8x512xf32> -> vector<8x512xf32>
    %213 = arith.addf %212, %10 : vector<8x512xf32>
    %214 = vector.extract_strided_slice %213 {offsets = [0, 0], sizes = [8, 128], strides = [1, 1]} : vector<8x512xf32> to vector<8x128xf32>
    %215 = arith.negf %214 : vector<8x128xf32>
    %216 = math.exp %215 : vector<8x128xf32>
    %cst_44 = arith.constant 1.000000e+00 : f32
    %217 = vector.broadcast %cst_44 : f32 to vector<8x128xf32>
    %218 = arith.addf %217, %216 : vector<8x128xf32>
    %219 = arith.divf %217, %218 : vector<8x128xf32>
    %220 = vector.extract_strided_slice %213 {offsets = [0, 128], sizes = [8, 128], strides = [1, 1]} : vector<8x512xf32> to vector<8x128xf32>
    %221 = arith.negf %220 : vector<8x128xf32>
    %222 = math.exp %221 : vector<8x128xf32>
    %cst_45 = arith.constant 1.000000e+00 : f32
    %223 = vector.broadcast %cst_45 : f32 to vector<8x128xf32>
    %224 = arith.addf %223, %222 : vector<8x128xf32>
    %225 = arith.divf %223, %224 : vector<8x128xf32>
    %226 = vector.extract_strided_slice %213 {offsets = [0, 256], sizes = [8, 128], strides = [1, 1]} : vector<8x512xf32> to vector<8x128xf32>
    %227 = math.tanh %226 : vector<8x128xf32>
    %228 = vector.extract_strided_slice %213 {offsets = [0, 384], sizes = [8, 128], strides = [1, 1]} : vector<8x512xf32> to vector<8x128xf32>
    %229 = arith.negf %228 : vector<8x128xf32>
    %230 = math.exp %229 : vector<8x128xf32>
    %cst_46 = arith.constant 1.000000e+00 : f32
    %231 = vector.broadcast %cst_46 : f32 to vector<8x128xf32>
    %232 = arith.addf %231, %230 : vector<8x128xf32>
    %233 = arith.divf %231, %232 : vector<8x128xf32>
    %234 = arith.mulf %225, %180 : vector<8x128xf32>
    %235 = arith.mulf %219, %227 : vector<8x128xf32>
    %236 = arith.addf %234, %235 : vector<8x128xf32>
    %237 = math.tanh %236 : vector<8x128xf32>
    %238 = arith.mulf %233, %237 : vector<8x128xf32>
    %239 = vector.extract_strided_slice %5 {offsets = [32, 0], sizes = [8, 512], strides = [1, 1]} : vector<64x512xf32> to vector<8x512xf32>
    %cst_47 = arith.constant dense<0.000000e+00> : vector<8x512xf32>
    %240 = tpu.matmul %210, %6, %cst_47 {dimension_numbers = #tpu.dot_dimension_numbers<[1], [0], [0], [1], [0, 0, 1, 1], [], []>} : vector<8x128xf32>, vector<128x512xf32>, vector<8x512xf32> -> vector<8x512xf32>
    %241 = arith.addf %239, %240 : vector<8x512xf32>
    %242 = vector.extract_strided_slice %241 {offsets = [0, 0], sizes = [8, 128], strides = [1, 1]} : vector<8x512xf32> to vector<8x128xf32>
    %243 = arith.negf %242 : vector<8x128xf32>
    %244 = math.exp %243 : vector<8x128xf32>
    %cst_48 = arith.constant 1.000000e+00 : f32
    %245 = vector.broadcast %cst_48 : f32 to vector<8x128xf32>
    %246 = arith.addf %245, %244 : vector<8x128xf32>
    %247 = arith.divf %245, %246 : vector<8x128xf32>
    %248 = vector.extract_strided_slice %241 {offsets = [0, 128], sizes = [8, 128], strides = [1, 1]} : vector<8x512xf32> to vector<8x128xf32>
    %249 = arith.negf %248 : vector<8x128xf32>
    %250 = math.exp %249 : vector<8x128xf32>
    %cst_49 = arith.constant 1.000000e+00 : f32
    %251 = vector.broadcast %cst_49 : f32 to vector<8x128xf32>
    %252 = arith.addf %251, %250 : vector<8x128xf32>
    %253 = arith.divf %251, %252 : vector<8x128xf32>
    %254 = vector.extract_strided_slice %241 {offsets = [0, 256], sizes = [8, 128], strides = [1, 1]} : vector<8x512xf32> to vector<8x128xf32>
    %255 = math.tanh %254 : vector<8x128xf32>
    %256 = vector.extract_strided_slice %241 {offsets = [0, 384], sizes = [8, 128], strides = [1, 1]} : vector<8x512xf32> to vector<8x128xf32>
    %257 = arith.negf %256 : vector<8x128xf32>
    %258 = math.exp %257 : vector<8x128xf32>
    %cst_50 = arith.constant 1.000000e+00 : f32
    %259 = vector.broadcast %cst_50 : f32 to vector<8x128xf32>
    %260 = arith.addf %259, %258 : vector<8x128xf32>
    %261 = arith.divf %259, %260 : vector<8x128xf32>
    %262 = arith.mulf %253, %208 : vector<8x128xf32>
    %263 = arith.mulf %247, %255 : vector<8x128xf32>
    %264 = arith.addf %262, %263 : vector<8x128xf32>
    %265 = math.tanh %264 : vector<8x128xf32>
    %266 = arith.mulf %261, %265 : vector<8x128xf32>
    %267 = tpu.concatenate %266, %238 in 1 : vector<8x128xf32>, vector<8x128xf32> -> vector<8x256xf32>
    %cst_51 = arith.constant dense<0.000000e+00> : vector<8x512xf32>
    %268 = tpu.matmul %267, %7, %cst_51 {dimension_numbers = #tpu.dot_dimension_numbers<[1], [0], [0], [1], [0, 0, 1, 1], [], []>} : vector<8x256xf32>, vector<256x512xf32>, vector<8x512xf32> -> vector<8x512xf32>
    %269 = arith.addf %268, %10 : vector<8x512xf32>
    %270 = vector.extract_strided_slice %269 {offsets = [0, 0], sizes = [8, 128], strides = [1, 1]} : vector<8x512xf32> to vector<8x128xf32>
    %271 = arith.negf %270 : vector<8x128xf32>
    %272 = math.exp %271 : vector<8x128xf32>
    %cst_52 = arith.constant 1.000000e+00 : f32
    %273 = vector.broadcast %cst_52 : f32 to vector<8x128xf32>
    %274 = arith.addf %273, %272 : vector<8x128xf32>
    %275 = arith.divf %273, %274 : vector<8x128xf32>
    %276 = vector.extract_strided_slice %269 {offsets = [0, 128], sizes = [8, 128], strides = [1, 1]} : vector<8x512xf32> to vector<8x128xf32>
    %277 = arith.negf %276 : vector<8x128xf32>
    %278 = math.exp %277 : vector<8x128xf32>
    %cst_53 = arith.constant 1.000000e+00 : f32
    %279 = vector.broadcast %cst_53 : f32 to vector<8x128xf32>
    %280 = arith.addf %279, %278 : vector<8x128xf32>
    %281 = arith.divf %279, %280 : vector<8x128xf32>
    %282 = vector.extract_strided_slice %269 {offsets = [0, 256], sizes = [8, 128], strides = [1, 1]} : vector<8x512xf32> to vector<8x128xf32>
    %283 = math.tanh %282 : vector<8x128xf32>
    %284 = vector.extract_strided_slice %269 {offsets = [0, 384], sizes = [8, 128], strides = [1, 1]} : vector<8x512xf32> to vector<8x128xf32>
    %285 = arith.negf %284 : vector<8x128xf32>
    %286 = math.exp %285 : vector<8x128xf32>
    %cst_54 = arith.constant 1.000000e+00 : f32
    %287 = vector.broadcast %cst_54 : f32 to vector<8x128xf32>
    %288 = arith.addf %287, %286 : vector<8x128xf32>
    %289 = arith.divf %287, %288 : vector<8x128xf32>
    %290 = arith.mulf %281, %236 : vector<8x128xf32>
    %291 = arith.mulf %275, %283 : vector<8x128xf32>
    %292 = arith.addf %290, %291 : vector<8x128xf32>
    %293 = math.tanh %292 : vector<8x128xf32>
    %294 = arith.mulf %289, %293 : vector<8x128xf32>
    %295 = vector.extract_strided_slice %5 {offsets = [40, 0], sizes = [8, 512], strides = [1, 1]} : vector<64x512xf32> to vector<8x512xf32>
    %cst_55 = arith.constant dense<0.000000e+00> : vector<8x512xf32>
    %296 = tpu.matmul %266, %6, %cst_55 {dimension_numbers = #tpu.dot_dimension_numbers<[1], [0], [0], [1], [0, 0, 1, 1], [], []>} : vector<8x128xf32>, vector<128x512xf32>, vector<8x512xf32> -> vector<8x512xf32>
    %297 = arith.addf %295, %296 : vector<8x512xf32>
    %298 = vector.extract_strided_slice %297 {offsets = [0, 0], sizes = [8, 128], strides = [1, 1]} : vector<8x512xf32> to vector<8x128xf32>
    %299 = arith.negf %298 : vector<8x128xf32>
    %300 = math.exp %299 : vector<8x128xf32>
    %cst_56 = arith.constant 1.000000e+00 : f32
    %301 = vector.broadcast %cst_56 : f32 to vector<8x128xf32>
    %302 = arith.addf %301, %300 : vector<8x128xf32>
    %303 = arith.divf %301, %302 : vector<8x128xf32>
    %304 = vector.extract_strided_slice %297 {offsets = [0, 128], sizes = [8, 128], strides = [1, 1]} : vector<8x512xf32> to vector<8x128xf32>
    %305 = arith.negf %304 : vector<8x128xf32>
    %306 = math.exp %305 : vector<8x128xf32>
    %cst_57 = arith.constant 1.000000e+00 : f32
    %307 = vector.broadcast %cst_57 : f32 to vector<8x128xf32>
    %308 = arith.addf %307, %306 : vector<8x128xf32>
    %309 = arith.divf %307, %308 : vector<8x128xf32>
    %310 = vector.extract_strided_slice %297 {offsets = [0, 256], sizes = [8, 128], strides = [1, 1]} : vector<8x512xf32> to vector<8x128xf32>
    %311 = math.tanh %310 : vector<8x128xf32>
    %312 = vector.extract_strided_slice %297 {offsets = [0, 384], sizes = [8, 128], strides = [1, 1]} : vector<8x512xf32> to vector<8x128xf32>
    %313 = arith.negf %312 : vector<8x128xf32>
    %314 = math.exp %313 : vector<8x128xf32>
    %cst_58 = arith.constant 1.000000e+00 : f32
    %315 = vector.broadcast %cst_58 : f32 to vector<8x128xf32>
    %316 = arith.addf %315, %314 : vector<8x128xf32>
    %317 = arith.divf %315, %316 : vector<8x128xf32>
    %318 = arith.mulf %309, %264 : vector<8x128xf32>
    %319 = arith.mulf %303, %311 : vector<8x128xf32>
    %320 = arith.addf %318, %319 : vector<8x128xf32>
    %321 = math.tanh %320 : vector<8x128xf32>
    %322 = arith.mulf %317, %321 : vector<8x128xf32>
    %323 = tpu.concatenate %322, %294 in 1 : vector<8x128xf32>, vector<8x128xf32> -> vector<8x256xf32>
    %cst_59 = arith.constant dense<0.000000e+00> : vector<8x512xf32>
    %324 = tpu.matmul %323, %7, %cst_59 {dimension_numbers = #tpu.dot_dimension_numbers<[1], [0], [0], [1], [0, 0, 1, 1], [], []>} : vector<8x256xf32>, vector<256x512xf32>, vector<8x512xf32> -> vector<8x512xf32>
    %325 = arith.addf %324, %10 : vector<8x512xf32>
    %326 = vector.extract_strided_slice %325 {offsets = [0, 0], sizes = [8, 128], strides = [1, 1]} : vector<8x512xf32> to vector<8x128xf32>
    %327 = arith.negf %326 : vector<8x128xf32>
    %328 = math.exp %327 : vector<8x128xf32>
    %cst_60 = arith.constant 1.000000e+00 : f32
    %329 = vector.broadcast %cst_60 : f32 to vector<8x128xf32>
    %330 = arith.addf %329, %328 : vector<8x128xf32>
    %331 = arith.divf %329, %330 : vector<8x128xf32>
    %332 = vector.extract_strided_slice %325 {offsets = [0, 128], sizes = [8, 128], strides = [1, 1]} : vector<8x512xf32> to vector<8x128xf32>
    %333 = arith.negf %332 : vector<8x128xf32>
    %334 = math.exp %333 : vector<8x128xf32>
    %cst_61 = arith.constant 1.000000e+00 : f32
    %335 = vector.broadcast %cst_61 : f32 to vector<8x128xf32>
    %336 = arith.addf %335, %334 : vector<8x128xf32>
    %337 = arith.divf %335, %336 : vector<8x128xf32>
    %338 = vector.extract_strided_slice %325 {offsets = [0, 256], sizes = [8, 128], strides = [1, 1]} : vector<8x512xf32> to vector<8x128xf32>
    %339 = math.tanh %338 : vector<8x128xf32>
    %340 = vector.extract_strided_slice %325 {offsets = [0, 384], sizes = [8, 128], strides = [1, 1]} : vector<8x512xf32> to vector<8x128xf32>
    %341 = arith.negf %340 : vector<8x128xf32>
    %342 = math.exp %341 : vector<8x128xf32>
    %cst_62 = arith.constant 1.000000e+00 : f32
    %343 = vector.broadcast %cst_62 : f32 to vector<8x128xf32>
    %344 = arith.addf %343, %342 : vector<8x128xf32>
    %345 = arith.divf %343, %344 : vector<8x128xf32>
    %346 = arith.mulf %337, %292 : vector<8x128xf32>
    %347 = arith.mulf %331, %339 : vector<8x128xf32>
    %348 = arith.addf %346, %347 : vector<8x128xf32>
    %349 = math.tanh %348 : vector<8x128xf32>
    %350 = arith.mulf %345, %349 : vector<8x128xf32>
    %351 = vector.extract_strided_slice %5 {offsets = [48, 0], sizes = [8, 512], strides = [1, 1]} : vector<64x512xf32> to vector<8x512xf32>
    %cst_63 = arith.constant dense<0.000000e+00> : vector<8x512xf32>
    %352 = tpu.matmul %322, %6, %cst_63 {dimension_numbers = #tpu.dot_dimension_numbers<[1], [0], [0], [1], [0, 0, 1, 1], [], []>} : vector<8x128xf32>, vector<128x512xf32>, vector<8x512xf32> -> vector<8x512xf32>
    %353 = arith.addf %351, %352 : vector<8x512xf32>
    %354 = vector.extract_strided_slice %353 {offsets = [0, 0], sizes = [8, 128], strides = [1, 1]} : vector<8x512xf32> to vector<8x128xf32>
    %355 = arith.negf %354 : vector<8x128xf32>
    %356 = math.exp %355 : vector<8x128xf32>
    %cst_64 = arith.constant 1.000000e+00 : f32
    %357 = vector.broadcast %cst_64 : f32 to vector<8x128xf32>
    %358 = arith.addf %357, %356 : vector<8x128xf32>
    %359 = arith.divf %357, %358 : vector<8x128xf32>
    %360 = vector.extract_strided_slice %353 {offsets = [0, 128], sizes = [8, 128], strides = [1, 1]} : vector<8x512xf32> to vector<8x128xf32>
    %361 = arith.negf %360 : vector<8x128xf32>
    %362 = math.exp %361 : vector<8x128xf32>
    %cst_65 = arith.constant 1.000000e+00 : f32
    %363 = vector.broadcast %cst_65 : f32 to vector<8x128xf32>
    %364 = arith.addf %363, %362 : vector<8x128xf32>
    %365 = arith.divf %363, %364 : vector<8x128xf32>
    %366 = vector.extract_strided_slice %353 {offsets = [0, 256], sizes = [8, 128], strides = [1, 1]} : vector<8x512xf32> to vector<8x128xf32>
    %367 = math.tanh %366 : vector<8x128xf32>
    %368 = vector.extract_strided_slice %353 {offsets = [0, 384], sizes = [8, 128], strides = [1, 1]} : vector<8x512xf32> to vector<8x128xf32>
    %369 = arith.negf %368 : vector<8x128xf32>
    %370 = math.exp %369 : vector<8x128xf32>
    %cst_66 = arith.constant 1.000000e+00 : f32
    %371 = vector.broadcast %cst_66 : f32 to vector<8x128xf32>
    %372 = arith.addf %371, %370 : vector<8x128xf32>
    %373 = arith.divf %371, %372 : vector<8x128xf32>
    %374 = arith.mulf %365, %320 : vector<8x128xf32>
    %375 = arith.mulf %359, %367 : vector<8x128xf32>
    %376 = arith.addf %374, %375 : vector<8x128xf32>
    %377 = math.tanh %376 : vector<8x128xf32>
    %378 = arith.mulf %373, %377 : vector<8x128xf32>
    %379 = tpu.concatenate %378, %350 in 1 : vector<8x128xf32>, vector<8x128xf32> -> vector<8x256xf32>
    %cst_67 = arith.constant dense<0.000000e+00> : vector<8x512xf32>
    %380 = tpu.matmul %379, %7, %cst_67 {dimension_numbers = #tpu.dot_dimension_numbers<[1], [0], [0], [1], [0, 0, 1, 1], [], []>} : vector<8x256xf32>, vector<256x512xf32>, vector<8x512xf32> -> vector<8x512xf32>
    %381 = arith.addf %380, %10 : vector<8x512xf32>
    %382 = vector.extract_strided_slice %381 {offsets = [0, 0], sizes = [8, 128], strides = [1, 1]} : vector<8x512xf32> to vector<8x128xf32>
    %383 = arith.negf %382 : vector<8x128xf32>
    %384 = math.exp %383 : vector<8x128xf32>
    %cst_68 = arith.constant 1.000000e+00 : f32
    %385 = vector.broadcast %cst_68 : f32 to vector<8x128xf32>
    %386 = arith.addf %385, %384 : vector<8x128xf32>
    %387 = arith.divf %385, %386 : vector<8x128xf32>
    %388 = vector.extract_strided_slice %381 {offsets = [0, 128], sizes = [8, 128], strides = [1, 1]} : vector<8x512xf32> to vector<8x128xf32>
    %389 = arith.negf %388 : vector<8x128xf32>
    %390 = math.exp %389 : vector<8x128xf32>
    %cst_69 = arith.constant 1.000000e+00 : f32
    %391 = vector.broadcast %cst_69 : f32 to vector<8x128xf32>
    %392 = arith.addf %391, %390 : vector<8x128xf32>
    %393 = arith.divf %391, %392 : vector<8x128xf32>
    %394 = vector.extract_strided_slice %381 {offsets = [0, 256], sizes = [8, 128], strides = [1, 1]} : vector<8x512xf32> to vector<8x128xf32>
    %395 = math.tanh %394 : vector<8x128xf32>
    %396 = vector.extract_strided_slice %381 {offsets = [0, 384], sizes = [8, 128], strides = [1, 1]} : vector<8x512xf32> to vector<8x128xf32>
    %397 = arith.negf %396 : vector<8x128xf32>
    %398 = math.exp %397 : vector<8x128xf32>
    %cst_70 = arith.constant 1.000000e+00 : f32
    %399 = vector.broadcast %cst_70 : f32 to vector<8x128xf32>
    %400 = arith.addf %399, %398 : vector<8x128xf32>
    %401 = arith.divf %399, %400 : vector<8x128xf32>
    %402 = arith.mulf %393, %348 : vector<8x128xf32>
    %403 = arith.mulf %387, %395 : vector<8x128xf32>
    %404 = arith.addf %402, %403 : vector<8x128xf32>
    %405 = math.tanh %404 : vector<8x128xf32>
    %406 = arith.mulf %401, %405 : vector<8x128xf32>
    %407 = vector.extract_strided_slice %5 {offsets = [56, 0], sizes = [8, 512], strides = [1, 1]} : vector<64x512xf32> to vector<8x512xf32>
    %cst_71 = arith.constant dense<0.000000e+00> : vector<8x512xf32>
    %408 = tpu.matmul %378, %6, %cst_71 {dimension_numbers = #tpu.dot_dimension_numbers<[1], [0], [0], [1], [0, 0, 1, 1], [], []>} : vector<8x128xf32>, vector<128x512xf32>, vector<8x512xf32> -> vector<8x512xf32>
    %409 = arith.addf %407, %408 : vector<8x512xf32>
    %410 = vector.extract_strided_slice %409 {offsets = [0, 0], sizes = [8, 128], strides = [1, 1]} : vector<8x512xf32> to vector<8x128xf32>
    %411 = arith.negf %410 : vector<8x128xf32>
    %412 = math.exp %411 : vector<8x128xf32>
    %cst_72 = arith.constant 1.000000e+00 : f32
    %413 = vector.broadcast %cst_72 : f32 to vector<8x128xf32>
    %414 = arith.addf %413, %412 : vector<8x128xf32>
    %415 = arith.divf %413, %414 : vector<8x128xf32>
    %416 = vector.extract_strided_slice %409 {offsets = [0, 128], sizes = [8, 128], strides = [1, 1]} : vector<8x512xf32> to vector<8x128xf32>
    %417 = arith.negf %416 : vector<8x128xf32>
    %418 = math.exp %417 : vector<8x128xf32>
    %cst_73 = arith.constant 1.000000e+00 : f32
    %419 = vector.broadcast %cst_73 : f32 to vector<8x128xf32>
    %420 = arith.addf %419, %418 : vector<8x128xf32>
    %421 = arith.divf %419, %420 : vector<8x128xf32>
    %422 = vector.extract_strided_slice %409 {offsets = [0, 256], sizes = [8, 128], strides = [1, 1]} : vector<8x512xf32> to vector<8x128xf32>
    %423 = math.tanh %422 : vector<8x128xf32>
    %424 = vector.extract_strided_slice %409 {offsets = [0, 384], sizes = [8, 128], strides = [1, 1]} : vector<8x512xf32> to vector<8x128xf32>
    %425 = arith.negf %424 : vector<8x128xf32>
    %426 = math.exp %425 : vector<8x128xf32>
    %cst_74 = arith.constant 1.000000e+00 : f32
    %427 = vector.broadcast %cst_74 : f32 to vector<8x128xf32>
    %428 = arith.addf %427, %426 : vector<8x128xf32>
    %429 = arith.divf %427, %428 : vector<8x128xf32>
    %430 = arith.mulf %421, %376 : vector<8x128xf32>
    %431 = arith.mulf %415, %423 : vector<8x128xf32>
    %432 = arith.addf %430, %431 : vector<8x128xf32>
    %433 = math.tanh %432 : vector<8x128xf32>
    %434 = arith.mulf %429, %433 : vector<8x128xf32>
    %435 = tpu.concatenate %434, %406 in 1 : vector<8x128xf32>, vector<8x128xf32> -> vector<8x256xf32>
    %cst_75 = arith.constant dense<0.000000e+00> : vector<8x512xf32>
    %436 = tpu.matmul %435, %7, %cst_75 {dimension_numbers = #tpu.dot_dimension_numbers<[1], [0], [0], [1], [0, 0, 1, 1], [], []>} : vector<8x256xf32>, vector<256x512xf32>, vector<8x512xf32> -> vector<8x512xf32>
    %437 = arith.addf %436, %10 : vector<8x512xf32>
    %438 = vector.extract_strided_slice %437 {offsets = [0, 0], sizes = [8, 128], strides = [1, 1]} : vector<8x512xf32> to vector<8x128xf32>
    %439 = arith.negf %438 : vector<8x128xf32>
    %440 = math.exp %439 : vector<8x128xf32>
    %cst_76 = arith.constant 1.000000e+00 : f32
    %441 = vector.broadcast %cst_76 : f32 to vector<8x128xf32>
    %442 = arith.addf %441, %440 : vector<8x128xf32>
    %443 = arith.divf %441, %442 : vector<8x128xf32>
    %444 = vector.extract_strided_slice %437 {offsets = [0, 128], sizes = [8, 128], strides = [1, 1]} : vector<8x512xf32> to vector<8x128xf32>
    %445 = arith.negf %444 : vector<8x128xf32>
    %446 = math.exp %445 : vector<8x128xf32>
    %cst_77 = arith.constant 1.000000e+00 : f32
    %447 = vector.broadcast %cst_77 : f32 to vector<8x128xf32>
    %448 = arith.addf %447, %446 : vector<8x128xf32>
    %449 = arith.divf %447, %448 : vector<8x128xf32>
    %450 = vector.extract_strided_slice %437 {offsets = [0, 256], sizes = [8, 128], strides = [1, 1]} : vector<8x512xf32> to vector<8x128xf32>
    %451 = math.tanh %450 : vector<8x128xf32>
    %452 = vector.extract_strided_slice %437 {offsets = [0, 384], sizes = [8, 128], strides = [1, 1]} : vector<8x512xf32> to vector<8x128xf32>
    %453 = arith.negf %452 : vector<8x128xf32>
    %454 = math.exp %453 : vector<8x128xf32>
    %cst_78 = arith.constant 1.000000e+00 : f32
    %455 = vector.broadcast %cst_78 : f32 to vector<8x128xf32>
    %456 = arith.addf %455, %454 : vector<8x128xf32>
    %457 = arith.divf %455, %456 : vector<8x128xf32>
    %458 = arith.mulf %449, %404 : vector<8x128xf32>
    %459 = arith.mulf %443, %451 : vector<8x128xf32>
    %460 = arith.addf %458, %459 : vector<8x128xf32>
    %461 = math.tanh %460 : vector<8x128xf32>
    %462 = arith.mulf %457, %461 : vector<8x128xf32>
    %c0_79 = arith.constant 0 : index
    %c0_80 = arith.constant 0 : index
    %463 = vector.load %arg7[%c0_79, %c0_80] : memref<8x128xf32, #tpu.memory_space<vmem>>, vector<8x128xf32>
    tpu.vector_store %arg7[%c0_79, %c0_80], %462 {strides = array<i32>} : memref<8x128xf32, #tpu.memory_space<vmem>>, vector<8x128xf32>,
    return
  }
  func.func @transform_0(%arg0: i32) -> (i32, i32) {
    %c0_i32 = arith.constant 0 : i32
    %c0_i32_0 = arith.constant 0 : i32
    %c0_i32_1 = arith.constant 0 : i32
    return %c0_i32, %c0_i32_0 : i32, i32
  }
  func.func @transform_1(%arg0: i32) -> (i32, i32) {
    %c0_i32 = arith.constant 0 : i32
    %c0_i32_0 = arith.constant 0 : i32
    %c0_i32_1 = arith.constant 0 : i32
    return %c0_i32, %c0_i32_0 : i32, i32
  }
  func.func @transform_2(%arg0: i32) -> (i32, i32) {
    %c0_i32 = arith.constant 0 : i32
    %c0_i32_0 = arith.constant 0 : i32
    %c0_i32_1 = arith.constant 0 : i32
    return %c0_i32, %c0_i32_0 : i32, i32
  }
  func.func @transform_3(%arg0: i32) -> (i32, i32) {
    %c0_i32 = arith.constant 0 : i32
    %c0_i32_0 = arith.constant 0 : i32
    %c0_i32_1 = arith.constant 0 : i32
    return %c0_i32, %c0_i32_0 : i32, i32
  }
  func.func @transform_4(%arg0: i32) -> (i32, i32) {
    %c0_i32 = arith.constant 0 : i32
    %c0_i32_0 = arith.constant 0 : i32
    %c0_i32_1 = arith.constant 0 : i32
    return %c0_i32, %c0_i32_0 : i32, i32
  }
  func.func @transform_5(%arg0: i32) -> (i32, i32) {
    %c0_i32 = arith.constant 0 : i32
    %c0_i32_0 = arith.constant 0 : i32
    %c0_i32_1 = arith.constant 0 : i32
    return %c0_i32, %c0_i32_0 : i32, i32
  }
  func.func @transform_6(%arg0: i32) -> (i32, i32) {
    %c0_i32 = arith.constant 0 : i32
    %c0_i32_0 = arith.constant 0 : i32
    %c0_i32_1 = arith.constant 0 : i32
    return %c0_i32, %c0_i32_0 : i32, i32
  }
}

</mosaic_0001>

<llo_original>
// kernel: tpu_custom_call.1
$region0: #{tpu_custom_call.1}
  #allocation0 [shape = 'u32[]', space=smem, size = 0x4, offset = 0x4, fixed_abs, tag = 'smem constant byte address 0x4 - core index']
  #allocation1 [shape = 'u32[144,128]{1,0:T(1,128)}', space=vmem, size = 0x12000, scoped, tag = 'internal scratch']
  %s0 = inlined_call_operand.vmem [shape: f32[64,9], index: 0, kind: input, shape index: {}]
  %s1 = inlined_call_operand.vmem [shape: f32[9,512], index: 1, kind: input, shape index: {}]
  %s2 = inlined_call_operand.hbm [shape: f32[128,512], index: 2, kind: input, shape index: {}]
  %s3 = inlined_call_operand.vmem [shape: f32[1,512], index: 3, kind: input, shape index: {}]
  %s4 = inlined_call_operand.hbm [shape: f32[256,512], index: 4, kind: input, shape index: {}]
  %s5 = inlined_call_operand.vmem [shape: f32[1,512], index: 5, kind: input, shape index: {}]
  %s6 = inlined_call_operand.hbm [shape: f32[8,128], index: 6, kind: output, shape index: {}]
  %s7 = sld [smem:[#allocation0]]
  $region42: #{tpu_custom_call.1} parent=0
    _
  %s9 = ssub.s32 1, %s7
  %s10 = scalar_select 0, %s9, %s7
  $region1: #{tpu_custom_call.1} parent=0
    #allocation2 [shape = 'u8[262144]{0}', space=vmem, size = 0x40000, scoped, tag = 'input window, operand 2, single buffered']
    #allocation3 [shape = 's32[1]{0}', space=sflag, size = 0x4, scoped, tag = 'scoped memory for tpu_custom_call.1']
    #allocation4 [shape = 's32[1]{0}', space=sflag, size = 0x4, scoped, tag = 'scoped memory for tpu_custom_call.1']
    #allocation5 [shape = 'u8[524288]{0}', space=vmem, size = 0x80000, scoped, tag = 'input window, operand 4, single buffered']
    #allocation6 [shape = 's32[1]{0}', space=sflag, size = 0x4, scoped, tag = 'scoped memory for tpu_custom_call.1']
    #allocation7 [shape = 'u8[4096]{0}', space=vmem, size = 0x1000, scoped, tag = 'output window, operand 0, single buffered']
    %11 = vsyncpa [#allocation3], 0
    %12 = vsyncpa [#allocation6], 0
    %13 = vsyncpa [#allocation4], 0
    // Predicated region
    $region2: #{tpu_custom_call.1} parent=1 // pred_check
      _
    $region3: #{tpu_custom_call.1} parent=1 // pred_check_branch
      %15 = sbr.rel (0) target = $region5
    $region4: #{tpu_custom_call.1} parent=1 // pred_region
      _
    $region5: #{tpu_custom_call.1} parent=1 // pred_fallthru
      _
    // Predicated region
    $region6: #{tpu_custom_call.1} parent=1 // pred_check
      _
    $region7: #{tpu_custom_call.1} parent=1 // pred_check_branch
      %17 = sbr.rel (0) target = $region9
    $region8: #{tpu_custom_call.1} parent=1 // pred_region
      _
    $region9: #{tpu_custom_call.1} parent=1 // pred_fallthru
      _
    // Predicated region
    $region10: #{tpu_custom_call.1} parent=1 // pred_check
      _
    $region11: #{tpu_custom_call.1} parent=1 // pred_check_branch
      %19 = sbr.rel (0) target = $region13
    $region12: #{tpu_custom_call.1} parent=1 // pred_region
      %s21 = ssub.s32 8192, 8192
      %22 = vsyncadd [#allocation3], %s21
      %s23 = sshll.u32 [#allocation2], 4
      %s24 = int_to_ptr.vmem [resolvable:$true] %s23
      %29 = dma.hbm_to_vmem [thread:$0]  %s2, 8192, %s24, [#allocation3], 512, 512, 32
    $region13: #{tpu_custom_call.1} parent=1 // pred_fallthru
      _
    // Predicated region
    $region14: #{tpu_custom_call.1} parent=1 // pred_check
      _
    $region15: #{tpu_custom_call.1} parent=1 // pred_check_branch
      %31 = sbr.rel (0) target = $region17
    $region16: #{tpu_custom_call.1} parent=1 // pred_region
      _
    $region17: #{tpu_custom_call.1} parent=1 // pred_fallthru
      _
    // Predicated region
    $region18: #{tpu_custom_call.1} parent=1 // pred_check
      _
    $region19: #{tpu_custom_call.1} parent=1 // pred_check_branch
      %33 = sbr.rel (0) target = $region21
    $region20: #{tpu_custom_call.1} parent=1 // pred_region
      %s35 = ssub.s32 16384, 16384
      %36 = vsyncadd [#allocation6], %s35
      %s37 = sshll.u32 [#allocation5], 4
      %s38 = int_to_ptr.vmem [resolvable:$true] %s37
      %43 = dma.hbm_to_vmem [thread:$0]  %s4, 16384, %s38, [#allocation6], 512, 512, 32
    $region21: #{tpu_custom_call.1} parent=1 // pred_fallthru
      _
    // Predicated region
    $region22: #{tpu_custom_call.1} parent=1 // pred_check
      _
    $region23: #{tpu_custom_call.1} parent=1 // pred_check_branch
      %45 = sbr.rel (0) target = $region25
    $region24: #{tpu_custom_call.1} parent=1 // pred_region
      _
    $region25: #{tpu_custom_call.1} parent=1 // pred_fallthru
      _
    // Predicated region
    $region26: #{tpu_custom_call.1} parent=1 // pred_check
      _
    $region27: #{tpu_custom_call.1} parent=1 // pred_check_branch
      %47 = sbr.rel (0) target = $region29
    $region28: #{tpu_custom_call.1} parent=1 // pred_region
      %48 = dma.done [#allocation3], 8192
    $region29: #{tpu_custom_call.1} parent=1 // pred_fallthru
      _
    // Predicated region
    $region30: #{tpu_custom_call.1} parent=1 // pred_check
      _
    $region31: #{tpu_custom_call.1} parent=1 // pred_check_branch
      %50 = sbr.rel (0) target = $region33
    $region32: #{tpu_custom_call.1} parent=1 // pred_region
      %51 = dma.done [#allocation6], 16384
    $region33: #{tpu_custom_call.1} parent=1 // pred_fallthru
      _
    %v52 = vld [vmem:[%s0] sm:$0xff]
    %v53 = vld [vmem:[%s0 + $0x8] sm:$0xff]
    %v54 = vld [vmem:[%s0 + $0x10] sm:$0xff]
    %v55 = vld [vmem:[%s0 + $0x18] sm:$0xff]
    %v56 = vld [vmem:[%s0 + $0x20] sm:$0xff]
    %v57 = vld [vmem:[%s0 + $0x28] sm:$0xff]
    %v58 = vld [vmem:[%s0 + $0x30] sm:$0xff]
    %v59 = vld [vmem:[%s0 + $0x38] sm:$0xff]
    %v60 = vld [vmem:[%s1] sm:$0xff]
    %v61 = vld [vmem:[%s1 + $0x8] sm:$0xff]
    %v62 = vld [vmem:[%s1 + $0x10] sm:$0xff]
    %v63 = vld [vmem:[%s1 + $0x18] sm:$0xff]
    %v64 = vld [vmem:[%s1 + $0x20] sm:$0x1]
    %v65 = vld [vmem:[%s1 + $0x28] sm:$0x1]
    %v66 = vld [vmem:[%s1 + $0x30] sm:$0x1]
    %v67 = vld [vmem:[%s1 + $0x38] sm:$0x1]
    %v68 = vld [vmem:[%s3] sm:$0xf]
    %v70 = vlaneseq
    %v71 = vshrl.u32 %v70, 7
    %v72 = vsub.s32 0, %v71
    %v73 = vrot.slane %v68, %v72
    %v74 = vlaneseq
    %v75 = vshrl.u32 %v74, 7
    %v76 = vsub.s32 1, %v75
    %v77 = vrot.slane %v68, %v76
    %v78 = vlaneseq
    %v79 = vshrl.u32 %v78, 7
    %v80 = vsub.s32 2, %v79
    %v81 = vrot.slane %v68, %v80
    %v82 = vlaneseq
    %v83 = vshrl.u32 %v82, 7
    %v84 = vsub.s32 3, %v83
    %v85 = vrot.slane %v68, %v84
    %vm90 = vcmask 72704
    %v92 = vsel %vm90, %v52, 0
    %v95 = vsel %vm90, %v53, 0
    %v98 = vsel %vm90, %v54, 0
    %v101 = vsel %vm90, %v55, 0
    %v104 = vsel %vm90, %v56, 0
    %v107 = vsel %vm90, %v57, 0
    %v110 = vsel %vm90, %v58, 0
    %v113 = vsel %vm90, %v59, 0
    %vm115 = vcmask 1040384
    %v117 = vsel %vm115, %v64, 0
    %v120 = vsel %vm115, %v65, 0
    %v123 = vsel %vm115, %v66, 0
    %v126 = vsel %vm115, %v67, 0
    %128 = vmatprep.subr.mxu0 %v61
    %129 = vmatpush1.msra.mxu0 %v60
    %130 = vmatprep.subr.mxu0 %v120
    %131 = vmatpush1.msra.mxu0 %v117
    %132 = vmatprep.subr.mxu0 0.0
    %133 = vmatpush1.msra.mxu0 0.0
    %134 = vmatprep.subr.mxu0 0.0
    %135 = vmatpush1.msra.mxu0 0.0
    %136 = vmatprep.subr.mxu0 0.0
    %137 = vmatpush1.msra.mxu0 0.0
    %138 = vmatprep.subr.mxu0 0.0
    %139 = vmatpush1.msra.mxu0 0.0
    %140 = vmatprep.subr.mxu0 0.0
    %141 = vmatpush1.msra.mxu0 0.0
    %142 = vmatprep.subr.mxu0 0.0
    %143 = vmatpush1.msra.mxu0 0.0
    %144 = vmatprep.subr.mxu0 0.0
    %145 = vmatpush1.msra.mxu0 0.0
    %146 = vmatprep.subr.mxu0 0.0
    %147 = vmatpush1.msra.mxu0 0.0
    %148 = vmatprep.subr.mxu0 0.0
    %149 = vmatpush1.msra.mxu0 0.0
    %150 = vmatprep.subr.mxu0 0.0
    %151 = vmatpush1.msra.mxu0 0.0
    %152 = vmatprep.subr.mxu0 0.0
    %153 = vmatpush1.msra.mxu0 0.0
    %154 = vmatprep.subr.mxu0 0.0
    %155 = vmatpush1.msra.mxu0 0.0
    %156 = vmatprep.subr.mxu0 0.0
    %157 = vmatpush1.msra.mxu0 0.0
    %158 = vmatprep.subr.mxu0 0.0
    %159 = vmatpush1.msra.mxu0 0.0
    %160 = vmatprep.subr.mxu0 0.0
    %161 = vmatpush1.msra.mxu0 0.0
    %162 = vmatprep.subr.mxu0 0.0
    %163 = vmatpush1.msra.mxu0 0.0
    %164 = vmatprep.subr.mxu0 0.0
    %165 = vmatpush1.msra.mxu0 0.0
    %166 = vmatprep.subr.mxu0 0.0
    %167 = vmatpush1.msra.mxu0 0.0
    %168 = vmatprep.subr.mxu0 0.0
    %169 = vmatpush1.msra.mxu0 0.0
    %170 = vmatprep.subr.mxu0 0.0
    %171 = vmatpush1.msra.mxu0 0.0
    %172 = vmatprep.subr.mxu0 0.0
    %173 = vmatpush1.msra.mxu0 0.0
    %174 = vmatprep.subr.mxu0 0.0
    %175 = vmatpush1.msra.mxu0 0.0
    %176 = vmatprep.subr.mxu0 0.0
    %177 = vmatpush1.msra.mxu0 0.0
    %178 = vmatprep.subr.mxu0 0.0
    %179 = vmatpush1.msra.mxu0 0.0
    %180 = vmatprep.subr.mxu0 0.0
    %181 = vmatpush1.msra.mxu0 0.0
    %182 = vmatprep.subr.mxu0 0.0
    %183 = vmatpush1.msra.mxu0 0.0
    %184 = vmatprep.subr.mxu0 0.0
    %185 = vmatpush1.msra.mxu0 0.0
    %186 = vmatprep.subr.mxu0 0.0
    %187 = vmatpush1.msra.mxu0 0.0
    %188 = vmatprep.subr.mxu0 0.0
    %189 = vmatpush1.msra.mxu0 0.0
    %190 = vmatprep.subr.mxu0 0.0
    %191 = vmatpush1.msra.mxu0 0.0
    %192 = vmatprep.mubr.f32.mxu0 0.0
    %193 = vmatmul.mubr.f32.gmra.mrb[0].mxu0 %v92
    %v194 = vpop.f32.mrb[0].mxu0
    %v195 = vadd.f32 %v73, %v194
    %v196 = vpop.f32.mrb[0].mxu0
    %v197 = vadd.f32 %v77, %v196
    %198 = vmatprep.mubr.f32.mxu0 0.0
    %199 = vmatmul.mubr.f32.gmra.mrb[0].mxu0 %v95
    %v200 = vpop.f32.mrb[0].mxu0
    %v201 = vadd.f32 %v73, %v200
    %v202 = vpop.f32.mrb[0].mxu0
    %v203 = vadd.f32 %v77, %v202
    %204 = vmatprep.mubr.f32.mxu0 0.0
    %205 = vmatmul.mubr.f32.gmra.mrb[0].mxu0 %v98
    %v206 = vpop.f32.mrb[0].mxu0
    %v207 = vadd.f32 %v73, %v206
    %v208 = vpop.f32.mrb[0].mxu0
    %v209 = vadd.f32 %v77, %v208
    %210 = vmatprep.mubr.f32.mxu0 0.0
    %211 = vmatmul.mubr.f32.gmra.mrb[0].mxu0 %v101
    %v212 = vpop.f32.mrb[0].mxu0
    %v213 = vadd.f32 %v73, %v212
    %v214 = vpop.f32.mrb[0].mxu0
    %v215 = vadd.f32 %v77, %v214
    %216 = vmatprep.mubr.f32.mxu0 0.0
    %217 = vmatmul.mubr.f32.gmra.mrb[0].mxu0 %v104
    %v218 = vpop.f32.mrb[0].mxu0
    %v219 = vadd.f32 %v73, %v218
    %v220 = vpop.f32.mrb[0].mxu0
    %v221 = vadd.f32 %v77, %v220
    %222 = vmatprep.mubr.f32.mxu0 0.0
    %223 = vmatmul.mubr.f32.gmra.mrb[0].mxu0 %v107
    %v224 = vpop.f32.mrb[0].mxu0
    %v225 = vadd.f32 %v73, %v224
    %v226 = vpop.f32.mrb[0].mxu0
    %v227 = vadd.f32 %v77, %v226
    %228 = vmatprep.mubr.f32.mxu0 0.0
    %229 = vmatmul.mubr.f32.gmra.mrb[0].mxu0 %v110
    %v230 = vpop.f32.mrb[0].mxu0
    %v231 = vadd.f32 %v73, %v230
    %v232 = vpop.f32.mrb[0].mxu0
    %v233 = vadd.f32 %v77, %v232
    %234 = vmatprep.mubr.f32.mxu0 0.0
    %235 = vmatmul.mubr.f32.gmra.mrb[0].mxu0 %v113
    %v236 = vpop.f32.mrb[0].mxu0
    %v237 = vadd.f32 %v73, %v236
    %v238 = vpop.f32.mrb[0].mxu0
    %v239 = vadd.f32 %v77, %v238
    %240 = vdwg.mxu0
    %241 = vmatprep.subr.mxu0 %v63
    %242 = vmatpush1.msra.mxu0 %v62
    %243 = vmatprep.subr.mxu0 %v126
    %244 = vmatpush1.msra.mxu0 %v123
    %245 = vmatprep.subr.mxu0 0.0
    %246 = vmatpush1.msra.mxu0 0.0
    %247 = vmatprep.subr.mxu0 0.0
    %248 = vmatpush1.msra.mxu0 0.0
    %249 = vmatprep.subr.mxu0 0.0
    %250 = vmatpush1.msra.mxu0 0.0
    %251 = vmatprep.subr.mxu0 0.0
    %252 = vmatpush1.msra.mxu0 0.0
    %253 = vmatprep.subr.mxu0 0.0
    %254 = vmatpush1.msra.mxu0 0.0
    %255 = vmatprep.subr.mxu0 0.0
    %256 = vmatpush1.msra.mxu0 0.0
    %257 = vmatprep.subr.mxu0 0.0
    %258 = vmatpush1.msra.mxu0 0.0
    %259 = vmatprep.subr.mxu0 0.0
    %260 = vmatpush1.msra.mxu0 0.0
    %261 = vmatprep.subr.mxu0 0.0
    %262 = vmatpush1.msra.mxu0 0.0
    %263 = vmatprep.subr.mxu0 0.0
    %264 = vmatpush1.msra.mxu0 0.0
    %265 = vmatprep.subr.mxu0 0.0
    %266 = vmatpush1.msra.mxu0 0.0
    %267 = vmatprep.subr.mxu0 0.0
    %268 = vmatpush1.msra.mxu0 0.0
    %269 = vmatprep.subr.mxu0 0.0
    %270 = vmatpush1.msra.mxu0 0.0
    %271 = vmatprep.subr.mxu0 0.0
    %272 = vmatpush1.msra.mxu0 0.0
    %273 = vmatprep.subr.mxu0 0.0
    %274 = vmatpush1.msra.mxu0 0.0
    %275 = vmatprep.subr.mxu0 0.0
    %276 = vmatpush1.msra.mxu0 0.0
    %277 = vmatprep.subr.mxu0 0.0
    %278 = vmatpush1.msra.mxu0 0.0
    %279 = vmatprep.subr.mxu0 0.0
    %280 = vmatpush1.msra.mxu0 0.0
    %281 = vmatprep.subr.mxu0 0.0
    %282 = vmatpush1.msra.mxu0 0.0
    %283 = vmatprep.subr.mxu0 0.0
    %284 = vmatpush1.msra.mxu0 0.0
    %285 = vmatprep.subr.mxu0 0.0
    %286 = vmatpush1.msra.mxu0 0.0
    %287 = vmatprep.subr.mxu0 0.0
    %288 = vmatpush1.msra.mxu0 0.0
    %289 = vmatprep.subr.mxu0 0.0
    %290 = vmatpush1.msra.mxu0 0.0
    %291 = vmatprep.subr.mxu0 0.0
    %292 = vmatpush1.msra.mxu0 0.0
    %293 = vmatprep.subr.mxu0 0.0
    %294 = vmatpush1.msra.mxu0 0.0
    %295 = vmatprep.subr.mxu0 0.0
    %296 = vmatpush1.msra.mxu0 0.0
    %297 = vmatprep.subr.mxu0 0.0
    %298 = vmatpush1.msra.mxu0 0.0
    %299 = vmatprep.subr.mxu0 0.0
    %300 = vmatpush1.msra.mxu0 0.0
    %301 = vmatprep.subr.mxu0 0.0
    %302 = vmatpush1.msra.mxu0 0.0
    %303 = vmatprep.subr.mxu0 0.0
    %304 = vmatpush1.msra.mxu0 0.0
    %305 = vmatprep.mubr.f32.mxu0 0.0
    %306 = vmatmul.mubr.f32.gmra.mrb[0].mxu0 %v92
    %v307 = vpop.f32.mrb[0].mxu0
    %v308 = vadd.f32 %v81, %v307
    %v309 = vpop.f32.mrb[0].mxu0
    %v310 = vadd.f32 %v85, %v309
    %311 = vmatprep.mubr.f32.mxu0 0.0
    %312 = vmatmul.mubr.f32.gmra.mrb[0].mxu0 %v95
    %v313 = vpop.f32.mrb[0].mxu0
    %v314 = vadd.f32 %v81, %v313
    %v315 = vpop.f32.mrb[0].mxu0
    %v316 = vadd.f32 %v85, %v315
    %317 = vmatprep.mubr.f32.mxu0 0.0
    %318 = vmatmul.mubr.f32.gmra.mrb[0].mxu0 %v98
    %v319 = vpop.f32.mrb[0].mxu0
    %v320 = vadd.f32 %v81, %v319
    %v321 = vpop.f32.mrb[0].mxu0
    %v322 = vadd.f32 %v85, %v321
    %323 = vmatprep.mubr.f32.mxu0 0.0
    %324 = vmatmul.mubr.f32.gmra.mrb[0].mxu0 %v101
    %v325 = vpop.f32.mrb[0].mxu0
    %v326 = vadd.f32 %v81, %v325
    %v327 = vpop.f32.mrb[0].mxu0
    %v328 = vadd.f32 %v85, %v327
    %329 = vmatprep.mubr.f32.mxu0 0.0
    %330 = vmatmul.mubr.f32.gmra.mrb[0].mxu0 %v104
    %v331 = vpop.f32.mrb[0].mxu0
    %v332 = vadd.f32 %v81, %v331
    %v333 = vpop.f32.mrb[0].mxu0
    %v334 = vadd.f32 %v85, %v333
    %335 = vmatprep.mubr.f32.mxu0 0.0
    %336 = vmatmul.mubr.f32.gmra.mrb[0].mxu0 %v107
    %v337 = vpop.f32.mrb[0].mxu0
    %v338 = vadd.f32 %v81, %v337
    %v339 = vpop.f32.mrb[0].mxu0
    %v340 = vadd.f32 %v85, %v339
    %341 = vmatprep.mubr.f32.mxu0 0.0
    %342 = vmatmul.mubr.f32.gmra.mrb[0].mxu0 %v110
    %v343 = vpop.f32.mrb[0].mxu0
    %v344 = vadd.f32 %v81, %v343
    %v345 = vpop.f32.mrb[0].mxu0
    %v346 = vadd.f32 %v85, %v345
    %347 = vmatprep.mubr.f32.mxu0 0.0
    %348 = vmatmul.mubr.f32.gmra.mrb[0].mxu0 %v113
    %v349 = vpop.f32.mrb[0].mxu0
    %v350 = vadd.f32 %v81, %v349
    %v351 = vpop.f32.mrb[0].mxu0
    %v352 = vadd.f32 %v85, %v351
    %353 = vdwg.mxu0
    %v354 = vld [vmem:[#allocation2] sm:$0xff]
    %v355 = vld [vmem:[#allocation2 + $0x8] sm:$0xff]
    %v356 = vld [vmem:[#allocation2 + $0x10] sm:$0xff]
    %v357 = vld [vmem:[#allocation2 + $0x18] sm:$0xff]
    %v358 = vld [vmem:[#allocation2 + $0x20] sm:$0xff]
    %v359 = vld [vmem:[#allocation2 + $0x28] sm:$0xff]
    %v360 = vld [vmem:[#allocation2 + $0x30] sm:$0xff]
    %v361 = vld [vmem:[#allocation2 + $0x38] sm:$0xff]
    %v362 = vld [vmem:[#allocation2 + $0x40] sm:$0xff]
    %v363 = vld [vmem:[#allocation2 + $0x48] sm:$0xff]
    %v364 = vld [vmem:[#allocation2 + $0x50] sm:$0xff]
    %v365 = vld [vmem:[#allocation2 + $0x58] sm:$0xff]
    %v366 = vld [vmem:[#allocation2 + $0x60] sm:$0xff]
    %v367 = vld [vmem:[#allocation2 + $0x68] sm:$0xff]
    %v368 = vld [vmem:[#allocation2 + $0x70] sm:$0xff]
    %v369 = vld [vmem:[#allocation2 + $0x78] sm:$0xff]
    %v370 = vld [vmem:[#allocation2 + $0x80] sm:$0xff]
    %v371 = vld [vmem:[#allocation2 + $0x88] sm:$0xff]
    %v372 = vld [vmem:[#allocation2 + $0x90] sm:$0xff]
    %v373 = vld [vmem:[#allocation2 + $0x98] sm:$0xff]
    %v374 = vld [vmem:[#allocation2 + $0xa0] sm:$0xff]
    %v375 = vld [vmem:[#allocation2 + $0xa8] sm:$0xff]
    %v376 = vld [vmem:[#allocation2 + $0xb0] sm:$0xff]
    %v377 = vld [vmem:[#allocation2 + $0xb8] sm:$0xff]
    %v378 = vld [vmem:[#allocation2 + $0xc0] sm:$0xff]
    %v379 = vld [vmem:[#allocation2 + $0xc8] sm:$0xff]
    %v380 = vld [vmem:[#allocation2 + $0xd0] sm:$0xff]
    %v381 = vld [vmem:[#allocation2 + $0xd8] sm:$0xff]
    %v382 = vld [vmem:[#allocation2 + $0xe0] sm:$0xff]
    %v383 = vld [vmem:[#allocation2 + $0xe8] sm:$0xff]
    %v384 = vld [vmem:[#allocation2 + $0xf0] sm:$0xff]
    %v385 = vld [vmem:[#allocation2 + $0xf8] sm:$0xff]
    %v386 = vld [vmem:[#allocation2 + $0x100] sm:$0xff]
    %v387 = vld [vmem:[#allocation2 + $0x108] sm:$0xff]
    %v388 = vld [vmem:[#allocation2 + $0x110] sm:$0xff]
    %v389 = vld [vmem:[#allocation2 + $0x118] sm:$0xff]
    %v390 = vld [vmem:[#allocation2 + $0x120] sm:$0xff]
    %v391 = vld [vmem:[#allocation2 + $0x128] sm:$0xff]
    %v392 = vld [vmem:[#allocation2 + $0x130] sm:$0xff]
    %v393 = vld [vmem:[#allocation2 + $0x138] sm:$0xff]
    %v394 = vld [vmem:[#allocation2 + $0x140] sm:$0xff]
    %v395 = vld [vmem:[#allocation2 + $0x148] sm:$0xff]
    %v396 = vld [vmem:[#allocation2 + $0x150] sm:$0xff]
    %v397 = vld [vmem:[#allocation2 + $0x158] sm:$0xff]
    %v398 = vld [vmem:[#allocation2 + $0x160] sm:$0xff]
    %v399 = vld [vmem:[#allocation2 + $0x168] sm:$0xff]
    %v400 = vld [vmem:[#allocation2 + $0x170] sm:$0xff]
    %v401 = vld [vmem:[#allocation2 + $0x178] sm:$0xff]
    %v402 = vld [vmem:[#allocation2 + $0x180] sm:$0xff]
    %v403 = vld [vmem:[#allocation2 + $0x188] sm:$0xff]
    %v404 = vld [vmem:[#allocation2 + $0x190] sm:$0xff]
    %v405 = vld [vmem:[#allocation2 + $0x198] sm:$0xff]
    %v406 = vld [vmem:[#allocation2 + $0x1a0] sm:$0xff]
    %v407 = vld [vmem:[#allocation2 + $0x1a8] sm:$0xff]
    %v408 = vld [vmem:[#allocation2 + $0x1b0] sm:$0xff]
    %v409 = vld [vmem:[#allocation2 + $0x1b8] sm:$0xff]
    %v410 = vld [vmem:[#allocation2 + $0x1c0] sm:$0xff]
    %v411 = vld [vmem:[#allocation2 + $0x1c8] sm:$0xff]
    %v412 = vld [vmem:[#allocation2 + $0x1d0] sm:$0xff]
    %v413 = vld [vmem:[#allocation2 + $0x1d8] sm:$0xff]
    %v414 = vld [vmem:[#allocation2 + $0x1e0] sm:$0xff]
    %v415 = vld [vmem:[#allocation2 + $0x1e8] sm:$0xff]
    %v416 = vld [vmem:[#allocation2 + $0x1f0] sm:$0xff]
    %v417 = vld [vmem:[#allocation2 + $0x1f8] sm:$0xff]
    %v418 = vld [vmem:[#allocation5] sm:$0xff]
    %v419 = vld [vmem:[#allocation5 + $0x8] sm:$0xff]
    %v420 = vld [vmem:[#allocation5 + $0x10] sm:$0xff]
    %v421 = vld [vmem:[#allocation5 + $0x18] sm:$0xff]
    %v422 = vld [vmem:[#allocation5 + $0x20] sm:$0xff]
    %v423 = vld [vmem:[#allocation5 + $0x28] sm:$0xff]
    %v424 = vld [vmem:[#allocation5 + $0x30] sm:$0xff]
    %v425 = vld [vmem:[#allocation5 + $0x38] sm:$0xff]
    %v426 = vld [vmem:[#allocation5 + $0x40] sm:$0xff]
    %v427 = vld [vmem:[#allocation5 + $0x48] sm:$0xff]
    %v428 = vld [vmem:[#allocation5 + $0x50] sm:$0xff]
    %v429 = vld [vmem:[#allocation5 + $0x58] sm:$0xff]
    %v430 = vld [vmem:[#allocation5 + $0x60] sm:$0xff]
    %v431 = vld [vmem:[#allocation5 + $0x68] sm:$0xff]
    %v432 = vld [vmem:[#allocation5 + $0x70] sm:$0xff]
    %v433 = vld [vmem:[#allocation5 + $0x78] sm:$0xff]
    %v434 = vld [vmem:[#allocation5 + $0x80] sm:$0xff]
    %v435 = vld [vmem:[#allocation5 + $0x88] sm:$0xff]
    %v436 = vld [vmem:[#allocation5 + $0x90] sm:$0xff]
    %v437 = vld [vmem:[#allocation5 + $0x98] sm:$0xff]
    %v438 = vld [vmem:[#allocation5 + $0xa0] sm:$0xff]
    %v439 = vld [vmem:[#allocation5 + $0xa8] sm:$0xff]
    %v440 = vld [vmem:[#allocation5 + $0xb0] sm:$0xff]
    %v441 = vld [vmem:[#allocation5 + $0xb8] sm:$0xff]
    %v442 = vld [vmem:[#allocation5 + $0xc0] sm:$0xff]
    %v443 = vld [vmem:[#allocation5 + $0xc8] sm:$0xff]
    %v444 = vld [vmem:[#allocation5 + $0xd0] sm:$0xff]
    %v445 = vld [vmem:[#allocation5 + $0xd8] sm:$0xff]
    %v446 = vld [vmem:[#allocation5 + $0xe0] sm:$0xff]
    %v447 = vld [vmem:[#allocation5 + $0xe8] sm:$0xff]
    %v448 = vld [vmem:[#allocation5 + $0xf0] sm:$0xff]
    %v449 = vld [vmem:[#allocation5 + $0xf8] sm:$0xff]
    %v450 = vld [vmem:[#allocation5 + $0x100] sm:$0xff]
    %v451 = vld [vmem:[#allocation5 + $0x108] sm:$0xff]
    %v452 = vld [vmem:[#allocation5 + $0x110] sm:$0xff]
    %v453 = vld [vmem:[#allocation5 + $0x118] sm:$0xff]
    %v454 = vld [vmem:[#allocation5 + $0x120] sm:$0xff]
    %v455 = vld [vmem:[#allocation5 + $0x128] sm:$0xff]
    %v456 = vld [vmem:[#allocation5 + $0x130] sm:$0xff]
    %v457 = vld [vmem:[#allocation5 + $0x138] sm:$0xff]
    %v458 = vld [vmem:[#allocation5 + $0x140] sm:$0xff]
    %v459 = vld [vmem:[#allocation5 + $0x148] sm:$0xff]
    %v460 = vld [vmem:[#allocation5 + $0x150] sm:$0xff]
    %v461 = vld [vmem:[#allocation5 + $0x158] sm:$0xff]
    %v462 = vld [vmem:[#allocation5 + $0x160] sm:$0xff]
    %v463 = vld [vmem:[#allocation5 + $0x168] sm:$0xff]
    %v464 = vld [vmem:[#allocation5 + $0x170] sm:$0xff]
    %v465 = vld [vmem:[#allocation5 + $0x178] sm:$0xff]
    %v466 = vld [vmem:[#allocation5 + $0x180] sm:$0xff]
    %v467 = vld [vmem:[#allocation5 + $0x188] sm:$0xff]
    %v468 = vld [vmem:[#allocation5 + $0x190] sm:$0xff]
    %v469 = vld [vmem:[#allocation5 + $0x198] sm:$0xff]
    %v470 = vld [vmem:[#allocation5 + $0x1a0] sm:$0xff]
    %v471 = vld [vmem:[#allocation5 + $0x1a8] sm:$0xff]
    %v472 = vld [vmem:[#allocation5 + $0x1b0] sm:$0xff]
    %v473 = vld [vmem:[#allocation5 + $0x1b8] sm:$0xff]
    %v474 = vld [vmem:[#allocation5 + $0x1c0] sm:$0xff]
    %v475 = vld [vmem:[#allocation5 + $0x1c8] sm:$0xff]
    %v476 = vld [vmem:[#allocation5 + $0x1d0] sm:$0xff]
    %v477 = vld [vmem:[#allocation5 + $0x1d8] sm:$0xff]
    %v478 = vld [vmem:[#allocation5 + $0x1e0] sm:$0xff]
    %v479 = vld [vmem:[#allocation5 + $0x1e8] sm:$0xff]
    %v480 = vld [vmem:[#allocation5 + $0x1f0] sm:$0xff]
    %v481 = vld [vmem:[#allocation5 + $0x1f8] sm:$0xff]
    %v482 = vld [vmem:[#allocation5 + $0x200] sm:$0xff]
    %v483 = vld [vmem:[#allocation5 + $0x208] sm:$0xff]
    %v484 = vld [vmem:[#allocation5 + $0x210] sm:$0xff]
    %v485 = vld [vmem:[#allocation5 + $0x218] sm:$0xff]
    %v486 = vld [vmem:[#allocation5 + $0x220] sm:$0xff]
    %v487 = vld [vmem:[#allocation5 + $0x228] sm:$0xff]
    %v488 = vld [vmem:[#allocation5 + $0x230] sm:$0xff]
    %v489 = vld [vmem:[#allocation5 + $0x238] sm:$0xff]
    %v490 = vld [vmem:[#allocation5 + $0x240] sm:$0xff]
    %v491 = vld [vmem:[#allocation5 + $0x248] sm:$0xff]
    %v492 = vld [vmem:[#allocation5 + $0x250] sm:$0xff]
    %v493 = vld [vmem:[#allocation5 + $0x258] sm:$0xff]
    %v494 = vld [vmem:[#allocation5 + $0x260] sm:$0xff]
    %v495 = vld [vmem:[#allocation5 + $0x268] sm:$0xff]
    %v496 = vld [vmem:[#allocation5 + $0x270] sm:$0xff]
    %v497 = vld [vmem:[#allocation5 + $0x278] sm:$0xff]
    %v498 = vld [vmem:[#allocation5 + $0x280] sm:$0xff]
    %v499 = vld [vmem:[#allocation5 + $0x288] sm:$0xff]
    %v500 = vld [vmem:[#allocation5 + $0x290] sm:$0xff]
    %v501 = vld [vmem:[#allocation5 + $0x298] sm:$0xff]
    %v502 = vld [vmem:[#allocation5 + $0x2a0] sm:$0xff]
    %v503 = vld [vmem:[#allocation5 + $0x2a8] sm:$0xff]
    %v504 = vld [vmem:[#allocation5 + $0x2b0] sm:$0xff]
    %v505 = vld [vmem:[#allocation5 + $0x2b8] sm:$0xff]
    %v506 = vld [vmem:[#allocation5 + $0x2c0] sm:$0xff]
    %v507 = vld [vmem:[#allocation5 + $0x2c8] sm:$0xff]
    %v508 = vld [vmem:[#allocation5 + $0x2d0] sm:$0xff]
    %v509 = vld [vmem:[#allocation5 + $0x2d8] sm:$0xff]
    %v510 = vld [vmem:[#allocation5 + $0x2e0] sm:$0xff]
    %v511 = vld [vmem:[#allocation5 + $0x2e8] sm:$0xff]
    %v512 = vld [vmem:[#allocation5 + $0x2f0] sm:$0xff]
    %v513 = vld [vmem:[#allocation5 + $0x2f8] sm:$0xff]
    %v514 = vld [vmem:[#allocation5 + $0x300] sm:$0xff]
    %v515 = vld [vmem:[#allocation5 + $0x308] sm:$0xff]
    %v516 = vld [vmem:[#allocation5 + $0x310] sm:$0xff]
    %v517 = vld [vmem:[#allocation5 + $0x318] sm:$0xff]
    %v518 = vld [vmem:[#allocation5 + $0x320] sm:$0xff]
    %v519 = vld [vmem:[#allocation5 + $0x328] sm:$0xff]
    %v520 = vld [vmem:[#allocation5 + $0x330] sm:$0xff]
    %v521 = vld [vmem:[#allocation5 + $0x338] sm:$0xff]
    %v522 = vld [vmem:[#allocation5 + $0x340] sm:$0xff]
    %v523 = vld [vmem:[#allocation5 + $0x348] sm:$0xff]
    %v524 = vld [vmem:[#allocation5 + $0x350] sm:$0xff]
    %v525 = vld [vmem:[#allocation5 + $0x358] sm:$0xff]
    %v526 = vld [vmem:[#allocation5 + $0x360] sm:$0xff]
    %v527 = vld [vmem:[#allocation5 + $0x368] sm:$0xff]
    %v528 = vld [vmem:[#allocation5 + $0x370] sm:$0xff]
    %v529 = vld [vmem:[#allocation5 + $0x378] sm:$0xff]
    %v530 = vld [vmem:[#allocation5 + $0x380] sm:$0xff]
    %v531 = vld [vmem:[#allocation5 + $0x388] sm:$0xff]
    %v532 = vld [vmem:[#allocation5 + $0x390] sm:$0xff]
    %v533 = vld [vmem:[#allocation5 + $0x398] sm:$0xff]
    %v534 = vld [vmem:[#allocation5 + $0x3a0] sm:$0xff]
    %v535 = vld [vmem:[#allocation5 + $0x3a8] sm:$0xff]
    %v536 = vld [vmem:[#allocation5 + $0x3b0] sm:$0xff]
    %v537 = vld [vmem:[#allocation5 + $0x3b8] sm:$0xff]
    %v538 = vld [vmem:[#allocation5 + $0x3c0] sm:$0xff]
    %v539 = vld [vmem:[#allocation5 + $0x3c8] sm:$0xff]
    %v540 = vld [vmem:[#allocation5 + $0x3d0] sm:$0xff]
    %v541 = vld [vmem:[#allocation5 + $0x3d8] sm:$0xff]
    %v542 = vld [vmem:[#allocation5 + $0x3e0] sm:$0xff]
    %v543 = vld [vmem:[#allocation5 + $0x3e8] sm:$0xff]
    %v544 = vld [vmem:[#allocation5 + $0x3f0] sm:$0xff]
    %v545 = vld [vmem:[#allocation5 + $0x3f8] sm:$0xff]
    %v546 = vld [vmem:[%s5] sm:$0xf]
    %v548 = vlaneseq
    %v549 = vshrl.u32 %v548, 7
    %v550 = vsub.s32 0, %v549
    %v551 = vrot.slane %v546, %v550
    %v552 = vlaneseq
    %v553 = vshrl.u32 %v552, 7
    %v554 = vsub.s32 1, %v553
    %v555 = vrot.slane %v546, %v554
    %v556 = vlaneseq
    %v557 = vshrl.u32 %v556, 7
    %v558 = vsub.s32 2, %v557
    %v559 = vrot.slane %v546, %v558
    %v560 = vlaneseq
    %v561 = vshrl.u32 %v560, 7
    %v562 = vsub.s32 3, %v561
    %v563 = vrot.slane %v546, %v562
    %568 = vmatprep.subr.mxu0 %v355
    %569 = vmatpush1.msra.mxu0 %v354
    %570 = vmatprep.subr.mxu0 %v359
    %571 = vmatpush1.msra.mxu0 %v358
    %572 = vmatprep.subr.mxu0 %v363
    %573 = vmatpush1.msra.mxu0 %v362
    %574 = vmatprep.subr.mxu0 %v367
    %575 = vmatpush1.msra.mxu0 %v366
    %576 = vmatprep.subr.mxu0 %v371
    %577 = vmatpush1.msra.mxu0 %v370
    %578 = vmatprep.subr.mxu0 %v375
    %579 = vmatpush1.msra.mxu0 %v374
    %580 = vmatprep.subr.mxu0 %v379
    %581 = vmatpush1.msra.mxu0 %v378
    %582 = vmatprep.subr.mxu0 %v383
    %583 = vmatpush1.msra.mxu0 %v382
    %584 = vmatprep.subr.mxu0 %v387
    %585 = vmatpush1.msra.mxu0 %v386
    %586 = vmatprep.subr.mxu0 %v391
    %587 = vmatpush1.msra.mxu0 %v390
    %588 = vmatprep.subr.mxu0 %v395
    %589 = vmatpush1.msra.mxu0 %v394
    %590 = vmatprep.subr.mxu0 %v399
    %591 = vmatpush1.msra.mxu0 %v398
    %592 = vmatprep.subr.mxu0 %v403
    %593 = vmatpush1.msra.mxu0 %v402
    %594 = vmatprep.subr.mxu0 %v407
    %595 = vmatpush1.msra.mxu0 %v406
    %596 = vmatprep.subr.mxu0 %v411
    %597 = vmatpush1.msra.mxu0 %v410
    %598 = vmatprep.subr.mxu0 %v415
    %599 = vmatpush1.msra.mxu0 %v414
    %600 = vmatprep.subr.mxu0 0.0
    %601 = vmatpush1.msra.mxu0 0.0
    %602 = vmatprep.subr.mxu0 0.0
    %603 = vmatpush1.msra.mxu0 0.0
    %604 = vmatprep.subr.mxu0 0.0
    %605 = vmatpush1.msra.mxu0 0.0
    %606 = vmatprep.subr.mxu0 0.0
    %607 = vmatpush1.msra.mxu0 0.0
    %608 = vmatprep.subr.mxu0 0.0
    %609 = vmatpush1.msra.mxu0 0.0
    %610 = vmatprep.subr.mxu0 0.0
    %611 = vmatpush1.msra.mxu0 0.0
    %612 = vmatprep.subr.mxu0 0.0
    %613 = vmatpush1.msra.mxu0 0.0
    %614 = vmatprep.subr.mxu0 0.0
    %615 = vmatpush1.msra.mxu0 0.0
    %616 = vmatprep.subr.mxu0 0.0
    %617 = vmatpush1.msra.mxu0 0.0
    %618 = vmatprep.subr.mxu0 0.0
    %619 = vmatpush1.msra.mxu0 0.0
    %620 = vmatprep.subr.mxu0 0.0
    %621 = vmatpush1.msra.mxu0 0.0
    %622 = vmatprep.subr.mxu0 0.0
    %623 = vmatpush1.msra.mxu0 0.0
    %624 = vmatprep.subr.mxu0 0.0
    %625 = vmatpush1.msra.mxu0 0.0
    %626 = vmatprep.subr.mxu0 0.0
    %627 = vmatpush1.msra.mxu0 0.0
    %628 = vmatprep.subr.mxu0 0.0
    %629 = vmatpush1.msra.mxu0 0.0
    %630 = vmatprep.subr.mxu0 0.0
    %631 = vmatpush1.msra.mxu0 0.0
    %632 = vmatprep.mubr.f32.mxu0 0.0
    %633 = vmatmul.mubr.f32.gmra.mrb[0].mxu0 0.0
    %v634 = vpop.f32.mrb[0].mxu0
    %v635 = vadd.f32 0.0, %v634
    %v636 = vpop.f32.mrb[0].mxu0
    %v637 = vadd.f32 0.0, %v636
    %638 = vdwg.mxu0
    %639 = vmatprep.subr.mxu0 %v357
    %640 = vmatpush1.msra.mxu0 %v356
    %641 = vmatprep.subr.mxu0 %v361
    %642 = vmatpush1.msra.mxu0 %v360
    %643 = vmatprep.subr.mxu0 %v365
    %644 = vmatpush1.msra.mxu0 %v364
    %645 = vmatprep.subr.mxu0 %v369
    %646 = vmatpush1.msra.mxu0 %v368
    %647 = vmatprep.subr.mxu0 %v373
    %648 = vmatpush1.msra.mxu0 %v372
    %649 = vmatprep.subr.mxu0 %v377
    %650 = vmatpush1.msra.mxu0 %v376
    %651 = vmatprep.subr.mxu0 %v381
    %652 = vmatpush1.msra.mxu0 %v380
    %653 = vmatprep.subr.mxu0 %v385
    %654 = vmatpush1.msra.mxu0 %v384
    %655 = vmatprep.subr.mxu0 %v389
    %656 = vmatpush1.msra.mxu0 %v388
    %657 = vmatprep.subr.mxu0 %v393
    %658 = vmatpush1.msra.mxu0 %v392
    %659 = vmatprep.subr.mxu0 %v397
    %660 = vmatpush1.msra.mxu0 %v396
    %661 = vmatprep.subr.mxu0 %v401
    %662 = vmatpush1.msra.mxu0 %v400
    %663 = vmatprep.subr.mxu0 %v405
    %664 = vmatpush1.msra.mxu0 %v404
    %665 = vmatprep.subr.mxu0 %v409
    %666 = vmatpush1.msra.mxu0 %v408
    %667 = vmatprep.subr.mxu0 %v413
    %668 = vmatpush1.msra.mxu0 %v412
    %669 = vmatprep.subr.mxu0 %v417
    %670 = vmatpush1.msra.mxu0 %v416
    %671 = vmatprep.subr.mxu0 0.0
    %672 = vmatpush1.msra.mxu0 0.0
    %673 = vmatprep.subr.mxu0 0.0
    %674 = vmatpush1.msra.mxu0 0.0
    %675 = vmatprep.subr.mxu0 0.0
    %676 = vmatpush1.msra.mxu0 0.0
    %677 = vmatprep.subr.mxu0 0.0
    %678 = vmatpush1.msra.mxu0 0.0
    %679 = vmatprep.subr.mxu0 0.0
    %680 = vmatpush1.msra.mxu0 0.0
    %681 = vmatprep.subr.mxu0 0.0
    %682 = vmatpush1.msra.mxu0 0.0
    %683 = vmatprep.subr.mxu0 0.0
    %684 = vmatpush1.msra.mxu0 0.0
    %685 = vmatprep.subr.mxu0 0.0
    %686 = vmatpush1.msra.mxu0 0.0
    %687 = vmatprep.subr.mxu0 0.0
    %688 = vmatpush1.msra.mxu0 0.0
    %689 = vmatprep.subr.mxu0 0.0
    %690 = vmatpush1.msra.mxu0 0.0
    %691 = vmatprep.subr.mxu0 0.0
    %692 = vmatpush1.msra.mxu0 0.0
    %693 = vmatprep.subr.mxu0 0.0
    %694 = vmatpush1.msra.mxu0 0.0
    %695 = vmatprep.subr.mxu0 0.0
    %696 = vmatpush1.msra.mxu0 0.0
    %697 = vmatprep.subr.mxu0 0.0
    %698 = vmatpush1.msra.mxu0 0.0
    %699 = vmatprep.subr.mxu0 0.0
    %700 = vmatpush1.msra.mxu0 0.0
    %701 = vmatprep.subr.mxu0 0.0
    %702 = vmatpush1.msra.mxu0 0.0
    %703 = vmatprep.mubr.f32.mxu0 0.0
    %704 = vmatmul.mubr.f32.gmra.mrb[0].mxu0 0.0
    %v705 = vpop.f32.mrb[0].mxu0
    %v706 = vadd.f32 0.0, %v705
    %v707 = vpop.f32.mrb[0].mxu0
    %v708 = vadd.f32 0.0, %v707
    %709 = vdwg.mxu0
    %v710 = vadd.f32 %v195, %v635
    %v711 = vadd.f32 %v197, %v637
    %v712 = vadd.f32 %v308, %v706
    %v713 = vadd.f32 %v310, %v708
    %v714 = vxor.u32 %v710, 2147483648
    %v715 = vmul.f32 %v714, 1.442695
    %v716 = vpow.pop %v715
    %v717 = vadd.f32 %v716, 1.0
    %v718 = vrcp.pop %v717
    %v719 = vmul.f32 1.0, %v718
    %v720 = vxor.u32 %v711, 2147483648
    %v721 = vmul.f32 %v720, 1.442695
    %v722 = vpow.pop %v721
    %v723 = vadd.f32 %v722, 1.0
    %v724 = vrcp.pop %v723
    %v725 = vmul.f32 1.0, %v724
    %v726 = vtanh.pop %v712
    %v727 = vxor.u32 %v713, 2147483648
    %v728 = vmul.f32 %v727, 1.442695
    %v729 = vpow.pop %v728
    %v730 = vadd.f32 %v729, 1.0
    %v731 = vrcp.pop %v730
    %v732 = vmul.f32 1.0, %v731
    %v733 = vmul.f32 %v725, 0.0
    %v734 = vmul.f32 %v719, %v726
    %v735 = vadd.f32 %v733, %v734
    %v736 = vtanh.pop %v735
    %v737 = vmul.f32 %v732, %v736
    %738 = vmatprep.subr.mxu0 %v419
    %739 = vmatpush1.msra.mxu0 %v418
    %740 = vmatprep.subr.mxu0 %v423
    %741 = vmatpush1.msra.mxu0 %v422
    %742 = vmatprep.subr.mxu0 %v427
    %743 = vmatpush1.msra.mxu0 %v426
    %744 = vmatprep.subr.mxu0 %v431
    %745 = vmatpush1.msra.mxu0 %v430
    %746 = vmatprep.subr.mxu0 %v435
    %747 = vmatpush1.msra.mxu0 %v434
    %748 = vmatprep.subr.mxu0 %v439
    %749 = vmatpush1.msra.mxu0 %v438
    %750 = vmatprep.subr.mxu0 %v443
    %751 = vmatpush1.msra.mxu0 %v442
    %752 = vmatprep.subr.mxu0 %v447
    %753 = vmatpush1.msra.mxu0 %v446
    %754 = vmatprep.subr.mxu0 %v451
    %755 = vmatpush1.msra.mxu0 %v450
    %756 = vmatprep.subr.mxu0 %v455
    %757 = vmatpush1.msra.mxu0 %v454
    %758 = vmatprep.subr.mxu0 %v459
    %759 = vmatpush1.msra.mxu0 %v458
    %760 = vmatprep.subr.mxu0 %v463
    %761 = vmatpush1.msra.mxu0 %v462
    %762 = vmatprep.subr.mxu0 %v467
    %763 = vmatpush1.msra.mxu0 %v466
    %764 = vmatprep.subr.mxu0 %v471
    %765 = vmatpush1.msra.mxu0 %v470
    %766 = vmatprep.subr.mxu0 %v475
    %767 = vmatpush1.msra.mxu0 %v474
    %768 = vmatprep.subr.mxu0 %v479
    %769 = vmatpush1.msra.mxu0 %v478
    %770 = vmatprep.subr.mxu0 %v483
    %771 = vmatpush1.msra.mxu0 %v482
    %772 = vmatprep.subr.mxu0 %v487
    %773 = vmatpush1.msra.mxu0 %v486
    %774 = vmatprep.subr.mxu0 %v491
    %775 = vmatpush1.msra.mxu0 %v490
    %776 = vmatprep.subr.mxu0 %v495
    %777 = vmatpush1.msra.mxu0 %v494
    %778 = vmatprep.subr.mxu0 %v499
    %779 = vmatpush1.msra.mxu0 %v498
    %780 = vmatprep.subr.mxu0 %v503
    %781 = vmatpush1.msra.mxu0 %v502
    %782 = vmatprep.subr.mxu0 %v507
    %783 = vmatpush1.msra.mxu0 %v506
    %784 = vmatprep.subr.mxu0 %v511
    %785 = vmatpush1.msra.mxu0 %v510
    %786 = vmatprep.subr.mxu0 %v515
    %787 = vmatpush1.msra.mxu0 %v514
    %788 = vmatprep.subr.mxu0 %v519
    %789 = vmatpush1.msra.mxu0 %v518
    %790 = vmatprep.subr.mxu0 %v523
    %791 = vmatpush1.msra.mxu0 %v522
    %792 = vmatprep.subr.mxu0 %v527
    %793 = vmatpush1.msra.mxu0 %v526
    %794 = vmatprep.subr.mxu0 %v531
    %795 = vmatpush1.msra.mxu0 %v530
    %796 = vmatprep.subr.mxu0 %v535
    %797 = vmatpush1.msra.mxu0 %v534
    %798 = vmatprep.subr.mxu0 %v539
    %799 = vmatpush1.msra.mxu0 %v538
    %800 = vmatprep.subr.mxu0 %v543
    %801 = vmatpush1.msra.mxu0 %v542
    %802 = vmatprep.mubr.f32.mxu0 0.0
    %803 = vmatmul.mubr.f32.gmra.mrb[0].mxu0 %v737
    %v804 = vpop.f32.mrb[0].mxu0
    %v805 = vadd.f32 %v551, %v804
    %v806 = vpop.f32.mrb[0].mxu0
    %v807 = vadd.f32 %v555, %v806
    %808 = vdwg.mxu0
    %809 = vmatprep.subr.mxu0 %v421
    %810 = vmatpush1.msra.mxu0 %v420
    %811 = vmatprep.subr.mxu0 %v425
    %812 = vmatpush1.msra.mxu0 %v424
    %813 = vmatprep.subr.mxu0 %v429
    %814 = vmatpush1.msra.mxu0 %v428
    %815 = vmatprep.subr.mxu0 %v433
    %816 = vmatpush1.msra.mxu0 %v432
    %817 = vmatprep.subr.mxu0 %v437
    %818 = vmatpush1.msra.mxu0 %v436
    %819 = vmatprep.subr.mxu0 %v441
    %820 = vmatpush1.msra.mxu0 %v440
    %821 = vmatprep.subr.mxu0 %v445
    %822 = vmatpush1.msra.mxu0 %v444
    %823 = vmatprep.subr.mxu0 %v449
    %824 = vmatpush1.msra.mxu0 %v448
    %825 = vmatprep.subr.mxu0 %v453
    %826 = vmatpush1.msra.mxu0 %v452
    %827 = vmatprep.subr.mxu0 %v457
    %828 = vmatpush1.msra.mxu0 %v456
    %829 = vmatprep.subr.mxu0 %v461
    %830 = vmatpush1.msra.mxu0 %v460
    %831 = vmatprep.subr.mxu0 %v465
    %832 = vmatpush1.msra.mxu0 %v464
    %833 = vmatprep.subr.mxu0 %v469
    %834 = vmatpush1.msra.mxu0 %v468
    %835 = vmatprep.subr.mxu0 %v473
    %836 = vmatpush1.msra.mxu0 %v472
    %837 = vmatprep.subr.mxu0 %v477
    %838 = vmatpush1.msra.mxu0 %v476
    %839 = vmatprep.subr.mxu0 %v481
    %840 = vmatpush1.msra.mxu0 %v480
    %841 = vmatprep.subr.mxu0 %v485
    %842 = vmatpush1.msra.mxu0 %v484
    %843 = vmatprep.subr.mxu0 %v489
    %844 = vmatpush1.msra.mxu0 %v488
    %845 = vmatprep.subr.mxu0 %v493
    %846 = vmatpush1.msra.mxu0 %v492
    %847 = vmatprep.subr.mxu0 %v497
    %848 = vmatpush1.msra.mxu0 %v496
    %849 = vmatprep.subr.mxu0 %v501
    %850 = vmatpush1.msra.mxu0 %v500
    %851 = vmatprep.subr.mxu0 %v505
    %852 = vmatpush1.msra.mxu0 %v504
    %853 = vmatprep.subr.mxu0 %v509
    %854 = vmatpush1.msra.mxu0 %v508
    %855 = vmatprep.subr.mxu0 %v513
    %856 = vmatpush1.msra.mxu0 %v512
    %857 = vmatprep.subr.mxu0 %v517
    %858 = vmatpush1.msra.mxu0 %v516
    %859 = vmatprep.subr.mxu0 %v521
    %860 = vmatpush1.msra.mxu0 %v520
    %861 = vmatprep.subr.mxu0 %v525
    %862 = vmatpush1.msra.mxu0 %v524
    %863 = vmatprep.subr.mxu0 %v529
    %864 = vmatpush1.msra.mxu0 %v528
    %865 = vmatprep.subr.mxu0 %v533
    %866 = vmatpush1.msra.mxu0 %v532
    %867 = vmatprep.subr.mxu0 %v537
    %868 = vmatpush1.msra.mxu0 %v536
    %869 = vmatprep.subr.mxu0 %v541
    %870 = vmatpush1.msra.mxu0 %v540
    %871 = vmatprep.subr.mxu0 %v545
    %872 = vmatpush1.msra.mxu0 %v544
    %873 = vmatprep.mubr.f32.mxu0 0.0
    %874 = vmatmul.mubr.f32.gmra.mrb[0].mxu0 %v737
    %v875 = vpop.f32.mrb[0].mxu0
    %v876 = vadd.f32 %v559, %v875
    %v877 = vpop.f32.mrb[0].mxu0
    %v878 = vadd.f32 %v563, %v877
    %879 = vdwg.mxu0
    %v880 = vxor.u32 %v805, 2147483648
    %v881 = vmul.f32 %v880, 1.442695
    %v882 = vpow.pop %v881
    %v883 = vadd.f32 %v882, 1.0
    %v884 = vrcp.pop %v883
    %v885 = vmul.f32 1.0, %v884
    %v886 = vxor.u32 %v807, 2147483648
    %v887 = vmul.f32 %v886, 1.442695
    %v888 = vpow.pop %v887
    %v889 = vadd.f32 %v888, 1.0
    %v890 = vrcp.pop %v889
    %v891 = vmul.f32 1.0, %v890
    %v892 = vtanh.pop %v876
    %v893 = vxor.u32 %v878, 2147483648
    %v894 = vmul.f32 %v893, 1.442695
    %v895 = vpow.pop %v894
    %v896 = vadd.f32 %v895, 1.0
    %v897 = vrcp.pop %v896
    %v898 = vmul.f32 1.0, %v897
    %v899 = vmul.f32 %v891, 0.0
    %v900 = vmul.f32 %v885, %v892
    %v901 = vadd.f32 %v899, %v900
    %v902 = vtanh.pop %v901
    %v903 = vmul.f32 %v898, %v902
    %904 = vmatprep.subr.mxu0 %v355
    %905 = vmatpush1.msra.mxu0 %v354
    %906 = vmatprep.subr.mxu0 %v359
    %907 = vmatpush1.msra.mxu0 %v358
    %908 = vmatprep.subr.mxu0 %v363
    %909 = vmatpush1.msra.mxu0 %v362
    %910 = vmatprep.subr.mxu0 %v367
    %911 = vmatpush1.msra.mxu0 %v366
    %912 = vmatprep.subr.mxu0 %v371
    %913 = vmatpush1.msra.mxu0 %v370
    %914 = vmatprep.subr.mxu0 %v375
    %915 = vmatpush1.msra.mxu0 %v374
    %916 = vmatprep.subr.mxu0 %v379
    %917 = vmatpush1.msra.mxu0 %v378
    %918 = vmatprep.subr.mxu0 %v383
    %919 = vmatpush1.msra.mxu0 %v382
    %920 = vmatprep.subr.mxu0 %v387
    %921 = vmatpush1.msra.mxu0 %v386
    %922 = vmatprep.subr.mxu0 %v391
    %923 = vmatpush1.msra.mxu0 %v390
    %924 = vmatprep.subr.mxu0 %v395
    %925 = vmatpush1.msra.mxu0 %v394
    %926 = vmatprep.subr.mxu0 %v399
    %927 = vmatpush1.msra.mxu0 %v398
    %928 = vmatprep.subr.mxu0 %v403
    %929 = vmatpush1.msra.mxu0 %v402
    %930 = vmatprep.subr.mxu0 %v407
    %931 = vmatpush1.msra.mxu0 %v406
    %932 = vmatprep.subr.mxu0 %v411
    %933 = vmatpush1.msra.mxu0 %v410
    %934 = vmatprep.subr.mxu0 %v415
    %935 = vmatpush1.msra.mxu0 %v414
    %936 = vmatprep.subr.mxu0 0.0
    %937 = vmatpush1.msra.mxu0 0.0
    %938 = vmatprep.subr.mxu0 0.0
    %939 = vmatpush1.msra.mxu0 0.0
    %940 = vmatprep.subr.mxu0 0.0
    %941 = vmatpush1.msra.mxu0 0.0
    %942 = vmatprep.subr.mxu0 0.0
    %943 = vmatpush1.msra.mxu0 0.0
    %944 = vmatprep.subr.mxu0 0.0
    %945 = vmatpush1.msra.mxu0 0.0
    %946 = vmatprep.subr.mxu0 0.0
    %947 = vmatpush1.msra.mxu0 0.0
    %948 = vmatprep.subr.mxu0 0.0
    %949 = vmatpush1.msra.mxu0 0.0
    %950 = vmatprep.subr.mxu0 0.0
    %951 = vmatpush1.msra.mxu0 0.0
    %952 = vmatprep.subr.mxu0 0.0
    %953 = vmatpush1.msra.mxu0 0.0
    %954 = vmatprep.subr.mxu0 0.0
    %955 = vmatpush1.msra.mxu0 0.0
    %956 = vmatprep.subr.mxu0 0.0
    %957 = vmatpush1.msra.mxu0 0.0
    %958 = vmatprep.subr.mxu0 0.0
    %959 = vmatpush1.msra.mxu0 0.0
    %960 = vmatprep.subr.mxu0 0.0
    %961 = vmatpush1.msra.mxu0 0.0
    %962 = vmatprep.subr.mxu0 0.0
    %963 = vmatpush1.msra.mxu0 0.0
    %964 = vmatprep.subr.mxu0 0.0
    %965 = vmatpush1.msra.mxu0 0.0
    %966 = vmatprep.subr.mxu0 0.0
    %967 = vmatpush1.msra.mxu0 0.0
    %968 = vmatprep.mubr.f32.mxu0 0.0
    %969 = vmatmul.mubr.f32.gmra.mrb[0].mxu0 %v737
    %v970 = vpop.f32.mrb[0].mxu0
    %v971 = vadd.f32 0.0, %v970
    %v972 = vpop.f32.mrb[0].mxu0
    %v973 = vadd.f32 0.0, %v972
    %974 = vdwg.mxu0
    %975 = vmatprep.subr.mxu0 %v357
    %976 = vmatpush1.msra.mxu0 %v356
    %977 = vmatprep.subr.mxu0 %v361
    %978 = vmatpush1.msra.mxu0 %v360
    %979 = vmatprep.subr.mxu0 %v365
    %980 = vmatpush1.msra.mxu0 %v364
    %981 = vmatprep.subr.mxu0 %v369
    %982 = vmatpush1.msra.mxu0 %v368
    %983 = vmatprep.subr.mxu0 %v373
    %984 = vmatpush1.msra.mxu0 %v372
    %985 = vmatprep.subr.mxu0 %v377
    %986 = vmatpush1.msra.mxu0 %v376
    %987 = vmatprep.subr.mxu0 %v381
    %988 = vmatpush1.msra.mxu0 %v380
    %989 = vmatprep.subr.mxu0 %v385
    %990 = vmatpush1.msra.mxu0 %v384
    %991 = vmatprep.subr.mxu0 %v389
    %992 = vmatpush1.msra.mxu0 %v388
    %993 = vmatprep.subr.mxu0 %v393
    %994 = vmatpush1.msra.mxu0 %v392
    %995 = vmatprep.subr.mxu0 %v397
    %996 = vmatpush1.msra.mxu0 %v396
    %997 = vmatprep.subr.mxu0 %v401
    %998 = vmatpush1.msra.mxu0 %v400
    %999 = vmatprep.subr.mxu0 %v405
    %1000 = vmatpush1.msra.mxu0 %v404
    %1001 = vmatprep.subr.mxu0 %v409
    %1002 = vmatpush1.msra.mxu0 %v408
    %1003 = vmatprep.subr.mxu0 %v413
    %1004 = vmatpush1.msra.mxu0 %v412
    %1005 = vmatprep.subr.mxu0 %v417
    %1006 = vmatpush1.msra.mxu0 %v416
    %1007 = vmatprep.subr.mxu0 0.0
    %1008 = vmatpush1.msra.mxu0 0.0
    %1009 = vmatprep.subr.mxu0 0.0
    %1010 = vmatpush1.msra.mxu0 0.0
    %1011 = vmatprep.subr.mxu0 0.0
    %1012 = vmatpush1.msra.mxu0 0.0
    %1013 = vmatprep.subr.mxu0 0.0
    %1014 = vmatpush1.msra.mxu0 0.0
    %1015 = vmatprep.subr.mxu0 0.0
    %1016 = vmatpush1.msra.mxu0 0.0
    %1017 = vmatprep.subr.mxu0 0.0
    %1018 = vmatpush1.msra.mxu0 0.0
    %1019 = vmatprep.subr.mxu0 0.0
    %1020 = vmatpush1.msra.mxu0 0.0
    %1021 = vmatprep.subr.mxu0 0.0
    %1022 = vmatpush1.msra.mxu0 0.0
    %1023 = vmatprep.subr.mxu0 0.0
    %1024 = vmatpush1.msra.mxu0 0.0
    %1025 = vmatprep.subr.mxu0 0.0
    %1026 = vmatpush1.msra.mxu0 0.0
    %1027 = vmatprep.subr.mxu0 0.0
    %1028 = vmatpush1.msra.mxu0 0.0
    %1029 = vmatprep.subr.mxu0 0.0
    %1030 = vmatpush1.msra.mxu0 0.0
    %1031 = vmatprep.subr.mxu0 0.0
    %1032 = vmatpush1.msra.mxu0 0.0
    %1033 = vmatprep.subr.mxu0 0.0
    %1034 = vmatpush1.msra.mxu0 0.0
    %1035 = vmatprep.subr.mxu0 0.0
    %1036 = vmatpush1.msra.mxu0 0.0
    %1037 = vmatprep.subr.mxu0 0.0
    %1038 = vmatpush1.msra.mxu0 0.0
    %1039 = vmatprep.mubr.f32.mxu0 0.0
    %1040 = vmatmul.mubr.f32.gmra.mrb[0].mxu0 %v737
    %v1041 = vpop.f32.mrb[0].mxu0
    %v1042 = vadd.f32 0.0, %v1041
    %v1043 = vpop.f32.mrb[0].mxu0
    %v1044 = vadd.f32 0.0, %v1043
    %1045 = vdwg.mxu0
    %v1046 = vadd.f32 %v201, %v971
    %v1047 = vadd.f32 %v203, %v973
    %v1048 = vadd.f32 %v314, %v1042
    %v1049 = vadd.f32 %v316, %v1044
    %v1050 = vxor.u32 %v1046, 2147483648
    %v1051 = vmul.f32 %v1050, 1.442695
    %v1052 = vpow.pop %v1051
    %v1053 = vadd.f32 %v1052, 1.0
    %v1054 = vrcp.pop %v1053
    %v1055 = vmul.f32 1.0, %v1054
    %v1056 = vxor.u32 %v1047, 2147483648
    %v1057 = vmul.f32 %v1056, 1.442695
    %v1058 = vpow.pop %v1057
    %v1059 = vadd.f32 %v1058, 1.0
    %v1060 = vrcp.pop %v1059
    %v1061 = vmul.f32 1.0, %v1060
    %v1062 = vtanh.pop %v1048
    %v1063 = vxor.u32 %v1049, 2147483648
    %v1064 = vmul.f32 %v1063, 1.442695
    %v1065 = vpow.pop %v1064
    %v1066 = vadd.f32 %v1065, 1.0
    %v1067 = vrcp.pop %v1066
    %v1068 = vmul.f32 1.0, %v1067
    %v1069 = vmul.f32 %v1061, %v735
    %v1070 = vmul.f32 %v1055, %v1062
    %v1071 = vadd.f32 %v1069, %v1070
    %v1072 = vtanh.pop %v1071
    %v1073 = vmul.f32 %v1068, %v1072
    %1074 = vmatprep.subr.mxu0 %v419
    %1075 = vmatpush1.msra.mxu0 %v418
    %1076 = vmatprep.subr.mxu0 %v423
    %1077 = vmatpush1.msra.mxu0 %v422
    %1078 = vmatprep.subr.mxu0 %v427
    %1079 = vmatpush1.msra.mxu0 %v426
    %1080 = vmatprep.subr.mxu0 %v431
    %1081 = vmatpush1.msra.mxu0 %v430
    %1082 = vmatprep.subr.mxu0 %v435
    %1083 = vmatpush1.msra.mxu0 %v434
    %1084 = vmatprep.subr.mxu0 %v439
    %1085 = vmatpush1.msra.mxu0 %v438
    %1086 = vmatprep.subr.mxu0 %v443
    %1087 = vmatpush1.msra.mxu0 %v442
    %1088 = vmatprep.subr.mxu0 %v447
    %1089 = vmatpush1.msra.mxu0 %v446
    %1090 = vmatprep.subr.mxu0 %v451
    %1091 = vmatpush1.msra.mxu0 %v450
    %1092 = vmatprep.subr.mxu0 %v455
    %1093 = vmatpush1.msra.mxu0 %v454
    %1094 = vmatprep.subr.mxu0 %v459
    %1095 = vmatpush1.msra.mxu0 %v458
    %1096 = vmatprep.subr.mxu0 %v463
    %1097 = vmatpush1.msra.mxu0 %v462
    %1098 = vmatprep.subr.mxu0 %v467
    %1099 = vmatpush1.msra.mxu0 %v466
    %1100 = vmatprep.subr.mxu0 %v471
    %1101 = vmatpush1.msra.mxu0 %v470
    %1102 = vmatprep.subr.mxu0 %v475
    %1103 = vmatpush1.msra.mxu0 %v474
    %1104 = vmatprep.subr.mxu0 %v479
    %1105 = vmatpush1.msra.mxu0 %v478
    %1106 = vmatprep.subr.mxu0 %v483
    %1107 = vmatpush1.msra.mxu0 %v482
    %1108 = vmatprep.subr.mxu0 %v487
    %1109 = vmatpush1.msra.mxu0 %v486
    %1110 = vmatprep.subr.mxu0 %v491
    %1111 = vmatpush1.msra.mxu0 %v490
    %1112 = vmatprep.subr.mxu0 %v495
    %1113 = vmatpush1.msra.mxu0 %v494
    %1114 = vmatprep.subr.mxu0 %v499
    %1115 = vmatpush1.msra.mxu0 %v498
    %1116 = vmatprep.subr.mxu0 %v503
    %1117 = vmatpush1.msra.mxu0 %v502
    %1118 = vmatprep.subr.mxu0 %v507
    %1119 = vmatpush1.msra.mxu0 %v506
    %1120 = vmatprep.subr.mxu0 %v511
    %1121 = vmatpush1.msra.mxu0 %v510
    %1122 = vmatprep.subr.mxu0 %v515
    %1123 = vmatpush1.msra.mxu0 %v514
    %1124 = vmatprep.subr.mxu0 %v519
    %1125 = vmatpush1.msra.mxu0 %v518
    %1126 = vmatprep.subr.mxu0 %v523
    %1127 = vmatpush1.msra.mxu0 %v522
    %1128 = vmatprep.subr.mxu0 %v527
    %1129 = vmatpush1.msra.mxu0 %v526
    %1130 = vmatprep.subr.mxu0 %v531
    %1131 = vmatpush1.msra.mxu0 %v530
    %1132 = vmatprep.subr.mxu0 %v535
    %1133 = vmatpush1.msra.mxu0 %v534
    %1134 = vmatprep.subr.mxu0 %v539
    %1135 = vmatpush1.msra.mxu0 %v538
    %1136 = vmatprep.subr.mxu0 %v543
    %1137 = vmatpush1.msra.mxu0 %v542
    %1138 = vmatprep.mubr.f32.mxu0 %v903
    %1139 = vmatmul.mubr.f32.gmra.mrb[0].mxu0 %v1073
    %v1140 = vpop.f32.mrb[0].mxu0
    %v1141 = vadd.f32 %v551, %v1140
    %v1142 = vpop.f32.mrb[0].mxu0
    %v1143 = vadd.f32 %v555, %v1142
    %1144 = vdwg.mxu0
    %1145 = vmatprep.subr.mxu0 %v421
    %1146 = vmatpush1.msra.mxu0 %v420
    %1147 = vmatprep.subr.mxu0 %v425
    %1148 = vmatpush1.msra.mxu0 %v424
    %1149 = vmatprep.subr.mxu0 %v429
    %1150 = vmatpush1.msra.mxu0 %v428
    %1151 = vmatprep.subr.mxu0 %v433
    %1152 = vmatpush1.msra.mxu0 %v432
    %1153 = vmatprep.subr.mxu0 %v437
    %1154 = vmatpush1.msra.mxu0 %v436
    %1155 = vmatprep.subr.mxu0 %v441
    %1156 = vmatpush1.msra.mxu0 %v440
    %1157 = vmatprep.subr.mxu0 %v445
    %1158 = vmatpush1.msra.mxu0 %v444
    %1159 = vmatprep.subr.mxu0 %v449
    %1160 = vmatpush1.msra.mxu0 %v448
    %1161 = vmatprep.subr.mxu0 %v453
    %1162 = vmatpush1.msra.mxu0 %v452
    %1163 = vmatprep.subr.mxu0 %v457
    %1164 = vmatpush1.msra.mxu0 %v456
    %1165 = vmatprep.subr.mxu0 %v461
    %1166 = vmatpush1.msra.mxu0 %v460
    %1167 = vmatprep.subr.mxu0 %v465
    %1168 = vmatpush1.msra.mxu0 %v464
    %1169 = vmatprep.subr.mxu0 %v469
    %1170 = vmatpush1.msra.mxu0 %v468
    %1171 = vmatprep.subr.mxu0 %v473
    %1172 = vmatpush1.msra.mxu0 %v472
    %1173 = vmatprep.subr.mxu0 %v477
    %1174 = vmatpush1.msra.mxu0 %v476
    %1175 = vmatprep.subr.mxu0 %v481
    %1176 = vmatpush1.msra.mxu0 %v480
    %1177 = vmatprep.subr.mxu0 %v485
    %1178 = vmatpush1.msra.mxu0 %v484
    %1179 = vmatprep.subr.mxu0 %v489
    %1180 = vmatpush1.msra.mxu0 %v488
    %1181 = vmatprep.subr.mxu0 %v493
    %1182 = vmatpush1.msra.mxu0 %v492
    %1183 = vmatprep.subr.mxu0 %v497
    %1184 = vmatpush1.msra.mxu0 %v496
    %1185 = vmatprep.subr.mxu0 %v501
    %1186 = vmatpush1.msra.mxu0 %v500
    %1187 = vmatprep.subr.mxu0 %v505
    %1188 = vmatpush1.msra.mxu0 %v504
    %1189 = vmatprep.subr.mxu0 %v509
    %1190 = vmatpush1.msra.mxu0 %v508
    %1191 = vmatprep.subr.mxu0 %v513
    %1192 = vmatpush1.msra.mxu0 %v512
    %1193 = vmatprep.subr.mxu0 %v517
    %1194 = vmatpush1.msra.mxu0 %v516
    %1195 = vmatprep.subr.mxu0 %v521
    %1196 = vmatpush1.msra.mxu0 %v520
    %1197 = vmatprep.subr.mxu0 %v525
    %1198 = vmatpush1.msra.mxu0 %v524
    %1199 = vmatprep.subr.mxu0 %v529
    %1200 = vmatpush1.msra.mxu0 %v528
    %1201 = vmatprep.subr.mxu0 %v533
    %1202 = vmatpush1.msra.mxu0 %v532
    %1203 = vmatprep.subr.mxu0 %v537
    %1204 = vmatpush1.msra.mxu0 %v536
    %1205 = vmatprep.subr.mxu0 %v541
    %1206 = vmatpush1.msra.mxu0 %v540
    %1207 = vmatprep.subr.mxu0 %v545
    %1208 = vmatpush1.msra.mxu0 %v544
    %1209 = vmatprep.mubr.f32.mxu0 %v903
    %1210 = vmatmul.mubr.f32.gmra.mrb[0].mxu0 %v1073
    %v1211 = vpop.f32.mrb[0].mxu0
    %v1212 = vadd.f32 %v559, %v1211
    %v1213 = vpop.f32.mrb[0].mxu0
    %v1214 = vadd.f32 %v563, %v1213
    %1215 = vdwg.mxu0
    %v1216 = vxor.u32 %v1141, 2147483648
    %v1217 = vmul.f32 %v1216, 1.442695
    %v1218 = vpow.pop %v1217
    %v1219 = vadd.f32 %v1218, 1.0
    %v1220 = vrcp.pop %v1219
    %v1221 = vmul.f32 1.0, %v1220
    %v1222 = vxor.u32 %v1143, 2147483648
    %v1223 = vmul.f32 %v1222, 1.442695
    %v1224 = vpow.pop %v1223
    %v1225 = vadd.f32 %v1224, 1.0
    %v1226 = vrcp.pop %v1225
    %v1227 = vmul.f32 1.0, %v1226
    %v1228 = vtanh.pop %v1212
    %v1229 = vxor.u32 %v1214, 2147483648
    %v1230 = vmul.f32 %v1229, 1.442695
    %v1231 = vpow.pop %v1230
    %v1232 = vadd.f32 %v1231, 1.0
    %v1233 = vrcp.pop %v1232
    %v1234 = vmul.f32 1.0, %v1233
    %v1235 = vmul.f32 %v1227, %v901
    %v1236 = vmul.f32 %v1221, %v1228
    %v1237 = vadd.f32 %v1235, %v1236
    %v1238 = vtanh.pop %v1237
    %v1239 = vmul.f32 %v1234, %v1238
    %1240 = vmatprep.subr.mxu0 %v355
    %1241 = vmatpush1.msra.mxu0 %v354
    %1242 = vmatprep.subr.mxu0 %v359
    %1243 = vmatpush1.msra.mxu0 %v358
    %1244 = vmatprep.subr.mxu0 %v363
    %1245 = vmatpush1.msra.mxu0 %v362
    %1246 = vmatprep.subr.mxu0 %v367
    %1247 = vmatpush1.msra.mxu0 %v366
    %1248 = vmatprep.subr.mxu0 %v371
    %1249 = vmatpush1.msra.mxu0 %v370
    %1250 = vmatprep.subr.mxu0 %v375
    %1251 = vmatpush1.msra.mxu0 %v374
    %1252 = vmatprep.subr.mxu0 %v379
    %1253 = vmatpush1.msra.mxu0 %v378
    %1254 = vmatprep.subr.mxu0 %v383
    %1255 = vmatpush1.msra.mxu0 %v382
    %1256 = vmatprep.subr.mxu0 %v387
    %1257 = vmatpush1.msra.mxu0 %v386
    %1258 = vmatprep.subr.mxu0 %v391
    %1259 = vmatpush1.msra.mxu0 %v390
    %1260 = vmatprep.subr.mxu0 %v395
    %1261 = vmatpush1.msra.mxu0 %v394
    %1262 = vmatprep.subr.mxu0 %v399
    %1263 = vmatpush1.msra.mxu0 %v398
    %1264 = vmatprep.subr.mxu0 %v403
    %1265 = vmatpush1.msra.mxu0 %v402
    %1266 = vmatprep.subr.mxu0 %v407
    %1267 = vmatpush1.msra.mxu0 %v406
    %1268 = vmatprep.subr.mxu0 %v411
    %1269 = vmatpush1.msra.mxu0 %v410
    %1270 = vmatprep.subr.mxu0 %v415
    %1271 = vmatpush1.msra.mxu0 %v414
    %1272 = vmatprep.subr.mxu0 0.0
    %1273 = vmatpush1.msra.mxu0 0.0
    %1274 = vmatprep.subr.mxu0 0.0
    %1275 = vmatpush1.msra.mxu0 0.0
    %1276 = vmatprep.subr.mxu0 0.0
    %1277 = vmatpush1.msra.mxu0 0.0
    %1278 = vmatprep.subr.mxu0 0.0
    %1279 = vmatpush1.msra.mxu0 0.0
    %1280 = vmatprep.subr.mxu0 0.0
    %1281 = vmatpush1.msra.mxu0 0.0
    %1282 = vmatprep.subr.mxu0 0.0
    %1283 = vmatpush1.msra.mxu0 0.0
    %1284 = vmatprep.subr.mxu0 0.0
    %1285 = vmatpush1.msra.mxu0 0.0
    %1286 = vmatprep.subr.mxu0 0.0
    %1287 = vmatpush1.msra.mxu0 0.0
    %1288 = vmatprep.subr.mxu0 0.0
    %1289 = vmatpush1.msra.mxu0 0.0
    %1290 = vmatprep.subr.mxu0 0.0
    %1291 = vmatpush1.msra.mxu0 0.0
    %1292 = vmatprep.subr.mxu0 0.0
    %1293 = vmatpush1.msra.mxu0 0.0
    %1294 = vmatprep.subr.mxu0 0.0
    %1295 = vmatpush1.msra.mxu0 0.0
    %1296 = vmatprep.subr.mxu0 0.0
    %1297 = vmatpush1.msra.mxu0 0.0
    %1298 = vmatprep.subr.mxu0 0.0
    %1299 = vmatpush1.msra.mxu0 0.0
    %1300 = vmatprep.subr.mxu0 0.0
    %1301 = vmatpush1.msra.mxu0 0.0
    %1302 = vmatprep.subr.mxu0 0.0
    %1303 = vmatpush1.msra.mxu0 0.0
    %1304 = vmatprep.mubr.f32.mxu0 0.0
    %1305 = vmatmul.mubr.f32.gmra.mrb[0].mxu0 %v1073
    %v1306 = vpop.f32.mrb[0].mxu0
    %v1307 = vadd.f32 0.0, %v1306
    %v1308 = vpop.f32.mrb[0].mxu0
    %v1309 = vadd.f32 0.0, %v1308
    %1310 = vdwg.mxu0
    %1311 = vmatprep.subr.mxu0 %v357
    %1312 = vmatpush1.msra.mxu0 %v356
    %1313 = vmatprep.subr.mxu0 %v361
    %1314 = vmatpush1.msra.mxu0 %v360
    %1315 = vmatprep.subr.mxu0 %v365
    %1316 = vmatpush1.msra.mxu0 %v364
    %1317 = vmatprep.subr.mxu0 %v369
    %1318 = vmatpush1.msra.mxu0 %v368
    %1319 = vmatprep.subr.mxu0 %v373
    %1320 = vmatpush1.msra.mxu0 %v372
    %1321 = vmatprep.subr.mxu0 %v377
    %1322 = vmatpush1.msra.mxu0 %v376
    %1323 = vmatprep.subr.mxu0 %v381
    %1324 = vmatpush1.msra.mxu0 %v380
    %1325 = vmatprep.subr.mxu0 %v385
    %1326 = vmatpush1.msra.mxu0 %v384
    %1327 = vmatprep.subr.mxu0 %v389
    %1328 = vmatpush1.msra.mxu0 %v388
    %1329 = vmatprep.subr.mxu0 %v393
    %1330 = vmatpush1.msra.mxu0 %v392
    %1331 = vmatprep.subr.mxu0 %v397
    %1332 = vmatpush1.msra.mxu0 %v396
    %1333 = vmatprep.subr.mxu0 %v401
    %1334 = vmatpush1.msra.mxu0 %v400
    %1335 = vmatprep.subr.mxu0 %v405
    %1336 = vmatpush1.msra.mxu0 %v404
    %1337 = vmatprep.subr.mxu0 %v409
    %1338 = vmatpush1.msra.mxu0 %v408
    %1339 = vmatprep.subr.mxu0 %v413
    %1340 = vmatpush1.msra.mxu0 %v412
    %1341 = vmatprep.subr.mxu0 %v417
    %1342 = vmatpush1.msra.mxu0 %v416
    %1343 = vmatprep.subr.mxu0 0.0
    %1344 = vmatpush1.msra.mxu0 0.0
    %1345 = vmatprep.subr.mxu0 0.0
    %1346 = vmatpush1.msra.mxu0 0.0
    %1347 = vmatprep.subr.mxu0 0.0
    %1348 = vmatpush1.msra.mxu0 0.0
    %1349 = vmatprep.subr.mxu0 0.0
    %1350 = vmatpush1.msra.mxu0 0.0
    %1351 = vmatprep.subr.mxu0 0.0
    %1352 = vmatpush1.msra.mxu0 0.0
    %1353 = vmatprep.subr.mxu0 0.0
    %1354 = vmatpush1.msra.mxu0 0.0
    %1355 = vmatprep.subr.mxu0 0.0
    %1356 = vmatpush1.msra.mxu0 0.0
    %1357 = vmatprep.subr.mxu0 0.0
    %1358 = vmatpush1.msra.mxu0 0.0
    %1359 = vmatprep.subr.mxu0 0.0
    %1360 = vmatpush1.msra.mxu0 0.0
    %1361 = vmatprep.subr.mxu0 0.0
    %1362 = vmatpush1.msra.mxu0 0.0
    %1363 = vmatprep.subr.mxu0 0.0
    %1364 = vmatpush1.msra.mxu0 0.0
    %1365 = vmatprep.subr.mxu0 0.0
    %1366 = vmatpush1.msra.mxu0 0.0
    %1367 = vmatprep.subr.mxu0 0.0
    %1368 = vmatpush1.msra.mxu0 0.0
    %1369 = vmatprep.subr.mxu0 0.0
    %1370 = vmatpush1.msra.mxu0 0.0
    %1371 = vmatprep.subr.mxu0 0.0
    %1372 = vmatpush1.msra.mxu0 0.0
    %1373 = vmatprep.subr.mxu0 0.0
    %1374 = vmatpush1.msra.mxu0 0.0
    %1375 = vmatprep.mubr.f32.mxu0 0.0
    %1376 = vmatmul.mubr.f32.gmra.mrb[0].mxu0 %v1073
    %v1377 = vpop.f32.mrb[0].mxu0
    %v1378 = vadd.f32 0.0, %v1377
    %v1379 = vpop.f32.mrb[0].mxu0
    %v1380 = vadd.f32 0.0, %v1379
    %1381 = vdwg.mxu0
    %v1382 = vadd.f32 %v207, %v1307
    %v1383 = vadd.f32 %v209, %v1309
    %v1384 = vadd.f32 %v320, %v1378
    %v1385 = vadd.f32 %v322, %v1380
    %v1386 = vxor.u32 %v1382, 2147483648
    %v1387 = vmul.f32 %v1386, 1.442695
    %v1388 = vpow.pop %v1387
    %v1389 = vadd.f32 %v1388, 1.0
    %v1390 = vrcp.pop %v1389
    %v1391 = vmul.f32 1.0, %v1390
    %v1392 = vxor.u32 %v1383, 2147483648
    %v1393 = vmul.f32 %v1392, 1.442695
    %v1394 = vpow.pop %v1393
    %v1395 = vadd.f32 %v1394, 1.0
    %v1396 = vrcp.pop %v1395
    %v1397 = vmul.f32 1.0, %v1396
    %v1398 = vtanh.pop %v1384
    %v1399 = vxor.u32 %v1385, 2147483648
    %v1400 = vmul.f32 %v1399, 1.442695
    %v1401 = vpow.pop %v1400
    %v1402 = vadd.f32 %v1401, 1.0
    %v1403 = vrcp.pop %v1402
    %v1404 = vmul.f32 1.0, %v1403
    %v1405 = vmul.f32 %v1397, %v1071
    %v1406 = vmul.f32 %v1391, %v1398
    %v1407 = vadd.f32 %v1405, %v1406
    %v1408 = vtanh.pop %v1407
    %v1409 = vmul.f32 %v1404, %v1408
    %1410 = vmatprep.subr.mxu0 %v419
    %1411 = vmatpush1.msra.mxu0 %v418
    %1412 = vmatprep.subr.mxu0 %v423
    %1413 = vmatpush1.msra.mxu0 %v422
    %1414 = vmatprep.subr.mxu0 %v427
    %1415 = vmatpush1.msra.mxu0 %v426
    %1416 = vmatprep.subr.mxu0 %v431
    %1417 = vmatpush1.msra.mxu0 %v430
    %1418 = vmatprep.subr.mxu0 %v435
    %1419 = vmatpush1.msra.mxu0 %v434
    %1420 = vmatprep.subr.mxu0 %v439
    %1421 = vmatpush1.msra.mxu0 %v438
    %1422 = vmatprep.subr.mxu0 %v443
    %1423 = vmatpush1.msra.mxu0 %v442
    %1424 = vmatprep.subr.mxu0 %v447
    %1425 = vmatpush1.msra.mxu0 %v446
    %1426 = vmatprep.subr.mxu0 %v451
    %1427 = vmatpush1.msra.mxu0 %v450
    %1428 = vmatprep.subr.mxu0 %v455
    %1429 = vmatpush1.msra.mxu0 %v454
    %1430 = vmatprep.subr.mxu0 %v459
    %1431 = vmatpush1.msra.mxu0 %v458
    %1432 = vmatprep.subr.mxu0 %v463
    %1433 = vmatpush1.msra.mxu0 %v462
    %1434 = vmatprep.subr.mxu0 %v467
    %1435 = vmatpush1.msra.mxu0 %v466
    %1436 = vmatprep.subr.mxu0 %v471
    %1437 = vmatpush1.msra.mxu0 %v470
    %1438 = vmatprep.subr.mxu0 %v475
    %1439 = vmatpush1.msra.mxu0 %v474
    %1440 = vmatprep.subr.mxu0 %v479
    %1441 = vmatpush1.msra.mxu0 %v478
    %1442 = vmatprep.subr.mxu0 %v483
    %1443 = vmatpush1.msra.mxu0 %v482
    %1444 = vmatprep.subr.mxu0 %v487
    %1445 = vmatpush1.msra.mxu0 %v486
    %1446 = vmatprep.subr.mxu0 %v491
    %1447 = vmatpush1.msra.mxu0 %v490
    %1448 = vmatprep.subr.mxu0 %v495
    %1449 = vmatpush1.msra.mxu0 %v494
    %1450 = vmatprep.subr.mxu0 %v499
    %1451 = vmatpush1.msra.mxu0 %v498
    %1452 = vmatprep.subr.mxu0 %v503
    %1453 = vmatpush1.msra.mxu0 %v502
    %1454 = vmatprep.subr.mxu0 %v507
    %1455 = vmatpush1.msra.mxu0 %v506
    %1456 = vmatprep.subr.mxu0 %v511
    %1457 = vmatpush1.msra.mxu0 %v510
    %1458 = vmatprep.subr.mxu0 %v515
    %1459 = vmatpush1.msra.mxu0 %v514
    %1460 = vmatprep.subr.mxu0 %v519
    %1461 = vmatpush1.msra.mxu0 %v518
    %1462 = vmatprep.subr.mxu0 %v523
    %1463 = vmatpush1.msra.mxu0 %v522
    %1464 = vmatprep.subr.mxu0 %v527
    %1465 = vmatpush1.msra.mxu0 %v526
    %1466 = vmatprep.subr.mxu0 %v531
    %1467 = vmatpush1.msra.mxu0 %v530
    %1468 = vmatprep.subr.mxu0 %v535
    %1469 = vmatpush1.msra.mxu0 %v534
    %1470 = vmatprep.subr.mxu0 %v539
    %1471 = vmatpush1.msra.mxu0 %v538
    %1472 = vmatprep.subr.mxu0 %v543
    %1473 = vmatpush1.msra.mxu0 %v542
    %1474 = vmatprep.mubr.f32.mxu0 %v1239
    %1475 = vmatmul.mubr.f32.gmra.mrb[0].mxu0 %v1409
    %v1476 = vpop.f32.mrb[0].mxu0
    %v1477 = vadd.f32 %v551, %v1476
    %v1478 = vpop.f32.mrb[0].mxu0
    %v1479 = vadd.f32 %v555, %v1478
    %1480 = vdwg.mxu0
    %1481 = vmatprep.subr.mxu0 %v421
    %1482 = vmatpush1.msra.mxu0 %v420
    %1483 = vmatprep.subr.mxu0 %v425
    %1484 = vmatpush1.msra.mxu0 %v424
    %1485 = vmatprep.subr.mxu0 %v429
    %1486 = vmatpush1.msra.mxu0 %v428
    %1487 = vmatprep.subr.mxu0 %v433
    %1488 = vmatpush1.msra.mxu0 %v432
    %1489 = vmatprep.subr.mxu0 %v437
    %1490 = vmatpush1.msra.mxu0 %v436
    %1491 = vmatprep.subr.mxu0 %v441
    %1492 = vmatpush1.msra.mxu0 %v440
    %1493 = vmatprep.subr.mxu0 %v445
    %1494 = vmatpush1.msra.mxu0 %v444
    %1495 = vmatprep.subr.mxu0 %v449
    %1496 = vmatpush1.msra.mxu0 %v448
    %1497 = vmatprep.subr.mxu0 %v453
    %1498 = vmatpush1.msra.mxu0 %v452
    %1499 = vmatprep.subr.mxu0 %v457
    %1500 = vmatpush1.msra.mxu0 %v456
    %1501 = vmatprep.subr.mxu0 %v461
    %1502 = vmatpush1.msra.mxu0 %v460
    %1503 = vmatprep.subr.mxu0 %v465
    %1504 = vmatpush1.msra.mxu0 %v464
    %1505 = vmatprep.subr.mxu0 %v469
    %1506 = vmatpush1.msra.mxu0 %v468
    %1507 = vmatprep.subr.mxu0 %v473
    %1508 = vmatpush1.msra.mxu0 %v472
    %1509 = vmatprep.subr.mxu0 %v477
    %1510 = vmatpush1.msra.mxu0 %v476
    %1511 = vmatprep.subr.mxu0 %v481
    %1512 = vmatpush1.msra.mxu0 %v480
    %1513 = vmatprep.subr.mxu0 %v485
    %1514 = vmatpush1.msra.mxu0 %v484
    %1515 = vmatprep.subr.mxu0 %v489
    %1516 = vmatpush1.msra.mxu0 %v488
    %1517 = vmatprep.subr.mxu0 %v493
    %1518 = vmatpush1.msra.mxu0 %v492
    %1519 = vmatprep.subr.mxu0 %v497
    %1520 = vmatpush1.msra.mxu0 %v496
    %1521 = vmatprep.subr.mxu0 %v501
    %1522 = vmatpush1.msra.mxu0 %v500
    %1523 = vmatprep.subr.mxu0 %v505
    %1524 = vmatpush1.msra.mxu0 %v504
    %1525 = vmatprep.subr.mxu0 %v509
    %1526 = vmatpush1.msra.mxu0 %v508
    %1527 = vmatprep.subr.mxu0 %v513
    %1528 = vmatpush1.msra.mxu0 %v512
    %1529 = vmatprep.subr.mxu0 %v517
    %1530 = vmatpush1.msra.mxu0 %v516
    %1531 = vmatprep.subr.mxu0 %v521
    %1532 = vmatpush1.msra.mxu0 %v520
    %1533 = vmatprep.subr.mxu0 %v525
    %1534 = vmatpush1.msra.mxu0 %v524
    %1535 = vmatprep.subr.mxu0 %v529
    %1536 = vmatpush1.msra.mxu0 %v528
    %1537 = vmatprep.subr.mxu0 %v533
    %1538 = vmatpush1.msra.mxu0 %v532
    %1539 = vmatprep.subr.mxu0 %v537
    %1540 = vmatpush1.msra.mxu0 %v536
    %1541 = vmatprep.subr.mxu0 %v541
    %1542 = vmatpush1.msra.mxu0 %v540
    %1543 = vmatprep.subr.mxu0 %v545
    %1544 = vmatpush1.msra.mxu0 %v544
    %1545 = vmatprep.mubr.f32.mxu0 %v1239
    %1546 = vmatmul.mubr.f32.gmra.mrb[0].mxu0 %v1409
    %v1547 = vpop.f32.mrb[0].mxu0
    %v1548 = vadd.f32 %v559, %v1547
    %v1549 = vpop.f32.mrb[0].mxu0
    %v1550 = vadd.f32 %v563, %v1549
    %1551 = vdwg.mxu0
    %v1552 = vxor.u32 %v1477, 2147483648
    %v1553 = vmul.f32 %v1552, 1.442695
    %v1554 = vpow.pop %v1553
    %v1555 = vadd.f32 %v1554, 1.0
    %v1556 = vrcp.pop %v1555
    %v1557 = vmul.f32 1.0, %v1556
    %v1558 = vxor.u32 %v1479, 2147483648
    %v1559 = vmul.f32 %v1558, 1.442695
    %v1560 = vpow.pop %v1559
    %v1561 = vadd.f32 %v1560, 1.0
    %v1562 = vrcp.pop %v1561
    %v1563 = vmul.f32 1.0, %v1562
    %v1564 = vtanh.pop %v1548
    %v1565 = vxor.u32 %v1550, 2147483648
    %v1566 = vmul.f32 %v1565, 1.442695
    %v1567 = vpow.pop %v1566
    %v1568 = vadd.f32 %v1567, 1.0
    %v1569 = vrcp.pop %v1568
    %v1570 = vmul.f32 1.0, %v1569
    %v1571 = vmul.f32 %v1563, %v1237
    %v1572 = vmul.f32 %v1557, %v1564
    %v1573 = vadd.f32 %v1571, %v1572
    %v1574 = vtanh.pop %v1573
    %v1575 = vmul.f32 %v1570, %v1574
    %1576 = vmatprep.subr.mxu0 %v355
    %1577 = vmatpush1.msra.mxu0 %v354
    %1578 = vmatprep.subr.mxu0 %v359
    %1579 = vmatpush1.msra.mxu0 %v358
    %1580 = vmatprep.subr.mxu0 %v363
    %1581 = vmatpush1.msra.mxu0 %v362
    %1582 = vmatprep.subr.mxu0 %v367
    %1583 = vmatpush1.msra.mxu0 %v366
    %1584 = vmatprep.subr.mxu0 %v371
    %1585 = vmatpush1.msra.mxu0 %v370
    %1586 = vmatprep.subr.mxu0 %v375
    %1587 = vmatpush1.msra.mxu0 %v374
    %1588 = vmatprep.subr.mxu0 %v379
    %1589 = vmatpush1.msra.mxu0 %v378
    %1590 = vmatprep.subr.mxu0 %v383
    %1591 = vmatpush1.msra.mxu0 %v382
    %1592 = vmatprep.subr.mxu0 %v387
    %1593 = vmatpush1.msra.mxu0 %v386
    %1594 = vmatprep.subr.mxu0 %v391
    %1595 = vmatpush1.msra.mxu0 %v390
    %1596 = vmatprep.subr.mxu0 %v395
    %1597 = vmatpush1.msra.mxu0 %v394
    %1598 = vmatprep.subr.mxu0 %v399
    %1599 = vmatpush1.msra.mxu0 %v398
    %1600 = vmatprep.subr.mxu0 %v403
    %1601 = vmatpush1.msra.mxu0 %v402
    %1602 = vmatprep.subr.mxu0 %v407
    %1603 = vmatpush1.msra.mxu0 %v406
    %1604 = vmatprep.subr.mxu0 %v411
    %1605 = vmatpush1.msra.mxu0 %v410
    %1606 = vmatprep.subr.mxu0 %v415
    %1607 = vmatpush1.msra.mxu0 %v414
    %1608 = vmatprep.subr.mxu0 0.0
    %1609 = vmatpush1.msra.mxu0 0.0
    %1610 = vmatprep.subr.mxu0 0.0
    %1611 = vmatpush1.msra.mxu0 0.0
    %1612 = vmatprep.subr.mxu0 0.0
    %1613 = vmatpush1.msra.mxu0 0.0
    %1614 = vmatprep.subr.mxu0 0.0
    %1615 = vmatpush1.msra.mxu0 0.0
    %1616 = vmatprep.subr.mxu0 0.0
    %1617 = vmatpush1.msra.mxu0 0.0
    %1618 = vmatprep.subr.mxu0 0.0
    %1619 = vmatpush1.msra.mxu0 0.0
    %1620 = vmatprep.subr.mxu0 0.0
    %1621 = vmatpush1.msra.mxu0 0.0
    %1622 = vmatprep.subr.mxu0 0.0
    %1623 = vmatpush1.msra.mxu0 0.0
    %1624 = vmatprep.subr.mxu0 0.0
    %1625 = vmatpush1.msra.mxu0 0.0
    %1626 = vmatprep.subr.mxu0 0.0
    %1627 = vmatpush1.msra.mxu0 0.0
    %1628 = vmatprep.subr.mxu0 0.0
    %1629 = vmatpush1.msra.mxu0 0.0
    %1630 = vmatprep.subr.mxu0 0.0
    %1631 = vmatpush1.msra.mxu0 0.0
    %1632 = vmatprep.subr.mxu0 0.0
    %1633 = vmatpush1.msra.mxu0 0.0
    %1634 = vmatprep.subr.mxu0 0.0
    %1635 = vmatpush1.msra.mxu0 0.0
    %1636 = vmatprep.subr.mxu0 0.0
    %1637 = vmatpush1.msra.mxu0 0.0
    %1638 = vmatprep.subr.mxu0 0.0
    %1639 = vmatpush1.msra.mxu0 0.0
    %1640 = vmatprep.mubr.f32.mxu0 0.0
    %1641 = vmatmul.mubr.f32.gmra.mrb[0].mxu0 %v1409
    %v1642 = vpop.f32.mrb[0].mxu0
    %v1643 = vadd.f32 0.0, %v1642
    %v1644 = vpop.f32.mrb[0].mxu0
    %v1645 = vadd.f32 0.0, %v1644
    %1646 = vdwg.mxu0
    %1647 = vmatprep.subr.mxu0 %v357
    %1648 = vmatpush1.msra.mxu0 %v356
    %1649 = vmatprep.subr.mxu0 %v361
    %1650 = vmatpush1.msra.mxu0 %v360
    %1651 = vmatprep.subr.mxu0 %v365
    %1652 = vmatpush1.msra.mxu0 %v364
    %1653 = vmatprep.subr.mxu0 %v369
    %1654 = vmatpush1.msra.mxu0 %v368
    %1655 = vmatprep.subr.mxu0 %v373
    %1656 = vmatpush1.msra.mxu0 %v372
    %1657 = vmatprep.subr.mxu0 %v377
    %1658 = vmatpush1.msra.mxu0 %v376
    %1659 = vmatprep.subr.mxu0 %v381
    %1660 = vmatpush1.msra.mxu0 %v380
    %1661 = vmatprep.subr.mxu0 %v385
    %1662 = vmatpush1.msra.mxu0 %v384
    %1663 = vmatprep.subr.mxu0 %v389
    %1664 = vmatpush1.msra.mxu0 %v388
    %1665 = vmatprep.subr.mxu0 %v393
    %1666 = vmatpush1.msra.mxu0 %v392
    %1667 = vmatprep.subr.mxu0 %v397
    %1668 = vmatpush1.msra.mxu0 %v396
    %1669 = vmatprep.subr.mxu0 %v401
    %1670 = vmatpush1.msra.mxu0 %v400
    %1671 = vmatprep.subr.mxu0 %v405
    %1672 = vmatpush1.msra.mxu0 %v404
    %1673 = vmatprep.subr.mxu0 %v409
    %1674 = vmatpush1.msra.mxu0 %v408
    %1675 = vmatprep.subr.mxu0 %v413
    %1676 = vmatpush1.msra.mxu0 %v412
    %1677 = vmatprep.subr.mxu0 %v417
    %1678 = vmatpush1.msra.mxu0 %v416
    %1679 = vmatprep.subr.mxu0 0.0
    %1680 = vmatpush1.msra.mxu0 0.0
    %1681 = vmatprep.subr.mxu0 0.0
    %1682 = vmatpush1.msra.mxu0 0.0
    %1683 = vmatprep.subr.mxu0 0.0
    %1684 = vmatpush1.msra.mxu0 0.0
    %1685 = vmatprep.subr.mxu0 0.0
    %1686 = vmatpush1.msra.mxu0 0.0
    %1687 = vmatprep.subr.mxu0 0.0
    %1688 = vmatpush1.msra.mxu0 0.0
    %1689 = vmatprep.subr.mxu0 0.0
    %1690 = vmatpush1.msra.mxu0 0.0
    %1691 = vmatprep.subr.mxu0 0.0
    %1692 = vmatpush1.msra.mxu0 0.0
    %1693 = vmatprep.subr.mxu0 0.0
    %1694 = vmatpush1.msra.mxu0 0.0
    %1695 = vmatprep.subr.mxu0 0.0
    %1696 = vmatpush1.msra.mxu0 0.0
    %1697 = vmatprep.subr.mxu0 0.0
    %1698 = vmatpush1.msra.mxu0 0.0
    %1699 = vmatprep.subr.mxu0 0.0
    %1700 = vmatpush1.msra.mxu0 0.0
    %1701 = vmatprep.subr.mxu0 0.0
    %1702 = vmatpush1.msra.mxu0 0.0
    %1703 = vmatprep.subr.mxu0 0.0
    %1704 = vmatpush1.msra.mxu0 0.0
    %1705 = vmatprep.subr.mxu0 0.0
    %1706 = vmatpush1.msra.mxu0 0.0
    %1707 = vmatprep.subr.mxu0 0.0
    %1708 = vmatpush1.msra.mxu0 0.0
    %1709 = vmatprep.subr.mxu0 0.0
    %1710 = vmatpush1.msra.mxu0 0.0
    %1711 = vmatprep.mubr.f32.mxu0 0.0
    %1712 = vmatmul.mubr.f32.gmra.mrb[0].mxu0 %v1409
    %v1713 = vpop.f32.mrb[0].mxu0
    %v1714 = vadd.f32 0.0, %v1713
    %v1715 = vpop.f32.mrb[0].mxu0
    %v1716 = vadd.f32 0.0, %v1715
    %1717 = vdwg.mxu0
    %v1718 = vadd.f32 %v213, %v1643
    %v1719 = vadd.f32 %v215, %v1645
    %v1720 = vadd.f32 %v326, %v1714
    %v1721 = vadd.f32 %v328, %v1716
    %v1722 = vxor.u32 %v1718, 2147483648
    %v1723 = vmul.f32 %v1722, 1.442695
    %v1724 = vpow.pop %v1723
    %v1725 = vadd.f32 %v1724, 1.0
    %v1726 = vrcp.pop %v1725
    %v1727 = vmul.f32 1.0, %v1726
    %v1728 = vxor.u32 %v1719, 2147483648
    %v1729 = vmul.f32 %v1728, 1.442695
    %v1730 = vpow.pop %v1729
    %v1731 = vadd.f32 %v1730, 1.0
    %v1732 = vrcp.pop %v1731
    %v1733 = vmul.f32 1.0, %v1732
    %v1734 = vtanh.pop %v1720
    %v1735 = vxor.u32 %v1721, 2147483648
    %v1736 = vmul.f32 %v1735, 1.442695
    %v1737 = vpow.pop %v1736
    %v1738 = vadd.f32 %v1737, 1.0
    %v1739 = vrcp.pop %v1738
    %v1740 = vmul.f32 1.0, %v1739
    %v1741 = vmul.f32 %v1733, %v1407
    %v1742 = vmul.f32 %v1727, %v1734
    %v1743 = vadd.f32 %v1741, %v1742
    %v1744 = vtanh.pop %v1743
    %v1745 = vmul.f32 %v1740, %v1744
    %1746 = vmatprep.subr.mxu0 %v419
    %1747 = vmatpush1.msra.mxu0 %v418
    %1748 = vmatprep.subr.mxu0 %v423
    %1749 = vmatpush1.msra.mxu0 %v422
    %1750 = vmatprep.subr.mxu0 %v427
    %1751 = vmatpush1.msra.mxu0 %v426
    %1752 = vmatprep.subr.mxu0 %v431
    %1753 = vmatpush1.msra.mxu0 %v430
    %1754 = vmatprep.subr.mxu0 %v435
    %1755 = vmatpush1.msra.mxu0 %v434
    %1756 = vmatprep.subr.mxu0 %v439
    %1757 = vmatpush1.msra.mxu0 %v438
    %1758 = vmatprep.subr.mxu0 %v443
    %1759 = vmatpush1.msra.mxu0 %v442
    %1760 = vmatprep.subr.mxu0 %v447
    %1761 = vmatpush1.msra.mxu0 %v446
    %1762 = vmatprep.subr.mxu0 %v451
    %1763 = vmatpush1.msra.mxu0 %v450
    %1764 = vmatprep.subr.mxu0 %v455
    %1765 = vmatpush1.msra.mxu0 %v454
    %1766 = vmatprep.subr.mxu0 %v459
    %1767 = vmatpush1.msra.mxu0 %v458
    %1768 = vmatprep.subr.mxu0 %v463
    %1769 = vmatpush1.msra.mxu0 %v462
    %1770 = vmatprep.subr.mxu0 %v467
    %1771 = vmatpush1.msra.mxu0 %v466
    %1772 = vmatprep.subr.mxu0 %v471
    %1773 = vmatpush1.msra.mxu0 %v470
    %1774 = vmatprep.subr.mxu0 %v475
    %1775 = vmatpush1.msra.mxu0 %v474
    %1776 = vmatprep.subr.mxu0 %v479
    %1777 = vmatpush1.msra.mxu0 %v478
    %1778 = vmatprep.subr.mxu0 %v483
    %1779 = vmatpush1.msra.mxu0 %v482
    %1780 = vmatprep.subr.mxu0 %v487
    %1781 = vmatpush1.msra.mxu0 %v486
    %1782 = vmatprep.subr.mxu0 %v491
    %1783 = vmatpush1.msra.mxu0 %v490
    %1784 = vmatprep.subr.mxu0 %v495
    %1785 = vmatpush1.msra.mxu0 %v494
    %1786 = vmatprep.subr.mxu0 %v499
    %1787 = vmatpush1.msra.mxu0 %v498
    %1788 = vmatprep.subr.mxu0 %v503
    %1789 = vmatpush1.msra.mxu0 %v502
    %1790 = vmatprep.subr.mxu0 %v507
    %1791 = vmatpush1.msra.mxu0 %v506
    %1792 = vmatprep.subr.mxu0 %v511
    %1793 = vmatpush1.msra.mxu0 %v510
    %1794 = vmatprep.subr.mxu0 %v515
    %1795 = vmatpush1.msra.mxu0 %v514
    %1796 = vmatprep.subr.mxu0 %v519
    %1797 = vmatpush1.msra.mxu0 %v518
    %1798 = vmatprep.subr.mxu0 %v523
    %1799 = vmatpush1.msra.mxu0 %v522
    %1800 = vmatprep.subr.mxu0 %v527
    %1801 = vmatpush1.msra.mxu0 %v526
    %1802 = vmatprep.subr.mxu0 %v531
    %1803 = vmatpush1.msra.mxu0 %v530
    %1804 = vmatprep.subr.mxu0 %v535
    %1805 = vmatpush1.msra.mxu0 %v534
    %1806 = vmatprep.subr.mxu0 %v539
    %1807 = vmatpush1.msra.mxu0 %v538
    %1808 = vmatprep.subr.mxu0 %v543
    %1809 = vmatpush1.msra.mxu0 %v542
    %1810 = vmatprep.mubr.f32.mxu0 %v1575
    %1811 = vmatmul.mubr.f32.gmra.mrb[0].mxu0 %v1745
    %v1812 = vpop.f32.mrb[0].mxu0
    %v1813 = vadd.f32 %v551, %v1812
    %v1814 = vpop.f32.mrb[0].mxu0
    %v1815 = vadd.f32 %v555, %v1814
    %1816 = vdwg.mxu0
    %1817 = vmatprep.subr.mxu0 %v421
    %1818 = vmatpush1.msra.mxu0 %v420
    %1819 = vmatprep.subr.mxu0 %v425
    %1820 = vmatpush1.msra.mxu0 %v424
    %1821 = vmatprep.subr.mxu0 %v429
    %1822 = vmatpush1.msra.mxu0 %v428
    %1823 = vmatprep.subr.mxu0 %v433
    %1824 = vmatpush1.msra.mxu0 %v432
    %1825 = vmatprep.subr.mxu0 %v437
    %1826 = vmatpush1.msra.mxu0 %v436
    %1827 = vmatprep.subr.mxu0 %v441
    %1828 = vmatpush1.msra.mxu0 %v440
    %1829 = vmatprep.subr.mxu0 %v445
    %1830 = vmatpush1.msra.mxu0 %v444
    %1831 = vmatprep.subr.mxu0 %v449
    %1832 = vmatpush1.msra.mxu0 %v448
    %1833 = vmatprep.subr.mxu0 %v453
    %1834 = vmatpush1.msra.mxu0 %v452
    %1835 = vmatprep.subr.mxu0 %v457
    %1836 = vmatpush1.msra.mxu0 %v456
    %1837 = vmatprep.subr.mxu0 %v461
    %1838 = vmatpush1.msra.mxu0 %v460
    %1839 = vmatprep.subr.mxu0 %v465
    %1840 = vmatpush1.msra.mxu0 %v464
    %1841 = vmatprep.subr.mxu0 %v469
    %1842 = vmatpush1.msra.mxu0 %v468
    %1843 = vmatprep.subr.mxu0 %v473
    %1844 = vmatpush1.msra.mxu0 %v472
    %1845 = vmatprep.subr.mxu0 %v477
    %1846 = vmatpush1.msra.mxu0 %v476
    %1847 = vmatprep.subr.mxu0 %v481
    %1848 = vmatpush1.msra.mxu0 %v480
    %1849 = vmatprep.subr.mxu0 %v485
    %1850 = vmatpush1.msra.mxu0 %v484
    %1851 = vmatprep.subr.mxu0 %v489
    %1852 = vmatpush1.msra.mxu0 %v488
    %1853 = vmatprep.subr.mxu0 %v493
    %1854 = vmatpush1.msra.mxu0 %v492
    %1855 = vmatprep.subr.mxu0 %v497
    %1856 = vmatpush1.msra.mxu0 %v496
    %1857 = vmatprep.subr.mxu0 %v501
    %1858 = vmatpush1.msra.mxu0 %v500
    %1859 = vmatprep.subr.mxu0 %v505
    %1860 = vmatpush1.msra.mxu0 %v504
    %1861 = vmatprep.subr.mxu0 %v509
    %1862 = vmatpush1.msra.mxu0 %v508
    %1863 = vmatprep.subr.mxu0 %v513
    %1864 = vmatpush1.msra.mxu0 %v512
    %1865 = vmatprep.subr.mxu0 %v517
    %1866 = vmatpush1.msra.mxu0 %v516
    %1867 = vmatprep.subr.mxu0 %v521
    %1868 = vmatpush1.msra.mxu0 %v520
    %1869 = vmatprep.subr.mxu0 %v525
    %1870 = vmatpush1.msra.mxu0 %v524
    %1871 = vmatprep.subr.mxu0 %v529
    %1872 = vmatpush1.msra.mxu0 %v528
    %1873 = vmatprep.subr.mxu0 %v533
    %1874 = vmatpush1.msra.mxu0 %v532
    %1875 = vmatprep.subr.mxu0 %v537
    %1876 = vmatpush1.msra.mxu0 %v536
    %1877 = vmatprep.subr.mxu0 %v541
    %1878 = vmatpush1.msra.mxu0 %v540
    %1879 = vmatprep.subr.mxu0 %v545
    %1880 = vmatpush1.msra.mxu0 %v544
    %1881 = vmatprep.mubr.f32.mxu0 %v1575
    %1882 = vmatmul.mubr.f32.gmra.mrb[0].mxu0 %v1745
    %v1883 = vpop.f32.mrb[0].mxu0
    %v1884 = vadd.f32 %v559, %v1883
    %v1885 = vpop.f32.mrb[0].mxu0
    %v1886 = vadd.f32 %v563, %v1885
    %1887 = vdwg.mxu0
    %v1888 = vxor.u32 %v1813, 2147483648
    %v1889 = vmul.f32 %v1888, 1.442695
    %v1890 = vpow.pop %v1889
    %v1891 = vadd.f32 %v1890, 1.0
    %v1892 = vrcp.pop %v1891
    %v1893 = vmul.f32 1.0, %v1892
    %v1894 = vxor.u32 %v1815, 2147483648
    %v1895 = vmul.f32 %v1894, 1.442695
    %v1896 = vpow.pop %v1895
    %v1897 = vadd.f32 %v1896, 1.0
    %v1898 = vrcp.pop %v1897
    %v1899 = vmul.f32 1.0, %v1898
    %v1900 = vtanh.pop %v1884
    %v1901 = vxor.u32 %v1886, 2147483648
    %v1902 = vmul.f32 %v1901, 1.442695
    %v1903 = vpow.pop %v1902
    %v1904 = vadd.f32 %v1903, 1.0
    %v1905 = vrcp.pop %v1904
    %v1906 = vmul.f32 1.0, %v1905
    %v1907 = vmul.f32 %v1899, %v1573
    %v1908 = vmul.f32 %v1893, %v1900
    %v1909 = vadd.f32 %v1907, %v1908
    %v1910 = vtanh.pop %v1909
    %v1911 = vmul.f32 %v1906, %v1910
    %1912 = vmatprep.subr.mxu0 %v355
    %1913 = vmatpush1.msra.mxu0 %v354
    %1914 = vmatprep.subr.mxu0 %v359
    %1915 = vmatpush1.msra.mxu0 %v358
    %1916 = vmatprep.subr.mxu0 %v363
    %1917 = vmatpush1.msra.mxu0 %v362
    %1918 = vmatprep.subr.mxu0 %v367
    %1919 = vmatpush1.msra.mxu0 %v366
    %1920 = vmatprep.subr.mxu0 %v371
    %1921 = vmatpush1.msra.mxu0 %v370
    %1922 = vmatprep.subr.mxu0 %v375
    %1923 = vmatpush1.msra.mxu0 %v374
    %1924 = vmatprep.subr.mxu0 %v379
    %1925 = vmatpush1.msra.mxu0 %v378
    %1926 = vmatprep.subr.mxu0 %v383
    %1927 = vmatpush1.msra.mxu0 %v382
    %1928 = vmatprep.subr.mxu0 %v387
    %1929 = vmatpush1.msra.mxu0 %v386
    %1930 = vmatprep.subr.mxu0 %v391
    %1931 = vmatpush1.msra.mxu0 %v390
    %1932 = vmatprep.subr.mxu0 %v395
    %1933 = vmatpush1.msra.mxu0 %v394
    %1934 = vmatprep.subr.mxu0 %v399
    %1935 = vmatpush1.msra.mxu0 %v398
    %1936 = vmatprep.subr.mxu0 %v403
    %1937 = vmatpush1.msra.mxu0 %v402
    %1938 = vmatprep.subr.mxu0 %v407
    %1939 = vmatpush1.msra.mxu0 %v406
    %1940 = vmatprep.subr.mxu0 %v411
    %1941 = vmatpush1.msra.mxu0 %v410
    %1942 = vmatprep.subr.mxu0 %v415
    %1943 = vmatpush1.msra.mxu0 %v414
    %1944 = vmatprep.subr.mxu0 0.0
    %1945 = vmatpush1.msra.mxu0 0.0
    %1946 = vmatprep.subr.mxu0 0.0
    %1947 = vmatpush1.msra.mxu0 0.0
    %1948 = vmatprep.subr.mxu0 0.0
    %1949 = vmatpush1.msra.mxu0 0.0
    %1950 = vmatprep.subr.mxu0 0.0
    %1951 = vmatpush1.msra.mxu0 0.0
    %1952 = vmatprep.subr.mxu0 0.0
    %1953 = vmatpush1.msra.mxu0 0.0
    %1954 = vmatprep.subr.mxu0 0.0
    %1955 = vmatpush1.msra.mxu0 0.0
    %1956 = vmatprep.subr.mxu0 0.0
    %1957 = vmatpush1.msra.mxu0 0.0
    %1958 = vmatprep.subr.mxu0 0.0
    %1959 = vmatpush1.msra.mxu0 0.0
    %1960 = vmatprep.subr.mxu0 0.0
    %1961 = vmatpush1.msra.mxu0 0.0
    %1962 = vmatprep.subr.mxu0 0.0
    %1963 = vmatpush1.msra.mxu0 0.0
    %1964 = vmatprep.subr.mxu0 0.0
    %1965 = vmatpush1.msra.mxu0 0.0
    %1966 = vmatprep.subr.mxu0 0.0
    %1967 = vmatpush1.msra.mxu0 0.0
    %1968 = vmatprep.subr.mxu0 0.0
    %1969 = vmatpush1.msra.mxu0 0.0
    %1970 = vmatprep.subr.mxu0 0.0
    %1971 = vmatpush1.msra.mxu0 0.0
    %1972 = vmatprep.subr.mxu0 0.0
    %1973 = vmatpush1.msra.mxu0 0.0
    %1974 = vmatprep.subr.mxu0 0.0
    %1975 = vmatpush1.msra.mxu0 0.0
    %1976 = vmatprep.mubr.f32.mxu0 0.0
    %1977 = vmatmul.mubr.f32.gmra.mrb[0].mxu0 %v1745
    %v1978 = vpop.f32.mrb[0].mxu0
    %v1979 = vadd.f32 0.0, %v1978
    %v1980 = vpop.f32.mrb[0].mxu0
    %v1981 = vadd.f32 0.0, %v1980
    %1982 = vdwg.mxu0
    %1983 = vmatprep.subr.mxu0 %v357
    %1984 = vmatpush1.msra.mxu0 %v356
    %1985 = vmatprep.subr.mxu0 %v361
    %1986 = vmatpush1.msra.mxu0 %v360
    %1987 = vmatprep.subr.mxu0 %v365
    %1988 = vmatpush1.msra.mxu0 %v364
    %1989 = vmatprep.subr.mxu0 %v369
    %1990 = vmatpush1.msra.mxu0 %v368
    %1991 = vmatprep.subr.mxu0 %v373
    %1992 = vmatpush1.msra.mxu0 %v372
    %1993 = vmatprep.subr.mxu0 %v377
    %1994 = vmatpush1.msra.mxu0 %v376
    %1995 = vmatprep.subr.mxu0 %v381
    %1996 = vmatpush1.msra.mxu0 %v380
    %1997 = vmatprep.subr.mxu0 %v385
    %1998 = vmatpush1.msra.mxu0 %v384
    %1999 = vmatprep.subr.mxu0 %v389
    %2000 = vmatpush1.msra.mxu0 %v388
    %2001 = vmatprep.subr.mxu0 %v393
    %2002 = vmatpush1.msra.mxu0 %v392
    %2003 = vmatprep.subr.mxu0 %v397
    %2004 = vmatpush1.msra.mxu0 %v396
    %2005 = vmatprep.subr.mxu0 %v401
    %2006 = vmatpush1.msra.mxu0 %v400
    %2007 = vmatprep.subr.mxu0 %v405
    %2008 = vmatpush1.msra.mxu0 %v404
    %2009 = vmatprep.subr.mxu0 %v409
    %2010 = vmatpush1.msra.mxu0 %v408
    %2011 = vmatprep.subr.mxu0 %v413
    %2012 = vmatpush1.msra.mxu0 %v412
    %2013 = vmatprep.subr.mxu0 %v417
    %2014 = vmatpush1.msra.mxu0 %v416
    %2015 = vmatprep.subr.mxu0 0.0
    %2016 = vmatpush1.msra.mxu0 0.0
    %2017 = vmatprep.subr.mxu0 0.0
    %2018 = vmatpush1.msra.mxu0 0.0
    %2019 = vmatprep.subr.mxu0 0.0
    %2020 = vmatpush1.msra.mxu0 0.0
    %2021 = vmatprep.subr.mxu0 0.0
    %2022 = vmatpush1.msra.mxu0 0.0
    %2023 = vmatprep.subr.mxu0 0.0
    %2024 = vmatpush1.msra.mxu0 0.0
    %2025 = vmatprep.subr.mxu0 0.0
    %2026 = vmatpush1.msra.mxu0 0.0
    %2027 = vmatprep.subr.mxu0 0.0
    %2028 = vmatpush1.msra.mxu0 0.0
    %2029 = vmatprep.subr.mxu0 0.0
    %2030 = vmatpush1.msra.mxu0 0.0
    %2031 = vmatprep.subr.mxu0 0.0
    %2032 = vmatpush1.msra.mxu0 0.0
    %2033 = vmatprep.subr.mxu0 0.0
    %2034 = vmatpush1.msra.mxu0 0.0
    %2035 = vmatprep.subr.mxu0 0.0
    %2036 = vmatpush1.msra.mxu0 0.0
    %2037 = vmatprep.subr.mxu0 0.0
    %2038 = vmatpush1.msra.mxu0 0.0
    %2039 = vmatprep.subr.mxu0 0.0
    %2040 = vmatpush1.msra.mxu0 0.0
    %2041 = vmatprep.subr.mxu0 0.0
    %2042 = vmatpush1.msra.mxu0 0.0
    %2043 = vmatprep.subr.mxu0 0.0
    %2044 = vmatpush1.msra.mxu0 0.0
    %2045 = vmatprep.subr.mxu0 0.0
    %2046 = vmatpush1.msra.mxu0 0.0
    %2047 = vmatprep.mubr.f32.mxu0 0.0
    %2048 = vmatmul.mubr.f32.gmra.mrb[0].mxu0 %v1745
    %v2049 = vpop.f32.mrb[0].mxu0
    %v2050 = vadd.f32 0.0, %v2049
    %v2051 = vpop.f32.mrb[0].mxu0
    %v2052 = vadd.f32 0.0, %v2051
    %2053 = vdwg.mxu0
    %v2054 = vadd.f32 %v219, %v1979
    %v2055 = vadd.f32 %v221, %v1981
    %v2056 = vadd.f32 %v332, %v2050
    %v2057 = vadd.f32 %v334, %v2052
    %v2058 = vxor.u32 %v2054, 2147483648
    %v2059 = vmul.f32 %v2058, 1.442695
    %v2060 = vpow.pop %v2059
    %v2061 = vadd.f32 %v2060, 1.0
    %v2062 = vrcp.pop %v2061
    %v2063 = vmul.f32 1.0, %v2062
    %v2064 = vxor.u32 %v2055, 2147483648
    %v2065 = vmul.f32 %v2064, 1.442695
    %v2066 = vpow.pop %v2065
    %v2067 = vadd.f32 %v2066, 1.0
    %v2068 = vrcp.pop %v2067
    %v2069 = vmul.f32 1.0, %v2068
    %v2070 = vtanh.pop %v2056
    %v2071 = vxor.u32 %v2057, 2147483648
    %v2072 = vmul.f32 %v2071, 1.442695
    %v2073 = vpow.pop %v2072
    %v2074 = vadd.f32 %v2073, 1.0
    %v2075 = vrcp.pop %v2074
    %v2076 = vmul.f32 1.0, %v2075
    %v2077 = vmul.f32 %v2069, %v1743
    %v2078 = vmul.f32 %v2063, %v2070
    %v2079 = vadd.f32 %v2077, %v2078
    %v2080 = vtanh.pop %v2079
    %v2081 = vmul.f32 %v2076, %v2080
    %2082 = vmatprep.subr.mxu0 %v419
    %2083 = vmatpush1.msra.mxu0 %v418
    %2084 = vmatprep.subr.mxu0 %v423
    %2085 = vmatpush1.msra.mxu0 %v422
    %2086 = vmatprep.subr.mxu0 %v427
    %2087 = vmatpush1.msra.mxu0 %v426
    %2088 = vmatprep.subr.mxu0 %v431
    %2089 = vmatpush1.msra.mxu0 %v430
    %2090 = vmatprep.subr.mxu0 %v435
    %2091 = vmatpush1.msra.mxu0 %v434
    %2092 = vmatprep.subr.mxu0 %v439
    %2093 = vmatpush1.msra.mxu0 %v438
    %2094 = vmatprep.subr.mxu0 %v443
    %2095 = vmatpush1.msra.mxu0 %v442
    %2096 = vmatprep.subr.mxu0 %v447
    %2097 = vmatpush1.msra.mxu0 %v446
    %2098 = vmatprep.subr.mxu0 %v451
    %2099 = vmatpush1.msra.mxu0 %v450
    %2100 = vmatprep.subr.mxu0 %v455
    %2101 = vmatpush1.msra.mxu0 %v454
    %2102 = vmatprep.subr.mxu0 %v459
    %2103 = vmatpush1.msra.mxu0 %v458
    %2104 = vmatprep.subr.mxu0 %v463
    %2105 = vmatpush1.msra.mxu0 %v462
    %2106 = vmatprep.subr.mxu0 %v467
    %2107 = vmatpush1.msra.mxu0 %v466
    %2108 = vmatprep.subr.mxu0 %v471
    %2109 = vmatpush1.msra.mxu0 %v470
    %2110 = vmatprep.subr.mxu0 %v475
    %2111 = vmatpush1.msra.mxu0 %v474
    %2112 = vmatprep.subr.mxu0 %v479
    %2113 = vmatpush1.msra.mxu0 %v478
    %2114 = vmatprep.subr.mxu0 %v483
    %2115 = vmatpush1.msra.mxu0 %v482
    %2116 = vmatprep.subr.mxu0 %v487
    %2117 = vmatpush1.msra.mxu0 %v486
    %2118 = vmatprep.subr.mxu0 %v491
    %2119 = vmatpush1.msra.mxu0 %v490
    %2120 = vmatprep.subr.mxu0 %v495
    %2121 = vmatpush1.msra.mxu0 %v494
    %2122 = vmatprep.subr.mxu0 %v499
    %2123 = vmatpush1.msra.mxu0 %v498
    %2124 = vmatprep.subr.mxu0 %v503
    %2125 = vmatpush1.msra.mxu0 %v502
    %2126 = vmatprep.subr.mxu0 %v507
    %2127 = vmatpush1.msra.mxu0 %v506
    %2128 = vmatprep.subr.mxu0 %v511
    %2129 = vmatpush1.msra.mxu0 %v510
    %2130 = vmatprep.subr.mxu0 %v515
    %2131 = vmatpush1.msra.mxu0 %v514
    %2132 = vmatprep.subr.mxu0 %v519
    %2133 = vmatpush1.msra.mxu0 %v518
    %2134 = vmatprep.subr.mxu0 %v523
    %2135 = vmatpush1.msra.mxu0 %v522
    %2136 = vmatprep.subr.mxu0 %v527
    %2137 = vmatpush1.msra.mxu0 %v526
    %2138 = vmatprep.subr.mxu0 %v531
    %2139 = vmatpush1.msra.mxu0 %v530
    %2140 = vmatprep.subr.mxu0 %v535
    %2141 = vmatpush1.msra.mxu0 %v534
    %2142 = vmatprep.subr.mxu0 %v539
    %2143 = vmatpush1.msra.mxu0 %v538
    %2144 = vmatprep.subr.mxu0 %v543
    %2145 = vmatpush1.msra.mxu0 %v542
    %2146 = vmatprep.mubr.f32.mxu0 %v1911
    %2147 = vmatmul.mubr.f32.gmra.mrb[0].mxu0 %v2081
    %v2148 = vpop.f32.mrb[0].mxu0
    %v2149 = vadd.f32 %v551, %v2148
    %v2150 = vpop.f32.mrb[0].mxu0
    %v2151 = vadd.f32 %v555, %v2150
    %2152 = vdwg.mxu0
    %2153 = vmatprep.subr.mxu0 %v421
    %2154 = vmatpush1.msra.mxu0 %v420
    %2155 = vmatprep.subr.mxu0 %v425
    %2156 = vmatpush1.msra.mxu0 %v424
    %2157 = vmatprep.subr.mxu0 %v429
    %2158 = vmatpush1.msra.mxu0 %v428
    %2159 = vmatprep.subr.mxu0 %v433
    %2160 = vmatpush1.msra.mxu0 %v432
    %2161 = vmatprep.subr.mxu0 %v437
    %2162 = vmatpush1.msra.mxu0 %v436
    %2163 = vmatprep.subr.mxu0 %v441
    %2164 = vmatpush1.msra.mxu0 %v440
    %2165 = vmatprep.subr.mxu0 %v445
    %2166 = vmatpush1.msra.mxu0 %v444
    %2167 = vmatprep.subr.mxu0 %v449
    %2168 = vmatpush1.msra.mxu0 %v448
    %2169 = vmatprep.subr.mxu0 %v453
    %2170 = vmatpush1.msra.mxu0 %v452
    %2171 = vmatprep.subr.mxu0 %v457
    %2172 = vmatpush1.msra.mxu0 %v456
    %2173 = vmatprep.subr.mxu0 %v461
    %2174 = vmatpush1.msra.mxu0 %v460
    %2175 = vmatprep.subr.mxu0 %v465
    %2176 = vmatpush1.msra.mxu0 %v464
    %2177 = vmatprep.subr.mxu0 %v469
    %2178 = vmatpush1.msra.mxu0 %v468
    %2179 = vmatprep.subr.mxu0 %v473
    %2180 = vmatpush1.msra.mxu0 %v472
    %2181 = vmatprep.subr.mxu0 %v477
    %2182 = vmatpush1.msra.mxu0 %v476
    %2183 = vmatprep.subr.mxu0 %v481
    %2184 = vmatpush1.msra.mxu0 %v480
    %2185 = vmatprep.subr.mxu0 %v485
    %2186 = vmatpush1.msra.mxu0 %v484
    %2187 = vmatprep.subr.mxu0 %v489
    %2188 = vmatpush1.msra.mxu0 %v488
    %2189 = vmatprep.subr.mxu0 %v493
    %2190 = vmatpush1.msra.mxu0 %v492
    %2191 = vmatprep.subr.mxu0 %v497
    %2192 = vmatpush1.msra.mxu0 %v496
    %2193 = vmatprep.subr.mxu0 %v501
    %2194 = vmatpush1.msra.mxu0 %v500
    %2195 = vmatprep.subr.mxu0 %v505
    %2196 = vmatpush1.msra.mxu0 %v504
    %2197 = vmatprep.subr.mxu0 %v509
    %2198 = vmatpush1.msra.mxu0 %v508
    %2199 = vmatprep.subr.mxu0 %v513
    %2200 = vmatpush1.msra.mxu0 %v512
    %2201 = vmatprep.subr.mxu0 %v517
    %2202 = vmatpush1.msra.mxu0 %v516
    %2203 = vmatprep.subr.mxu0 %v521
    %2204 = vmatpush1.msra.mxu0 %v520
    %2205 = vmatprep.subr.mxu0 %v525
    %2206 = vmatpush1.msra.mxu0 %v524
    %2207 = vmatprep.subr.mxu0 %v529
    %2208 = vmatpush1.msra.mxu0 %v528
    %2209 = vmatprep.subr.mxu0 %v533
    %2210 = vmatpush1.msra.mxu0 %v532
    %2211 = vmatprep.subr.mxu0 %v537
    %2212 = vmatpush1.msra.mxu0 %v536
    %2213 = vmatprep.subr.mxu0 %v541
    %2214 = vmatpush1.msra.mxu0 %v540
    %2215 = vmatprep.subr.mxu0 %v545
    %2216 = vmatpush1.msra.mxu0 %v544
    %2217 = vmatprep.mubr.f32.mxu0 %v1911
    %2218 = vmatmul.mubr.f32.gmra.mrb[0].mxu0 %v2081
    %v2219 = vpop.f32.mrb[0].mxu0
    %v2220 = vadd.f32 %v559, %v2219
    %v2221 = vpop.f32.mrb[0].mxu0
    %v2222 = vadd.f32 %v563, %v2221
    %2223 = vdwg.mxu0
    %v2224 = vxor.u32 %v2149, 2147483648
    %v2225 = vmul.f32 %v2224, 1.442695
    %v2226 = vpow.pop %v2225
    %v2227 = vadd.f32 %v2226, 1.0
    %v2228 = vrcp.pop %v2227
    %v2229 = vmul.f32 1.0, %v2228
    %v2230 = vxor.u32 %v2151, 2147483648
    %v2231 = vmul.f32 %v2230, 1.442695
    %v2232 = vpow.pop %v2231
    %v2233 = vadd.f32 %v2232, 1.0
    %v2234 = vrcp.pop %v2233
    %v2235 = vmul.f32 1.0, %v2234
    %v2236 = vtanh.pop %v2220
    %v2237 = vxor.u32 %v2222, 2147483648
    %v2238 = vmul.f32 %v2237, 1.442695
    %v2239 = vpow.pop %v2238
    %v2240 = vadd.f32 %v2239, 1.0
    %v2241 = vrcp.pop %v2240
    %v2242 = vmul.f32 1.0, %v2241
    %v2243 = vmul.f32 %v2235, %v1909
    %v2244 = vmul.f32 %v2229, %v2236
    %v2245 = vadd.f32 %v2243, %v2244
    %v2246 = vtanh.pop %v2245
    %v2247 = vmul.f32 %v2242, %v2246
    %2248 = vmatprep.subr.mxu0 %v355
    %2249 = vmatpush1.msra.mxu0 %v354
    %2250 = vmatprep.subr.mxu0 %v359
    %2251 = vmatpush1.msra.mxu0 %v358
    %2252 = vmatprep.subr.mxu0 %v363
    %2253 = vmatpush1.msra.mxu0 %v362
    %2254 = vmatprep.subr.mxu0 %v367
    %2255 = vmatpush1.msra.mxu0 %v366
    %2256 = vmatprep.subr.mxu0 %v371
    %2257 = vmatpush1.msra.mxu0 %v370
    %2258 = vmatprep.subr.mxu0 %v375
    %2259 = vmatpush1.msra.mxu0 %v374
    %2260 = vmatprep.subr.mxu0 %v379
    %2261 = vmatpush1.msra.mxu0 %v378
    %2262 = vmatprep.subr.mxu0 %v383
    %2263 = vmatpush1.msra.mxu0 %v382
    %2264 = vmatprep.subr.mxu0 %v387
    %2265 = vmatpush1.msra.mxu0 %v386
    %2266 = vmatprep.subr.mxu0 %v391
    %2267 = vmatpush1.msra.mxu0 %v390
    %2268 = vmatprep.subr.mxu0 %v395
    %2269 = vmatpush1.msra.mxu0 %v394
    %2270 = vmatprep.subr.mxu0 %v399
    %2271 = vmatpush1.msra.mxu0 %v398
    %2272 = vmatprep.subr.mxu0 %v403
    %2273 = vmatpush1.msra.mxu0 %v402
    %2274 = vmatprep.subr.mxu0 %v407
    %2275 = vmatpush1.msra.mxu0 %v406
    %2276 = vmatprep.subr.mxu0 %v411
    %2277 = vmatpush1.msra.mxu0 %v410
    %2278 = vmatprep.subr.mxu0 %v415
    %2279 = vmatpush1.msra.mxu0 %v414
    %2280 = vmatprep.subr.mxu0 0.0
    %2281 = vmatpush1.msra.mxu0 0.0
    %2282 = vmatprep.subr.mxu0 0.0
    %2283 = vmatpush1.msra.mxu0 0.0
    %2284 = vmatprep.subr.mxu0 0.0
    %2285 = vmatpush1.msra.mxu0 0.0
    %2286 = vmatprep.subr.mxu0 0.0
    %2287 = vmatpush1.msra.mxu0 0.0
    %2288 = vmatprep.subr.mxu0 0.0
    %2289 = vmatpush1.msra.mxu0 0.0
    %2290 = vmatprep.subr.mxu0 0.0
    %2291 = vmatpush1.msra.mxu0 0.0
    %2292 = vmatprep.subr.mxu0 0.0
    %2293 = vmatpush1.msra.mxu0 0.0
    %2294 = vmatprep.subr.mxu0 0.0
    %2295 = vmatpush1.msra.mxu0 0.0
    %2296 = vmatprep.subr.mxu0 0.0
    %2297 = vmatpush1.msra.mxu0 0.0
    %2298 = vmatprep.subr.mxu0 0.0
    %2299 = vmatpush1.msra.mxu0 0.0
    %2300 = vmatprep.subr.mxu0 0.0
    %2301 = vmatpush1.msra.mxu0 0.0
    %2302 = vmatprep.subr.mxu0 0.0
    %2303 = vmatpush1.msra.mxu0 0.0
    %2304 = vmatprep.subr.mxu0 0.0
    %2305 = vmatpush1.msra.mxu0 0.0
    %2306 = vmatprep.subr.mxu0 0.0
    %2307 = vmatpush1.msra.mxu0 0.0
    %2308 = vmatprep.subr.mxu0 0.0
    %2309 = vmatpush1.msra.mxu0 0.0
    %2310 = vmatprep.subr.mxu0 0.0
    %2311 = vmatpush1.msra.mxu0 0.0
    %2312 = vmatprep.mubr.f32.mxu0 0.0
    %2313 = vmatmul.mubr.f32.gmra.mrb[0].mxu0 %v2081
    %v2314 = vpop.f32.mrb[0].mxu0
    %v2315 = vadd.f32 0.0, %v2314
    %v2316 = vpop.f32.mrb[0].mxu0
    %v2317 = vadd.f32 0.0, %v2316
    %2318 = vdwg.mxu0
    %2319 = vmatprep.subr.mxu0 %v357
    %2320 = vmatpush1.msra.mxu0 %v356
    %2321 = vmatprep.subr.mxu0 %v361
    %2322 = vmatpush1.msra.mxu0 %v360
    %2323 = vmatprep.subr.mxu0 %v365
    %2324 = vmatpush1.msra.mxu0 %v364
    %2325 = vmatprep.subr.mxu0 %v369
    %2326 = vmatpush1.msra.mxu0 %v368
    %2327 = vmatprep.subr.mxu0 %v373
    %2328 = vmatpush1.msra.mxu0 %v372
    %2329 = vmatprep.subr.mxu0 %v377
    %2330 = vmatpush1.msra.mxu0 %v376
    %2331 = vmatprep.subr.mxu0 %v381
    %2332 = vmatpush1.msra.mxu0 %v380
    %2333 = vmatprep.subr.mxu0 %v385
    %2334 = vmatpush1.msra.mxu0 %v384
    %2335 = vmatprep.subr.mxu0 %v389
    %2336 = vmatpush1.msra.mxu0 %v388
    %2337 = vmatprep.subr.mxu0 %v393
    %2338 = vmatpush1.msra.mxu0 %v392
    %2339 = vmatprep.subr.mxu0 %v397
    %2340 = vmatpush1.msra.mxu0 %v396
    %2341 = vmatprep.subr.mxu0 %v401
    %2342 = vmatpush1.msra.mxu0 %v400
    %2343 = vmatprep.subr.mxu0 %v405
    %2344 = vmatpush1.msra.mxu0 %v404
    %2345 = vmatprep.subr.mxu0 %v409
    %2346 = vmatpush1.msra.mxu0 %v408
    %2347 = vmatprep.subr.mxu0 %v413
    %2348 = vmatpush1.msra.mxu0 %v412
    %2349 = vmatprep.subr.mxu0 %v417
    %2350 = vmatpush1.msra.mxu0 %v416
    %2351 = vmatprep.subr.mxu0 0.0
    %2352 = vmatpush1.msra.mxu0 0.0
    %2353 = vmatprep.subr.mxu0 0.0
    %2354 = vmatpush1.msra.mxu0 0.0
    %2355 = vmatprep.subr.mxu0 0.0
    %2356 = vmatpush1.msra.mxu0 0.0
    %2357 = vmatprep.subr.mxu0 0.0
    %2358 = vmatpush1.msra.mxu0 0.0
    %2359 = vmatprep.subr.mxu0 0.0
    %2360 = vmatpush1.msra.mxu0 0.0
    %2361 = vmatprep.subr.mxu0 0.0
    %2362 = vmatpush1.msra.mxu0 0.0
    %2363 = vmatprep.subr.mxu0 0.0
    %2364 = vmatpush1.msra.mxu0 0.0
    %2365 = vmatprep.subr.mxu0 0.0
    %2366 = vmatpush1.msra.mxu0 0.0
    %2367 = vmatprep.subr.mxu0 0.0
    %2368 = vmatpush1.msra.mxu0 0.0
    %2369 = vmatprep.subr.mxu0 0.0
    %2370 = vmatpush1.msra.mxu0 0.0
    %2371 = vmatprep.subr.mxu0 0.0
    %2372 = vmatpush1.msra.mxu0 0.0
    %2373 = vmatprep.subr.mxu0 0.0
    %2374 = vmatpush1.msra.mxu0 0.0
    %2375 = vmatprep.subr.mxu0 0.0
    %2376 = vmatpush1.msra.mxu0 0.0
    %2377 = vmatprep.subr.mxu0 0.0
    %2378 = vmatpush1.msra.mxu0 0.0
    %2379 = vmatprep.subr.mxu0 0.0
    %2380 = vmatpush1.msra.mxu0 0.0
    %2381 = vmatprep.subr.mxu0 0.0
    %2382 = vmatpush1.msra.mxu0 0.0
    %2383 = vmatprep.mubr.f32.mxu0 0.0
    %2384 = vmatmul.mubr.f32.gmra.mrb[0].mxu0 %v2081
    %v2385 = vpop.f32.mrb[0].mxu0
    %v2386 = vadd.f32 0.0, %v2385
    %v2387 = vpop.f32.mrb[0].mxu0
    %v2388 = vadd.f32 0.0, %v2387
    %2389 = vdwg.mxu0
    %v2390 = vadd.f32 %v225, %v2315
    %v2391 = vadd.f32 %v227, %v2317
    %v2392 = vadd.f32 %v338, %v2386
    %v2393 = vadd.f32 %v340, %v2388
    %v2394 = vxor.u32 %v2390, 2147483648
    %v2395 = vmul.f32 %v2394, 1.442695
    %v2396 = vpow.pop %v2395
    %v2397 = vadd.f32 %v2396, 1.0
    %v2398 = vrcp.pop %v2397
    %v2399 = vmul.f32 1.0, %v2398
    %v2400 = vxor.u32 %v2391, 2147483648
    %v2401 = vmul.f32 %v2400, 1.442695
    %v2402 = vpow.pop %v2401
    %v2403 = vadd.f32 %v2402, 1.0
    %v2404 = vrcp.pop %v2403
    %v2405 = vmul.f32 1.0, %v2404
    %v2406 = vtanh.pop %v2392
    %v2407 = vxor.u32 %v2393, 2147483648
    %v2408 = vmul.f32 %v2407, 1.442695
    %v2409 = vpow.pop %v2408
    %v2410 = vadd.f32 %v2409, 1.0
    %v2411 = vrcp.pop %v2410
    %v2412 = vmul.f32 1.0, %v2411
    %v2413 = vmul.f32 %v2405, %v2079
    %v2414 = vmul.f32 %v2399, %v2406
    %v2415 = vadd.f32 %v2413, %v2414
    %v2416 = vtanh.pop %v2415
    %v2417 = vmul.f32 %v2412, %v2416
    %2418 = vmatprep.subr.mxu0 %v419
    %2419 = vmatpush1.msra.mxu0 %v418
    %2420 = vmatprep.subr.mxu0 %v423
    %2421 = vmatpush1.msra.mxu0 %v422
    %2422 = vmatprep.subr.mxu0 %v427
    %2423 = vmatpush1.msra.mxu0 %v426
    %2424 = vmatprep.subr.mxu0 %v431
    %2425 = vmatpush1.msra.mxu0 %v430
    %2426 = vmatprep.subr.mxu0 %v435
    %2427 = vmatpush1.msra.mxu0 %v434
    %2428 = vmatprep.subr.mxu0 %v439
    %2429 = vmatpush1.msra.mxu0 %v438
    %2430 = vmatprep.subr.mxu0 %v443
    %2431 = vmatpush1.msra.mxu0 %v442
    %2432 = vmatprep.subr.mxu0 %v447
    %2433 = vmatpush1.msra.mxu0 %v446
    %2434 = vmatprep.subr.mxu0 %v451
    %2435 = vmatpush1.msra.mxu0 %v450
    %2436 = vmatprep.subr.mxu0 %v455
    %2437 = vmatpush1.msra.mxu0 %v454
    %2438 = vmatprep.subr.mxu0 %v459
    %2439 = vmatpush1.msra.mxu0 %v458
    %2440 = vmatprep.subr.mxu0 %v463
    %2441 = vmatpush1.msra.mxu0 %v462
    %2442 = vmatprep.subr.mxu0 %v467
    %2443 = vmatpush1.msra.mxu0 %v466
    %2444 = vmatprep.subr.mxu0 %v471
    %2445 = vmatpush1.msra.mxu0 %v470
    %2446 = vmatprep.subr.mxu0 %v475
    %2447 = vmatpush1.msra.mxu0 %v474
    %2448 = vmatprep.subr.mxu0 %v479
    %2449 = vmatpush1.msra.mxu0 %v478
    %2450 = vmatprep.subr.mxu0 %v483
    %2451 = vmatpush1.msra.mxu0 %v482
    %2452 = vmatprep.subr.mxu0 %v487
    %2453 = vmatpush1.msra.mxu0 %v486
    %2454 = vmatprep.subr.mxu0 %v491
    %2455 = vmatpush1.msra.mxu0 %v490
    %2456 = vmatprep.subr.mxu0 %v495
    %2457 = vmatpush1.msra.mxu0 %v494
    %2458 = vmatprep.subr.mxu0 %v499
    %2459 = vmatpush1.msra.mxu0 %v498
    %2460 = vmatprep.subr.mxu0 %v503
    %2461 = vmatpush1.msra.mxu0 %v502
    %2462 = vmatprep.subr.mxu0 %v507
    %2463 = vmatpush1.msra.mxu0 %v506
    %2464 = vmatprep.subr.mxu0 %v511
    %2465 = vmatpush1.msra.mxu0 %v510
    %2466 = vmatprep.subr.mxu0 %v515
    %2467 = vmatpush1.msra.mxu0 %v514
    %2468 = vmatprep.subr.mxu0 %v519
    %2469 = vmatpush1.msra.mxu0 %v518
    %2470 = vmatprep.subr.mxu0 %v523
    %2471 = vmatpush1.msra.mxu0 %v522
    %2472 = vmatprep.subr.mxu0 %v527
    %2473 = vmatpush1.msra.mxu0 %v526
    %2474 = vmatprep.subr.mxu0 %v531
    %2475 = vmatpush1.msra.mxu0 %v530
    %2476 = vmatprep.subr.mxu0 %v535
    %2477 = vmatpush1.msra.mxu0 %v534
    %2478 = vmatprep.subr.mxu0 %v539
    %2479 = vmatpush1.msra.mxu0 %v538
    %2480 = vmatprep.subr.mxu0 %v543
    %2481 = vmatpush1.msra.mxu0 %v542
    %2482 = vmatprep.mubr.f32.mxu0 %v2247
    %2483 = vmatmul.mubr.f32.gmra.mrb[0].mxu0 %v2417
    %v2484 = vpop.f32.mrb[0].mxu0
    %v2485 = vadd.f32 %v551, %v2484
    %v2486 = vpop.f32.mrb[0].mxu0
    %v2487 = vadd.f32 %v555, %v2486
    %2488 = vdwg.mxu0
    %2489 = vmatprep.subr.mxu0 %v421
    %2490 = vmatpush1.msra.mxu0 %v420
    %2491 = vmatprep.subr.mxu0 %v425
    %2492 = vmatpush1.msra.mxu0 %v424
    %2493 = vmatprep.subr.mxu0 %v429
    %2494 = vmatpush1.msra.mxu0 %v428
    %2495 = vmatprep.subr.mxu0 %v433
    %2496 = vmatpush1.msra.mxu0 %v432
    %2497 = vmatprep.subr.mxu0 %v437
    %2498 = vmatpush1.msra.mxu0 %v436
    %2499 = vmatprep.subr.mxu0 %v441
    %2500 = vmatpush1.msra.mxu0 %v440
    %2501 = vmatprep.subr.mxu0 %v445
    %2502 = vmatpush1.msra.mxu0 %v444
    %2503 = vmatprep.subr.mxu0 %v449
    %2504 = vmatpush1.msra.mxu0 %v448
    %2505 = vmatprep.subr.mxu0 %v453
    %2506 = vmatpush1.msra.mxu0 %v452
    %2507 = vmatprep.subr.mxu0 %v457
    %2508 = vmatpush1.msra.mxu0 %v456
    %2509 = vmatprep.subr.mxu0 %v461
    %2510 = vmatpush1.msra.mxu0 %v460
    %2511 = vmatprep.subr.mxu0 %v465
    %2512 = vmatpush1.msra.mxu0 %v464
    %2513 = vmatprep.subr.mxu0 %v469
    %2514 = vmatpush1.msra.mxu0 %v468
    %2515 = vmatprep.subr.mxu0 %v473
    %2516 = vmatpush1.msra.mxu0 %v472
    %2517 = vmatprep.subr.mxu0 %v477
    %2518 = vmatpush1.msra.mxu0 %v476
    %2519 = vmatprep.subr.mxu0 %v481
    %2520 = vmatpush1.msra.mxu0 %v480
    %2521 = vmatprep.subr.mxu0 %v485
    %2522 = vmatpush1.msra.mxu0 %v484
    %2523 = vmatprep.subr.mxu0 %v489
    %2524 = vmatpush1.msra.mxu0 %v488
    %2525 = vmatprep.subr.mxu0 %v493
    %2526 = vmatpush1.msra.mxu0 %v492
    %2527 = vmatprep.subr.mxu0 %v497
    %2528 = vmatpush1.msra.mxu0 %v496
    %2529 = vmatprep.subr.mxu0 %v501
    %2530 = vmatpush1.msra.mxu0 %v500
    %2531 = vmatprep.subr.mxu0 %v505
    %2532 = vmatpush1.msra.mxu0 %v504
    %2533 = vmatprep.subr.mxu0 %v509
    %2534 = vmatpush1.msra.mxu0 %v508
    %2535 = vmatprep.subr.mxu0 %v513
    %2536 = vmatpush1.msra.mxu0 %v512
    %2537 = vmatprep.subr.mxu0 %v517
    %2538 = vmatpush1.msra.mxu0 %v516
    %2539 = vmatprep.subr.mxu0 %v521
    %2540 = vmatpush1.msra.mxu0 %v520
    %2541 = vmatprep.subr.mxu0 %v525
    %2542 = vmatpush1.msra.mxu0 %v524
    %2543 = vmatprep.subr.mxu0 %v529
    %2544 = vmatpush1.msra.mxu0 %v528
    %2545 = vmatprep.subr.mxu0 %v533
    %2546 = vmatpush1.msra.mxu0 %v532
    %2547 = vmatprep.subr.mxu0 %v537
    %2548 = vmatpush1.msra.mxu0 %v536
    %2549 = vmatprep.subr.mxu0 %v541
    %2550 = vmatpush1.msra.mxu0 %v540
    %2551 = vmatprep.subr.mxu0 %v545
    %2552 = vmatpush1.msra.mxu0 %v544
    %2553 = vmatprep.mubr.f32.mxu0 %v2247
    %2554 = vmatmul.mubr.f32.gmra.mrb[0].mxu0 %v2417
    %v2555 = vpop.f32.mrb[0].mxu0
    %v2556 = vadd.f32 %v559, %v2555
    %v2557 = vpop.f32.mrb[0].mxu0
    %v2558 = vadd.f32 %v563, %v2557
    %2559 = vdwg.mxu0
    %v2560 = vxor.u32 %v2485, 2147483648
    %v2561 = vmul.f32 %v2560, 1.442695
    %v2562 = vpow.pop %v2561
    %v2563 = vadd.f32 %v2562, 1.0
    %v2564 = vrcp.pop %v2563
    %v2565 = vmul.f32 1.0, %v2564
    %v2566 = vxor.u32 %v2487, 2147483648
    %v2567 = vmul.f32 %v2566, 1.442695
    %v2568 = vpow.pop %v2567
    %v2569 = vadd.f32 %v2568, 1.0
    %v2570 = vrcp.pop %v2569
    %v2571 = vmul.f32 1.0, %v2570
    %v2572 = vtanh.pop %v2556
    %v2573 = vxor.u32 %v2558, 2147483648
    %v2574 = vmul.f32 %v2573, 1.442695
    %v2575 = vpow.pop %v2574
    %v2576 = vadd.f32 %v2575, 1.0
    %v2577 = vrcp.pop %v2576
    %v2578 = vmul.f32 1.0, %v2577
    %v2579 = vmul.f32 %v2571, %v2245
    %v2580 = vmul.f32 %v2565, %v2572
    %v2581 = vadd.f32 %v2579, %v2580
    %v2582 = vtanh.pop %v2581
    %v2583 = vmul.f32 %v2578, %v2582
    %2584 = vmatprep.subr.mxu0 %v355
    %2585 = vmatpush1.msra.mxu0 %v354
    %2586 = vmatprep.subr.mxu0 %v359
    %2587 = vmatpush1.msra.mxu0 %v358
    %2588 = vmatprep.subr.mxu0 %v363
    %2589 = vmatpush1.msra.mxu0 %v362
    %2590 = vmatprep.subr.mxu0 %v367
    %2591 = vmatpush1.msra.mxu0 %v366
    %2592 = vmatprep.subr.mxu0 %v371
    %2593 = vmatpush1.msra.mxu0 %v370
    %2594 = vmatprep.subr.mxu0 %v375
    %2595 = vmatpush1.msra.mxu0 %v374
    %2596 = vmatprep.subr.mxu0 %v379
    %2597 = vmatpush1.msra.mxu0 %v378
    %2598 = vmatprep.subr.mxu0 %v383
    %2599 = vmatpush1.msra.mxu0 %v382
    %2600 = vmatprep.subr.mxu0 %v387
    %2601 = vmatpush1.msra.mxu0 %v386
    %2602 = vmatprep.subr.mxu0 %v391
    %2603 = vmatpush1.msra.mxu0 %v390
    %2604 = vmatprep.subr.mxu0 %v395
    %2605 = vmatpush1.msra.mxu0 %v394
    %2606 = vmatprep.subr.mxu0 %v399
    %2607 = vmatpush1.msra.mxu0 %v398
    %2608 = vmatprep.subr.mxu0 %v403
    %2609 = vmatpush1.msra.mxu0 %v402
    %2610 = vmatprep.subr.mxu0 %v407
    %2611 = vmatpush1.msra.mxu0 %v406
    %2612 = vmatprep.subr.mxu0 %v411
    %2613 = vmatpush1.msra.mxu0 %v410
    %2614 = vmatprep.subr.mxu0 %v415
    %2615 = vmatpush1.msra.mxu0 %v414
    %2616 = vmatprep.subr.mxu0 0.0
    %2617 = vmatpush1.msra.mxu0 0.0
    %2618 = vmatprep.subr.mxu0 0.0
    %2619 = vmatpush1.msra.mxu0 0.0
    %2620 = vmatprep.subr.mxu0 0.0
    %2621 = vmatpush1.msra.mxu0 0.0
    %2622 = vmatprep.subr.mxu0 0.0
    %2623 = vmatpush1.msra.mxu0 0.0
    %2624 = vmatprep.subr.mxu0 0.0
    %2625 = vmatpush1.msra.mxu0 0.0
    %2626 = vmatprep.subr.mxu0 0.0
    %2627 = vmatpush1.msra.mxu0 0.0
    %2628 = vmatprep.subr.mxu0 0.0
    %2629 = vmatpush1.msra.mxu0 0.0
    %2630 = vmatprep.subr.mxu0 0.0
    %2631 = vmatpush1.msra.mxu0 0.0
    %2632 = vmatprep.subr.mxu0 0.0
    %2633 = vmatpush1.msra.mxu0 0.0
    %2634 = vmatprep.subr.mxu0 0.0
    %2635 = vmatpush1.msra.mxu0 0.0
    %2636 = vmatprep.subr.mxu0 0.0
    %2637 = vmatpush1.msra.mxu0 0.0
    %2638 = vmatprep.subr.mxu0 0.0
    %2639 = vmatpush1.msra.mxu0 0.0
    %2640 = vmatprep.subr.mxu0 0.0
    %2641 = vmatpush1.msra.mxu0 0.0
    %2642 = vmatprep.subr.mxu0 0.0
    %2643 = vmatpush1.msra.mxu0 0.0
    %2644 = vmatprep.subr.mxu0 0.0
    %2645 = vmatpush1.msra.mxu0 0.0
    %2646 = vmatprep.subr.mxu0 0.0
    %2647 = vmatpush1.msra.mxu0 0.0
    %2648 = vmatprep.mubr.f32.mxu0 0.0
    %2649 = vmatmul.mubr.f32.gmra.mrb[0].mxu0 %v2417
    %v2650 = vpop.f32.mrb[0].mxu0
    %v2651 = vadd.f32 0.0, %v2650
    %v2652 = vpop.f32.mrb[0].mxu0
    %v2653 = vadd.f32 0.0, %v2652
    %2654 = vdwg.mxu0
    %2655 = vmatprep.subr.mxu0 %v357
    %2656 = vmatpush1.msra.mxu0 %v356
    %2657 = vmatprep.subr.mxu0 %v361
    %2658 = vmatpush1.msra.mxu0 %v360
    %2659 = vmatprep.subr.mxu0 %v365
    %2660 = vmatpush1.msra.mxu0 %v364
    %2661 = vmatprep.subr.mxu0 %v369
    %2662 = vmatpush1.msra.mxu0 %v368
    %2663 = vmatprep.subr.mxu0 %v373
    %2664 = vmatpush1.msra.mxu0 %v372
    %2665 = vmatprep.subr.mxu0 %v377
    %2666 = vmatpush1.msra.mxu0 %v376
    %2667 = vmatprep.subr.mxu0 %v381
    %2668 = vmatpush1.msra.mxu0 %v380
    %2669 = vmatprep.subr.mxu0 %v385
    %2670 = vmatpush1.msra.mxu0 %v384
    %2671 = vmatprep.subr.mxu0 %v389
    %2672 = vmatpush1.msra.mxu0 %v388
    %2673 = vmatprep.subr.mxu0 %v393
    %2674 = vmatpush1.msra.mxu0 %v392
    %2675 = vmatprep.subr.mxu0 %v397
    %2676 = vmatpush1.msra.mxu0 %v396
    %2677 = vmatprep.subr.mxu0 %v401
    %2678 = vmatpush1.msra.mxu0 %v400
    %2679 = vmatprep.subr.mxu0 %v405
    %2680 = vmatpush1.msra.mxu0 %v404
    %2681 = vmatprep.subr.mxu0 %v409
    %2682 = vmatpush1.msra.mxu0 %v408
    %2683 = vmatprep.subr.mxu0 %v413
    %2684 = vmatpush1.msra.mxu0 %v412
    %2685 = vmatprep.subr.mxu0 %v417
    %2686 = vmatpush1.msra.mxu0 %v416
    %2687 = vmatprep.subr.mxu0 0.0
    %2688 = vmatpush1.msra.mxu0 0.0
    %2689 = vmatprep.subr.mxu0 0.0
    %2690 = vmatpush1.msra.mxu0 0.0
    %2691 = vmatprep.subr.mxu0 0.0
    %2692 = vmatpush1.msra.mxu0 0.0
    %2693 = vmatprep.subr.mxu0 0.0
    %2694 = vmatpush1.msra.mxu0 0.0
    %2695 = vmatprep.subr.mxu0 0.0
    %2696 = vmatpush1.msra.mxu0 0.0
    %2697 = vmatprep.subr.mxu0 0.0
    %2698 = vmatpush1.msra.mxu0 0.0
    %2699 = vmatprep.subr.mxu0 0.0
    %2700 = vmatpush1.msra.mxu0 0.0
    %2701 = vmatprep.subr.mxu0 0.0
    %2702 = vmatpush1.msra.mxu0 0.0
    %2703 = vmatprep.subr.mxu0 0.0
    %2704 = vmatpush1.msra.mxu0 0.0
    %2705 = vmatprep.subr.mxu0 0.0
    %2706 = vmatpush1.msra.mxu0 0.0
    %2707 = vmatprep.subr.mxu0 0.0
    %2708 = vmatpush1.msra.mxu0 0.0
    %2709 = vmatprep.subr.mxu0 0.0
    %2710 = vmatpush1.msra.mxu0 0.0
    %2711 = vmatprep.subr.mxu0 0.0
    %2712 = vmatpush1.msra.mxu0 0.0
    %2713 = vmatprep.subr.mxu0 0.0
    %2714 = vmatpush1.msra.mxu0 0.0
    %2715 = vmatprep.subr.mxu0 0.0
    %2716 = vmatpush1.msra.mxu0 0.0
    %2717 = vmatprep.subr.mxu0 0.0
    %2718 = vmatpush1.msra.mxu0 0.0
    %2719 = vmatprep.mubr.f32.mxu0 0.0
    %2720 = vmatmul.mubr.f32.gmra.mrb[0].mxu0 %v2417
    %v2721 = vpop.f32.mrb[0].mxu0
    %v2722 = vadd.f32 0.0, %v2721
    %v2723 = vpop.f32.mrb[0].mxu0
    %v2724 = vadd.f32 0.0, %v2723
    %2725 = vdwg.mxu0
    %v2726 = vadd.f32 %v231, %v2651
    %v2727 = vadd.f32 %v233, %v2653
    %v2728 = vadd.f32 %v344, %v2722
    %v2729 = vadd.f32 %v346, %v2724
    %v2730 = vxor.u32 %v2726, 2147483648
    %v2731 = vmul.f32 %v2730, 1.442695
    %v2732 = vpow.pop %v2731
    %v2733 = vadd.f32 %v2732, 1.0
    %v2734 = vrcp.pop %v2733
    %v2735 = vmul.f32 1.0, %v2734
    %v2736 = vxor.u32 %v2727, 2147483648
    %v2737 = vmul.f32 %v2736, 1.442695
    %v2738 = vpow.pop %v2737
    %v2739 = vadd.f32 %v2738, 1.0
    %v2740 = vrcp.pop %v2739
    %v2741 = vmul.f32 1.0, %v2740
    %v2742 = vtanh.pop %v2728
    %v2743 = vxor.u32 %v2729, 2147483648
    %v2744 = vmul.f32 %v2743, 1.442695
    %v2745 = vpow.pop %v2744
    %v2746 = vadd.f32 %v2745, 1.0
    %v2747 = vrcp.pop %v2746
    %v2748 = vmul.f32 1.0, %v2747
    %v2749 = vmul.f32 %v2741, %v2415
    %v2750 = vmul.f32 %v2735, %v2742
    %v2751 = vadd.f32 %v2749, %v2750
    %v2752 = vtanh.pop %v2751
    %v2753 = vmul.f32 %v2748, %v2752
    %2754 = vmatprep.subr.mxu0 %v419
    %2755 = vmatpush1.msra.mxu0 %v418
    %2756 = vmatprep.subr.mxu0 %v423
    %2757 = vmatpush1.msra.mxu0 %v422
    %2758 = vmatprep.subr.mxu0 %v427
    %2759 = vmatpush1.msra.mxu0 %v426
    %2760 = vmatprep.subr.mxu0 %v431
    %2761 = vmatpush1.msra.mxu0 %v430
    %2762 = vmatprep.subr.mxu0 %v435
    %2763 = vmatpush1.msra.mxu0 %v434
    %2764 = vmatprep.subr.mxu0 %v439
    %2765 = vmatpush1.msra.mxu0 %v438
    %2766 = vmatprep.subr.mxu0 %v443
    %2767 = vmatpush1.msra.mxu0 %v442
    %2768 = vmatprep.subr.mxu0 %v447
    %2769 = vmatpush1.msra.mxu0 %v446
    %2770 = vmatprep.subr.mxu0 %v451
    %2771 = vmatpush1.msra.mxu0 %v450
    %2772 = vmatprep.subr.mxu0 %v455
    %2773 = vmatpush1.msra.mxu0 %v454
    %2774 = vmatprep.subr.mxu0 %v459
    %2775 = vmatpush1.msra.mxu0 %v458
    %2776 = vmatprep.subr.mxu0 %v463
    %2777 = vmatpush1.msra.mxu0 %v462
    %2778 = vmatprep.subr.mxu0 %v467
    %2779 = vmatpush1.msra.mxu0 %v466
    %2780 = vmatprep.subr.mxu0 %v471
    %2781 = vmatpush1.msra.mxu0 %v470
    %2782 = vmatprep.subr.mxu0 %v475
    %2783 = vmatpush1.msra.mxu0 %v474
    %2784 = vmatprep.subr.mxu0 %v479
    %2785 = vmatpush1.msra.mxu0 %v478
    %2786 = vmatprep.subr.mxu0 %v483
    %2787 = vmatpush1.msra.mxu0 %v482
    %2788 = vmatprep.subr.mxu0 %v487
    %2789 = vmatpush1.msra.mxu0 %v486
    %2790 = vmatprep.subr.mxu0 %v491
    %2791 = vmatpush1.msra.mxu0 %v490
    %2792 = vmatprep.subr.mxu0 %v495
    %2793 = vmatpush1.msra.mxu0 %v494
    %2794 = vmatprep.subr.mxu0 %v499
    %2795 = vmatpush1.msra.mxu0 %v498
    %2796 = vmatprep.subr.mxu0 %v503
    %2797 = vmatpush1.msra.mxu0 %v502
    %2798 = vmatprep.subr.mxu0 %v507
    %2799 = vmatpush1.msra.mxu0 %v506
    %2800 = vmatprep.subr.mxu0 %v511
    %2801 = vmatpush1.msra.mxu0 %v510
    %2802 = vmatprep.subr.mxu0 %v515
    %2803 = vmatpush1.msra.mxu0 %v514
    %2804 = vmatprep.subr.mxu0 %v519
    %2805 = vmatpush1.msra.mxu0 %v518
    %2806 = vmatprep.subr.mxu0 %v523
    %2807 = vmatpush1.msra.mxu0 %v522
    %2808 = vmatprep.subr.mxu0 %v527
    %2809 = vmatpush1.msra.mxu0 %v526
    %2810 = vmatprep.subr.mxu0 %v531
    %2811 = vmatpush1.msra.mxu0 %v530
    %2812 = vmatprep.subr.mxu0 %v535
    %2813 = vmatpush1.msra.mxu0 %v534
    %2814 = vmatprep.subr.mxu0 %v539
    %2815 = vmatpush1.msra.mxu0 %v538
    %2816 = vmatprep.subr.mxu0 %v543
    %2817 = vmatpush1.msra.mxu0 %v542
    %2818 = vmatprep.mubr.f32.mxu0 %v2583
    %2819 = vmatmul.mubr.f32.gmra.mrb[0].mxu0 %v2753
    %v2820 = vpop.f32.mrb[0].mxu0
    %v2821 = vadd.f32 %v551, %v2820
    %v2822 = vpop.f32.mrb[0].mxu0
    %v2823 = vadd.f32 %v555, %v2822
    %2824 = vdwg.mxu0
    %2825 = vmatprep.subr.mxu0 %v421
    %2826 = vmatpush1.msra.mxu0 %v420
    %2827 = vmatprep.subr.mxu0 %v425
    %2828 = vmatpush1.msra.mxu0 %v424
    %2829 = vmatprep.subr.mxu0 %v429
    %2830 = vmatpush1.msra.mxu0 %v428
    %2831 = vmatprep.subr.mxu0 %v433
    %2832 = vmatpush1.msra.mxu0 %v432
    %2833 = vmatprep.subr.mxu0 %v437
    %2834 = vmatpush1.msra.mxu0 %v436
    %2835 = vmatprep.subr.mxu0 %v441
    %2836 = vmatpush1.msra.mxu0 %v440
    %2837 = vmatprep.subr.mxu0 %v445
    %2838 = vmatpush1.msra.mxu0 %v444
    %2839 = vmatprep.subr.mxu0 %v449
    %2840 = vmatpush1.msra.mxu0 %v448
    %2841 = vmatprep.subr.mxu0 %v453
    %2842 = vmatpush1.msra.mxu0 %v452
    %2843 = vmatprep.subr.mxu0 %v457
    %2844 = vmatpush1.msra.mxu0 %v456
    %2845 = vmatprep.subr.mxu0 %v461
    %2846 = vmatpush1.msra.mxu0 %v460
    %2847 = vmatprep.subr.mxu0 %v465
    %2848 = vmatpush1.msra.mxu0 %v464
    %2849 = vmatprep.subr.mxu0 %v469
    %2850 = vmatpush1.msra.mxu0 %v468
    %2851 = vmatprep.subr.mxu0 %v473
    %2852 = vmatpush1.msra.mxu0 %v472
    %2853 = vmatprep.subr.mxu0 %v477
    %2854 = vmatpush1.msra.mxu0 %v476
    %2855 = vmatprep.subr.mxu0 %v481
    %2856 = vmatpush1.msra.mxu0 %v480
    %2857 = vmatprep.subr.mxu0 %v485
    %2858 = vmatpush1.msra.mxu0 %v484
    %2859 = vmatprep.subr.mxu0 %v489
    %2860 = vmatpush1.msra.mxu0 %v488
    %2861 = vmatprep.subr.mxu0 %v493
    %2862 = vmatpush1.msra.mxu0 %v492
    %2863 = vmatprep.subr.mxu0 %v497
    %2864 = vmatpush1.msra.mxu0 %v496
    %2865 = vmatprep.subr.mxu0 %v501
    %2866 = vmatpush1.msra.mxu0 %v500
    %2867 = vmatprep.subr.mxu0 %v505
    %2868 = vmatpush1.msra.mxu0 %v504
    %2869 = vmatprep.subr.mxu0 %v509
    %2870 = vmatpush1.msra.mxu0 %v508
    %2871 = vmatprep.subr.mxu0 %v513
    %2872 = vmatpush1.msra.mxu0 %v512
    %2873 = vmatprep.subr.mxu0 %v517
    %2874 = vmatpush1.msra.mxu0 %v516
    %2875 = vmatprep.subr.mxu0 %v521
    %2876 = vmatpush1.msra.mxu0 %v520
    %2877 = vmatprep.subr.mxu0 %v525
    %2878 = vmatpush1.msra.mxu0 %v524
    %2879 = vmatprep.subr.mxu0 %v529
    %2880 = vmatpush1.msra.mxu0 %v528
    %2881 = vmatprep.subr.mxu0 %v533
    %2882 = vmatpush1.msra.mxu0 %v532
    %2883 = vmatprep.subr.mxu0 %v537
    %2884 = vmatpush1.msra.mxu0 %v536
    %2885 = vmatprep.subr.mxu0 %v541
    %2886 = vmatpush1.msra.mxu0 %v540
    %2887 = vmatprep.subr.mxu0 %v545
    %2888 = vmatpush1.msra.mxu0 %v544
    %2889 = vmatprep.mubr.f32.mxu0 %v2583
    %2890 = vmatmul.mubr.f32.gmra.mrb[0].mxu0 %v2753
    %v2891 = vpop.f32.mrb[0].mxu0
    %v2892 = vadd.f32 %v559, %v2891
    %v2893 = vpop.f32.mrb[0].mxu0
    %v2894 = vadd.f32 %v563, %v2893
    %2895 = vdwg.mxu0
    %v2896 = vxor.u32 %v2821, 2147483648
    %v2897 = vmul.f32 %v2896, 1.442695
    %v2898 = vpow.pop %v2897
    %v2899 = vadd.f32 %v2898, 1.0
    %v2900 = vrcp.pop %v2899
    %v2901 = vmul.f32 1.0, %v2900
    %v2902 = vxor.u32 %v2823, 2147483648
    %v2903 = vmul.f32 %v2902, 1.442695
    %v2904 = vpow.pop %v2903
    %v2905 = vadd.f32 %v2904, 1.0
    %v2906 = vrcp.pop %v2905
    %v2907 = vmul.f32 1.0, %v2906
    %v2908 = vtanh.pop %v2892
    %v2909 = vxor.u32 %v2894, 2147483648
    %v2910 = vmul.f32 %v2909, 1.442695
    %v2911 = vpow.pop %v2910
    %v2912 = vadd.f32 %v2911, 1.0
    %v2913 = vrcp.pop %v2912
    %v2914 = vmul.f32 1.0, %v2913
    %v2915 = vmul.f32 %v2907, %v2581
    %v2916 = vmul.f32 %v2901, %v2908
    %v2917 = vadd.f32 %v2915, %v2916
    %v2918 = vtanh.pop %v2917
    %v2919 = vmul.f32 %v2914, %v2918
    %2920 = vmatprep.subr.mxu0 %v355
    %2921 = vmatpush1.msra.mxu0 %v354
    %2922 = vmatprep.subr.mxu0 %v359
    %2923 = vmatpush1.msra.mxu0 %v358
    %2924 = vmatprep.subr.mxu0 %v363
    %2925 = vmatpush1.msra.mxu0 %v362
    %2926 = vmatprep.subr.mxu0 %v367
    %2927 = vmatpush1.msra.mxu0 %v366
    %2928 = vmatprep.subr.mxu0 %v371
    %2929 = vmatpush1.msra.mxu0 %v370
    %2930 = vmatprep.subr.mxu0 %v375
    %2931 = vmatpush1.msra.mxu0 %v374
    %2932 = vmatprep.subr.mxu0 %v379
    %2933 = vmatpush1.msra.mxu0 %v378
    %2934 = vmatprep.subr.mxu0 %v383
    %2935 = vmatpush1.msra.mxu0 %v382
    %2936 = vmatprep.subr.mxu0 %v387
    %2937 = vmatpush1.msra.mxu0 %v386
    %2938 = vmatprep.subr.mxu0 %v391
    %2939 = vmatpush1.msra.mxu0 %v390
    %2940 = vmatprep.subr.mxu0 %v395
    %2941 = vmatpush1.msra.mxu0 %v394
    %2942 = vmatprep.subr.mxu0 %v399
    %2943 = vmatpush1.msra.mxu0 %v398
    %2944 = vmatprep.subr.mxu0 %v403
    %2945 = vmatpush1.msra.mxu0 %v402
    %2946 = vmatprep.subr.mxu0 %v407
    %2947 = vmatpush1.msra.mxu0 %v406
    %2948 = vmatprep.subr.mxu0 %v411
    %2949 = vmatpush1.msra.mxu0 %v410
    %2950 = vmatprep.subr.mxu0 %v415
    %2951 = vmatpush1.msra.mxu0 %v414
    %2952 = vmatprep.subr.mxu0 0.0
    %2953 = vmatpush1.msra.mxu0 0.0
    %2954 = vmatprep.subr.mxu0 0.0
    %2955 = vmatpush1.msra.mxu0 0.0
    %2956 = vmatprep.subr.mxu0 0.0
    %2957 = vmatpush1.msra.mxu0 0.0
    %2958 = vmatprep.subr.mxu0 0.0
    %2959 = vmatpush1.msra.mxu0 0.0
    %2960 = vmatprep.subr.mxu0 0.0
    %2961 = vmatpush1.msra.mxu0 0.0
    %2962 = vmatprep.subr.mxu0 0.0
    %2963 = vmatpush1.msra.mxu0 0.0
    %2964 = vmatprep.subr.mxu0 0.0
    %2965 = vmatpush1.msra.mxu0 0.0
    %2966 = vmatprep.subr.mxu0 0.0
    %2967 = vmatpush1.msra.mxu0 0.0
    %2968 = vmatprep.subr.mxu0 0.0
    %2969 = vmatpush1.msra.mxu0 0.0
    %2970 = vmatprep.subr.mxu0 0.0
    %2971 = vmatpush1.msra.mxu0 0.0
    %2972 = vmatprep.subr.mxu0 0.0
    %2973 = vmatpush1.msra.mxu0 0.0
    %2974 = vmatprep.subr.mxu0 0.0
    %2975 = vmatpush1.msra.mxu0 0.0
    %2976 = vmatprep.subr.mxu0 0.0
    %2977 = vmatpush1.msra.mxu0 0.0
    %2978 = vmatprep.subr.mxu0 0.0
    %2979 = vmatpush1.msra.mxu0 0.0
    %2980 = vmatprep.subr.mxu0 0.0
    %2981 = vmatpush1.msra.mxu0 0.0
    %2982 = vmatprep.subr.mxu0 0.0
    %2983 = vmatpush1.msra.mxu0 0.0
    %2984 = vmatprep.mubr.f32.mxu0 0.0
    %2985 = vmatmul.mubr.f32.gmra.mrb[0].mxu0 %v2753
    %v2986 = vpop.f32.mrb[0].mxu0
    %v2987 = vadd.f32 0.0, %v2986
    %v2988 = vpop.f32.mrb[0].mxu0
    %v2989 = vadd.f32 0.0, %v2988
    %2990 = vdwg.mxu0
    %2991 = vmatprep.subr.mxu0 %v357
    %2992 = vmatpush1.msra.mxu0 %v356
    %2993 = vmatprep.subr.mxu0 %v361
    %2994 = vmatpush1.msra.mxu0 %v360
    %2995 = vmatprep.subr.mxu0 %v365
    %2996 = vmatpush1.msra.mxu0 %v364
    %2997 = vmatprep.subr.mxu0 %v369
    %2998 = vmatpush1.msra.mxu0 %v368
    %2999 = vmatprep.subr.mxu0 %v373
    %3000 = vmatpush1.msra.mxu0 %v372
    %3001 = vmatprep.subr.mxu0 %v377
    %3002 = vmatpush1.msra.mxu0 %v376
    %3003 = vmatprep.subr.mxu0 %v381
    %3004 = vmatpush1.msra.mxu0 %v380
    %3005 = vmatprep.subr.mxu0 %v385
    %3006 = vmatpush1.msra.mxu0 %v384
    %3007 = vmatprep.subr.mxu0 %v389
    %3008 = vmatpush1.msra.mxu0 %v388
    %3009 = vmatprep.subr.mxu0 %v393
    %3010 = vmatpush1.msra.mxu0 %v392
    %3011 = vmatprep.subr.mxu0 %v397
    %3012 = vmatpush1.msra.mxu0 %v396
    %3013 = vmatprep.subr.mxu0 %v401
    %3014 = vmatpush1.msra.mxu0 %v400
    %3015 = vmatprep.subr.mxu0 %v405
    %3016 = vmatpush1.msra.mxu0 %v404
    %3017 = vmatprep.subr.mxu0 %v409
    %3018 = vmatpush1.msra.mxu0 %v408
    %3019 = vmatprep.subr.mxu0 %v413
    %3020 = vmatpush1.msra.mxu0 %v412
    %3021 = vmatprep.subr.mxu0 %v417
    %3022 = vmatpush1.msra.mxu0 %v416
    %3023 = vmatprep.subr.mxu0 0.0
    %3024 = vmatpush1.msra.mxu0 0.0
    %3025 = vmatprep.subr.mxu0 0.0
    %3026 = vmatpush1.msra.mxu0 0.0
    %3027 = vmatprep.subr.mxu0 0.0
    %3028 = vmatpush1.msra.mxu0 0.0
    %3029 = vmatprep.subr.mxu0 0.0
    %3030 = vmatpush1.msra.mxu0 0.0
    %3031 = vmatprep.subr.mxu0 0.0
    %3032 = vmatpush1.msra.mxu0 0.0
    %3033 = vmatprep.subr.mxu0 0.0
    %3034 = vmatpush1.msra.mxu0 0.0
    %3035 = vmatprep.subr.mxu0 0.0
    %3036 = vmatpush1.msra.mxu0 0.0
    %3037 = vmatprep.subr.mxu0 0.0
    %3038 = vmatpush1.msra.mxu0 0.0
    %3039 = vmatprep.subr.mxu0 0.0
    %3040 = vmatpush1.msra.mxu0 0.0
    %3041 = vmatprep.subr.mxu0 0.0
    %3042 = vmatpush1.msra.mxu0 0.0
    %3043 = vmatprep.subr.mxu0 0.0
    %3044 = vmatpush1.msra.mxu0 0.0
    %3045 = vmatprep.subr.mxu0 0.0
    %3046 = vmatpush1.msra.mxu0 0.0
    %3047 = vmatprep.subr.mxu0 0.0
    %3048 = vmatpush1.msra.mxu0 0.0
    %3049 = vmatprep.subr.mxu0 0.0
    %3050 = vmatpush1.msra.mxu0 0.0
    %3051 = vmatprep.subr.mxu0 0.0
    %3052 = vmatpush1.msra.mxu0 0.0
    %3053 = vmatprep.subr.mxu0 0.0
    %3054 = vmatpush1.msra.mxu0 0.0
    %3055 = vmatprep.mubr.f32.mxu0 0.0
    %3056 = vmatmul.mubr.f32.gmra.mrb[0].mxu0 %v2753
    %v3057 = vpop.f32.mrb[0].mxu0
    %v3058 = vadd.f32 0.0, %v3057
    %v3059 = vpop.f32.mrb[0].mxu0
    %v3060 = vadd.f32 0.0, %v3059
    %3061 = vdwg.mxu0
    %v3062 = vadd.f32 %v237, %v2987
    %v3063 = vadd.f32 %v239, %v2989
    %v3064 = vadd.f32 %v350, %v3058
    %v3065 = vadd.f32 %v352, %v3060
    %v3066 = vxor.u32 %v3062, 2147483648
    %v3067 = vmul.f32 %v3066, 1.442695
    %v3068 = vpow.pop %v3067
    %v3069 = vadd.f32 %v3068, 1.0
    %v3070 = vrcp.pop %v3069
    %v3071 = vmul.f32 1.0, %v3070
    %v3072 = vxor.u32 %v3063, 2147483648
    %v3073 = vmul.f32 %v3072, 1.442695
    %v3074 = vpow.pop %v3073
    %v3075 = vadd.f32 %v3074, 1.0
    %v3076 = vrcp.pop %v3075
    %v3077 = vmul.f32 1.0, %v3076
    %v3078 = vtanh.pop %v3064
    %v3079 = vxor.u32 %v3065, 2147483648
    %v3080 = vmul.f32 %v3079, 1.442695
    %v3081 = vpow.pop %v3080
    %v3082 = vadd.f32 %v3081, 1.0
    %v3083 = vrcp.pop %v3082
    %v3084 = vmul.f32 1.0, %v3083
    %v3085 = vmul.f32 %v3077, %v2751
    %v3086 = vmul.f32 %v3071, %v3078
    %v3087 = vadd.f32 %v3085, %v3086
    %v3088 = vtanh.pop %v3087
    %v3089 = vmul.f32 %v3084, %v3088
    %3090 = vmatprep.subr.mxu0 %v419
    %3091 = vmatpush1.msra.mxu0 %v418
    %3092 = vmatprep.subr.mxu0 %v423
    %3093 = vmatpush1.msra.mxu0 %v422
    %3094 = vmatprep.subr.mxu0 %v427
    %3095 = vmatpush1.msra.mxu0 %v426
    %3096 = vmatprep.subr.mxu0 %v431
    %3097 = vmatpush1.msra.mxu0 %v430
    %3098 = vmatprep.subr.mxu0 %v435
    %3099 = vmatpush1.msra.mxu0 %v434
    %3100 = vmatprep.subr.mxu0 %v439
    %3101 = vmatpush1.msra.mxu0 %v438
    %3102 = vmatprep.subr.mxu0 %v443
    %3103 = vmatpush1.msra.mxu0 %v442
    %3104 = vmatprep.subr.mxu0 %v447
    %3105 = vmatpush1.msra.mxu0 %v446
    %3106 = vmatprep.subr.mxu0 %v451
    %3107 = vmatpush1.msra.mxu0 %v450
    %3108 = vmatprep.subr.mxu0 %v455
    %3109 = vmatpush1.msra.mxu0 %v454
    %3110 = vmatprep.subr.mxu0 %v459
    %3111 = vmatpush1.msra.mxu0 %v458
    %3112 = vmatprep.subr.mxu0 %v463
    %3113 = vmatpush1.msra.mxu0 %v462
    %3114 = vmatprep.subr.mxu0 %v467
    %3115 = vmatpush1.msra.mxu0 %v466
    %3116 = vmatprep.subr.mxu0 %v471
    %3117 = vmatpush1.msra.mxu0 %v470
    %3118 = vmatprep.subr.mxu0 %v475
    %3119 = vmatpush1.msra.mxu0 %v474
    %3120 = vmatprep.subr.mxu0 %v479
    %3121 = vmatpush1.msra.mxu0 %v478
    %3122 = vmatprep.subr.mxu0 %v483
    %3123 = vmatpush1.msra.mxu0 %v482
    %3124 = vmatprep.subr.mxu0 %v487
    %3125 = vmatpush1.msra.mxu0 %v486
    %3126 = vmatprep.subr.mxu0 %v491
    %3127 = vmatpush1.msra.mxu0 %v490
    %3128 = vmatprep.subr.mxu0 %v495
    %3129 = vmatpush1.msra.mxu0 %v494
    %3130 = vmatprep.subr.mxu0 %v499
    %3131 = vmatpush1.msra.mxu0 %v498
    %3132 = vmatprep.subr.mxu0 %v503
    %3133 = vmatpush1.msra.mxu0 %v502
    %3134 = vmatprep.subr.mxu0 %v507
    %3135 = vmatpush1.msra.mxu0 %v506
    %3136 = vmatprep.subr.mxu0 %v511
    %3137 = vmatpush1.msra.mxu0 %v510
    %3138 = vmatprep.subr.mxu0 %v515
    %3139 = vmatpush1.msra.mxu0 %v514
    %3140 = vmatprep.subr.mxu0 %v519
    %3141 = vmatpush1.msra.mxu0 %v518
    %3142 = vmatprep.subr.mxu0 %v523
    %3143 = vmatpush1.msra.mxu0 %v522
    %3144 = vmatprep.subr.mxu0 %v527
    %3145 = vmatpush1.msra.mxu0 %v526
    %3146 = vmatprep.subr.mxu0 %v531
    %3147 = vmatpush1.msra.mxu0 %v530
    %3148 = vmatprep.subr.mxu0 %v535
    %3149 = vmatpush1.msra.mxu0 %v534
    %3150 = vmatprep.subr.mxu0 %v539
    %3151 = vmatpush1.msra.mxu0 %v538
    %3152 = vmatprep.subr.mxu0 %v543
    %3153 = vmatpush1.msra.mxu0 %v542
    %3154 = vmatprep.mubr.f32.mxu0 %v2919
    %3155 = vmatmul.mubr.f32.gmra.mrb[0].mxu0 %v3089
    %v3156 = vpop.f32.mrb[0].mxu0
    %v3157 = vadd.f32 %v551, %v3156
    %v3158 = vpop.f32.mrb[0].mxu0
    %v3159 = vadd.f32 %v555, %v3158
    %3160 = vdwg.mxu0
    %3161 = vmatprep.subr.mxu0 %v421
    %3162 = vmatpush1.msra.mxu0 %v420
    %3163 = vmatprep.subr.mxu0 %v425
    %3164 = vmatpush1.msra.mxu0 %v424
    %3165 = vmatprep.subr.mxu0 %v429
    %3166 = vmatpush1.msra.mxu0 %v428
    %3167 = vmatprep.subr.mxu0 %v433
    %3168 = vmatpush1.msra.mxu0 %v432
    %3169 = vmatprep.subr.mxu0 %v437
    %3170 = vmatpush1.msra.mxu0 %v436
    %3171 = vmatprep.subr.mxu0 %v441
    %3172 = vmatpush1.msra.mxu0 %v440
    %3173 = vmatprep.subr.mxu0 %v445
    %3174 = vmatpush1.msra.mxu0 %v444
    %3175 = vmatprep.subr.mxu0 %v449
    %3176 = vmatpush1.msra.mxu0 %v448
    %3177 = vmatprep.subr.mxu0 %v453
    %3178 = vmatpush1.msra.mxu0 %v452
    %3179 = vmatprep.subr.mxu0 %v457
    %3180 = vmatpush1.msra.mxu0 %v456
    %3181 = vmatprep.subr.mxu0 %v461
    %3182 = vmatpush1.msra.mxu0 %v460
    %3183 = vmatprep.subr.mxu0 %v465
    %3184 = vmatpush1.msra.mxu0 %v464
    %3185 = vmatprep.subr.mxu0 %v469
    %3186 = vmatpush1.msra.mxu0 %v468
    %3187 = vmatprep.subr.mxu0 %v473
    %3188 = vmatpush1.msra.mxu0 %v472
    %3189 = vmatprep.subr.mxu0 %v477
    %3190 = vmatpush1.msra.mxu0 %v476
    %3191 = vmatprep.subr.mxu0 %v481
    %3192 = vmatpush1.msra.mxu0 %v480
    %3193 = vmatprep.subr.mxu0 %v485
    %3194 = vmatpush1.msra.mxu0 %v484
    %3195 = vmatprep.subr.mxu0 %v489
    %3196 = vmatpush1.msra.mxu0 %v488
    %3197 = vmatprep.subr.mxu0 %v493
    %3198 = vmatpush1.msra.mxu0 %v492
    %3199 = vmatprep.subr.mxu0 %v497
    %3200 = vmatpush1.msra.mxu0 %v496
    %3201 = vmatprep.subr.mxu0 %v501
    %3202 = vmatpush1.msra.mxu0 %v500
    %3203 = vmatprep.subr.mxu0 %v505
    %3204 = vmatpush1.msra.mxu0 %v504
    %3205 = vmatprep.subr.mxu0 %v509
    %3206 = vmatpush1.msra.mxu0 %v508
    %3207 = vmatprep.subr.mxu0 %v513
    %3208 = vmatpush1.msra.mxu0 %v512
    %3209 = vmatprep.subr.mxu0 %v517
    %3210 = vmatpush1.msra.mxu0 %v516
    %3211 = vmatprep.subr.mxu0 %v521
    %3212 = vmatpush1.msra.mxu0 %v520
    %3213 = vmatprep.subr.mxu0 %v525
    %3214 = vmatpush1.msra.mxu0 %v524
    %3215 = vmatprep.subr.mxu0 %v529
    %3216 = vmatpush1.msra.mxu0 %v528
    %3217 = vmatprep.subr.mxu0 %v533
    %3218 = vmatpush1.msra.mxu0 %v532
    %3219 = vmatprep.subr.mxu0 %v537
    %3220 = vmatpush1.msra.mxu0 %v536
    %3221 = vmatprep.subr.mxu0 %v541
    %3222 = vmatpush1.msra.mxu0 %v540
    %3223 = vmatprep.subr.mxu0 %v545
    %3224 = vmatpush1.msra.mxu0 %v544
    %3225 = vmatprep.mubr.f32.mxu0 %v2919
    %3226 = vmatmul.mubr.f32.gmra.mrb[0].mxu0 %v3089
    %v3227 = vpop.f32.mrb[0].mxu0
    %v3228 = vadd.f32 %v559, %v3227
    %v3229 = vpop.f32.mrb[0].mxu0
    %v3230 = vadd.f32 %v563, %v3229
    %3231 = vdwg.mxu0
    %v3232 = vxor.u32 %v3157, 2147483648
    %v3233 = vmul.f32 %v3232, 1.442695
    %v3234 = vpow.pop %v3233
    %v3235 = vadd.f32 %v3234, 1.0
    %v3236 = vrcp.pop %v3235
    %v3237 = vmul.f32 1.0, %v3236
    %v3238 = vxor.u32 %v3159, 2147483648
    %v3239 = vmul.f32 %v3238, 1.442695
    %v3240 = vpow.pop %v3239
    %v3241 = vadd.f32 %v3240, 1.0
    %v3242 = vrcp.pop %v3241
    %v3243 = vmul.f32 1.0, %v3242
    %v3244 = vtanh.pop %v3228
    %v3245 = vxor.u32 %v3230, 2147483648
    %v3246 = vmul.f32 %v3245, 1.442695
    %v3247 = vpow.pop %v3246
    %v3248 = vadd.f32 %v3247, 1.0
    %v3249 = vrcp.pop %v3248
    %v3250 = vmul.f32 1.0, %v3249
    %v3251 = vmul.f32 %v3243, %v2917
    %v3252 = vmul.f32 %v3237, %v3244
    %v3253 = vadd.f32 %v3251, %v3252
    %v3254 = vtanh.pop %v3253
    %v3255 = vmul.f32 %v3250, %v3254
    %3256 = vst [vmem:[#allocation7] sm:$0xff] %v3255
    // Predicated region
    $region34: #{tpu_custom_call.1} parent=1 // pred_check
      _
    $region35: #{tpu_custom_call.1} parent=1 // pred_check_branch
      %3258 = sbr.rel (0) target = $region37
    $region36: #{tpu_custom_call.1} parent=1 // pred_region
      %s3260 = ssub.s32 128, 128
      %3261 = vsyncadd [#allocation4], %s3260
      %s3263 = sshll.u32 [#allocation7], 4
      %s3264 = int_to_ptr.vmem [resolvable:$true] %s3263
      %3266 = dma.vmem_to_hbm [thread:$0]  %s3264, 128, %s6, [#allocation4]
    $region37: #{tpu_custom_call.1} parent=1 // pred_fallthru
      _
    // Predicated region
    $region38: #{tpu_custom_call.1} parent=1 // pred_check
      _
    $region39: #{tpu_custom_call.1} parent=1 // pred_check_branch
      %3268 = sbr.rel (0) target = $region41
    $region40: #{tpu_custom_call.1} parent=1 // pred_region
      %3269 = dma.done [#allocation4], 128
    $region41: #{tpu_custom_call.1} parent=1 // pred_fallthru
      _
    %3270 = vsyncpa [#allocation3], 1
    %3271 = vsyncpa [#allocation6], 1
    %3272 = vsyncpa [#allocation4], 1

</llo_original>
